<compile_context>
chip_gen: v7x
topology: tpu7x:2x2x1
jax: 0.10.0
libtpu: 0.0.40
codegen_flags: <defaults>
</compile_context>

<pallas_src>
import numpy as np
import jax
import jax.numpy as jnp
from jax.experimental import pallas as pl
from jax.experimental.pallas import tpu as pltpu

INPUT_DIM = 784
HIDDEN_DIM = 400
LATENT_DIM = 50

# padded sizes (multiples of 128 for clean vreg / MXU tiles); input stays at its natural 784
HID_PAD = 512      # 4 * 128
LAT_PAD = 128      # padded latent per head; fused mu||logvar head -> 256 lanes


def vae_kernel(x_ref, eps_ref,
               w1_ref, b1_ref, w2_ref, b2_ref,
               wd1_ref, bd1_ref, wd2_ref, bd2_ref,
               recon_ref, mulv_ref):
    # ---------------- encoder: Linear(784,400)+ReLU, fused Linear(400, 2*50) ----------------
    x = x_ref[...]                                                        # (TB, 784) bf16
    h = jnp.maximum(
        jnp.dot(x, w1_ref[...], preferred_element_type=jnp.float32) + b1_ref[...], 0.0
    )                                                                     # (TB, 512) f32
    hz = jnp.dot(h.astype(jnp.bfloat16), w2_ref[...],
                 preferred_element_type=jnp.float32) + b2_ref[...]        # (TB, 256) f32
    mulv_ref[...] = hz                                                    # combined mu||logvar store

    mu = hz[:, :LAT_PAD]                                                  # (TB, 128) — vreg-aligned split
    logvar = hz[:, LAT_PAD:]                                              # (TB, 128); padded lanes are 0

    # ---------------- reparameterize (f32 elementwise) ----------------
    std = jnp.exp(0.5 * logvar)
    z = mu + eps_ref[...] * std                                           # padded lanes stay 0 (eps pad = 0)

    # ---------------- decoder: Linear(50,400)+ReLU, Linear(400,784)+Sigmoid ----------------
    hd = jnp.maximum(
        jnp.dot(z.astype(jnp.bfloat16), wd1_ref[...],
                preferred_element_type=jnp.float32) + bd1_ref[...], 0.0
    )                                                                     # (TB, 512)
    logits = jnp.dot(hd.astype(jnp.bfloat16), wd2_ref[...],
                     preferred_element_type=jnp.float32) + bd2_ref[...]   # (TB, 784) f32
    # sigmoid = 1 / (1 + exp(-x)): exp on the EUP, divide as an approx reciprocal (EUP slot).
    e = jnp.exp(-logits)
    recon_ref[...] = pl.reciprocal(1.0 + e, approx=True).astype(jnp.bfloat16)


# ---------------------------------------------------------------------------
# Parameter handling (wrapper-side layout plumbing: transpose / pad / fuse / cast)
# ---------------------------------------------------------------------------
def _pad2(a, shape):
    if a.shape == tuple(shape):
        return a
    out = jnp.zeros(shape, a.dtype)
    return out.at[: a.shape[0], : a.shape[1]].set(a)


def make_params(key):
    """Torch-style parameters: W (out, in), b (out,), all f32."""
    ks = jax.random.split(key, 10)

    def init_w(k, out_d, in_d):
        bound = 1.0 / np.sqrt(in_d)
        return jax.random.uniform(k, (out_d, in_d), jnp.float32, -bound, bound)

    def init_b(k, out_d):
        return 0.01 * jax.random.normal(k, (out_d,), jnp.float32)

    return {
        "W1": init_w(ks[0], HIDDEN_DIM, INPUT_DIM),  "b1": init_b(ks[5], HIDDEN_DIM),
        "W21": init_w(ks[1], LATENT_DIM, HIDDEN_DIM), "b21": init_b(ks[6], LATENT_DIM),
        "W22": init_w(ks[2], LATENT_DIM, HIDDEN_DIM), "b22": init_b(ks[7], LATENT_DIM),
        "W3": init_w(ks[3], HIDDEN_DIM, LATENT_DIM),  "b3": init_b(ks[8], HIDDEN_DIM),
        "W4": init_w(ks[4], INPUT_DIM, HIDDEN_DIM),   "b4": init_b(ks[9], INPUT_DIM),
    }


def prepare_params(p):
    """Transpose to (in, out), zero-pad hidden/latent dims, fuse mu/logvar heads, cast weights to bf16."""
    w1 = _pad2(p["W1"].T, (INPUT_DIM, HID_PAD)).astype(jnp.bfloat16)       # (784, 512)
    b1 = _pad2(p["b1"][None, :], (1, HID_PAD))                             # (1, 512) f32

    w2 = jnp.concatenate(
        [_pad2(p["W21"].T, (HIDDEN_DIM, LAT_PAD)),
         _pad2(p["W22"].T, (HIDDEN_DIM, LAT_PAD))], axis=1)                # (400, 256)
    w2 = _pad2(w2, (HID_PAD, 2 * LAT_PAD)).astype(jnp.bfloat16)            # (512, 256)
    b2 = jnp.concatenate(
        [_pad2(p["b21"][None, :], (1, LAT_PAD)),
         _pad2(p["b22"][None, :], (1, LAT_PAD))], axis=1)                  # (1, 256) f32

    wd1 = _pad2(p["W3"].T, (LAT_PAD, HID_PAD)).astype(jnp.bfloat16)        # (128, 512)
    bd1 = _pad2(p["b3"][None, :], (1, HID_PAD))                            # (1, 512) f32
    wd2 = _pad2(p["W4"].T, (HID_PAD, INPUT_DIM)).astype(jnp.bfloat16)      # (512, 784)
    bd2 = p["b4"][None, :]                                                 # (1, 784) f32

    return {"w1": w1, "b1": b1, "w2": w2, "b2": b2,
            "wd1": wd1, "bd1": bd1, "wd2": wd2, "bd2": bd2}


def _pick_block_b(B):
    """Batch tile: small batches get a single right-sized tile (no wasted rows); mid-size
    batches use 128-row tiles so the grid has >=2 steps (v7x 2-TC sharding); large batches
    use 256/512-row tiles to amortize per-step overhead."""
    b8 = -(-B // 8) * 8                 # round up to sublane multiple
    if b8 <= 128:
        return b8
    if b8 <= 512:
        return 128
    if b8 <= 2048:
        return 256
    return 512


# ---------------------------------------------------------------------------
# Forward wrapper
# ---------------------------------------------------------------------------
def vae_forward(x, eps, prepped, *, block_b=None):
    x2 = x.reshape(-1, INPUT_DIM)                                          # == torch x.view(-1, 784)
    B = x2.shape[0]

    if block_b is None:
        block_b = _pick_block_b(B)
    nb = pl.cdiv(B, block_b)
    B_pad = nb * block_b

    # bf16 input stream at natural 784-lane width; cast fused into the (row-)pad op.
    if B_pad == B:
        x_p = x2.astype(jnp.bfloat16)
    else:
        x_p = jnp.zeros((B_pad, INPUT_DIM), jnp.bfloat16).at[:B].set(x2.astype(jnp.bfloat16))
    eps_p = jnp.zeros((B_pad, LAT_PAD), jnp.float32).at[:B, :LATENT_DIM].set(
        eps.astype(jnp.float32))

    def row_spec(width):
        return pl.BlockSpec((block_b, width), lambda i: (i, 0))

    def resident_spec(shape):
        return pl.BlockSpec(shape, lambda i: (0, 0))                       # DMA'd once, stays in VMEM

    gemm_flops = 2 * B_pad * (INPUT_DIM * HID_PAD + HID_PAD * 2 * LAT_PAD
                              + LAT_PAD * HID_PAD + HID_PAD * INPUT_DIM)
    weight_bytes = 2 * (INPUT_DIM * HID_PAD + HID_PAD * 2 * LAT_PAD
                        + LAT_PAD * HID_PAD + HID_PAD * INPUT_DIM)         # bf16 weights
    io_bytes = B_pad * (2 * INPUT_DIM            # x bf16
                        + 4 * LAT_PAD            # eps f32
                        + 2 * INPUT_DIM          # recon bf16
                        + 4 * 2 * LAT_PAD)       # mu||logvar f32
    cost = pl.CostEstimate(
        flops=int(gemm_flops),
        transcendentals=int(B_pad * (LAT_PAD + 2 * INPUT_DIM)),            # exp (reparam) + exp/recip (sigmoid)
        bytes_accessed=int(weight_bytes + io_bytes),
    )

    recon_p, mulv_p = pl.pallas_call(
        vae_kernel,
        out_shape=(
            jax.ShapeDtypeStruct((B_pad, INPUT_DIM), jnp.bfloat16),        # recon (natural 784 lanes)
            jax.ShapeDtypeStruct((B_pad, 2 * LAT_PAD), jnp.float32),       # mu || logvar (256 lanes)
        ),
        grid=(nb,),
        in_specs=[
            row_spec(INPUT_DIM),                     # x
            row_spec(LAT_PAD),                       # eps
            resident_spec((INPUT_DIM, HID_PAD)),     # w1
            resident_spec((1, HID_PAD)),             # b1
            resident_spec((HID_PAD, 2 * LAT_PAD)),   # w2 (fused mu/logvar heads)
            resident_spec((1, 2 * LAT_PAD)),         # b2
            resident_spec((LAT_PAD, HID_PAD)),       # wd1
            resident_spec((1, HID_PAD)),             # bd1
            resident_spec((HID_PAD, INPUT_DIM)),     # wd2
            resident_spec((1, INPUT_DIM)),           # bd2
        ],
        out_specs=(row_spec(INPUT_DIM), row_spec(2 * LAT_PAD)),
        compiler_params=pltpu.CompilerParams(dimension_semantics=("parallel",)),
        cost_estimate=cost,
    )(x_p, eps_p,
      prepped["w1"], prepped["b1"], prepped["w2"], prepped["b2"],
      prepped["wd1"], prepped["bd1"], prepped["wd2"], prepped["bd2"])

    recon = recon_p[:B] if B_pad != B else recon_p                         # (B, 784) bf16
    mu = mulv_p[:B, :LATENT_DIM]
    logvar = mulv_p[:B, LAT_PAD:LAT_PAD + LATENT_DIM]
    return recon, mu, logvar


# ---------------------------------------------------------------------------
# Pure-JAX f32 reference mirroring the PyTorch forward exactly
# ---------------------------------------------------------------------------
def reference_forward(x, eps, p):
    x2 = x.reshape(-1, INPUT_DIM)
    h = jnp.maximum(x2 @ p["W1"].T + p["b1"], 0.0)
    mu = h @ p["W21"].T + p["b21"]
    logvar = h @ p["W22"].T + p["b22"]
    std = jnp.exp(0.5 * logvar)
    z = mu + eps * std
    h3 = jnp.maximum(z @ p["W3"].T + p["b3"], 0.0)
    recon = jax.nn.sigmoid(h3 @ p["W4"].T + p["b4"])
    return recon, mu, logvar


if __name__ == "__main__":
    key = jax.random.PRNGKey(0)
    k_param, k_x, k_eps = jax.random.split(key, 3)

    B = 8
    x = jax.random.uniform(k_x, (B, 1, 28, 28), jnp.float32)               # MNIST-like NCHW batch
    # torch uses torch.randn_like(std) inside reparameterize; eps is passed explicitly so the
    # forward pass is deterministic and comparable against the reference.
    eps = jax.random.normal(k_eps, (B, LATENT_DIM), jnp.float32)

    params = make_params(k_param)
    prepped = prepare_params(params)

    fwd = jax.jit(vae_forward)
    recon, mu, logvar = fwd(x, eps, prepped)
    jax.block_until_ready((recon, mu, logvar))

    r_recon, r_mu, r_logvar = reference_forward(x, eps, params)
    # tolerance loosened slightly: matmul operands are bf16 (f32 accumulation) and recon is
    # streamed back in bf16.
    np.testing.assert_allclose(np.asarray(recon, dtype=np.float32), np.asarray(r_recon),
                               rtol=3e-2, atol=3e-2)
    np.testing.assert_allclose(np.asarray(mu), np.asarray(r_mu), rtol=3e-2, atol=3e-2)
    np.testing.assert_allclose(np.asarray(logvar), np.asarray(r_logvar), rtol=3e-2, atol=3e-2)

    assert recon.shape == (B, INPUT_DIM)
    assert mu.shape == (B, LATENT_DIM) and logvar.shape == (B, LATENT_DIM)
    print("KERNEL_OK")
</pallas_src>

<mosaic_0001>
module attributes {stable_mosaic.version = 11 : i64} {
  func.func @vae_kernel(%arg0: i32, %arg1: memref<8x784xbf16, #tpu.memory_space<vmem>>, %arg2: memref<8x128xf32, #tpu.memory_space<vmem>>, %arg3: memref<784x512xbf16, #tpu.memory_space<vmem>>, %arg4: memref<1x512xf32, #tpu.memory_space<vmem>>, %arg5: memref<512x256xbf16, #tpu.memory_space<vmem>>, %arg6: memref<1x256xf32, #tpu.memory_space<vmem>>, %arg7: memref<128x512xbf16, #tpu.memory_space<vmem>>, %arg8: memref<1x512xf32, #tpu.memory_space<vmem>>, %arg9: memref<512x784xbf16, #tpu.memory_space<vmem>>, %arg10: memref<1x784xf32, #tpu.memory_space<vmem>>, %arg11: memref<8x784xbf16, #tpu.memory_space<vmem>>, %arg12: memref<8x256xf32, #tpu.memory_space<vmem>>) attributes {dimension_semantics = [#tpu.dimension_semantics<parallel>], iteration_bounds = array<i64: 1>, scalar_prefetch = 0 : i64, scratch_operands = 0 : i64, tpu.core_type = #tpu.core_type<tc>, window_params = [{transform_indices = @transform_0, window_bounds = array<i64: 8, 784>}, {transform_indices = @transform_1, window_bounds = array<i64: 8, 128>}, {pipeline_mode = #tpu.pipeline_mode<synchronous>, transform_indices = @transform_2, window_bounds = array<i64: 784, 512>}, {pipeline_mode = #tpu.pipeline_mode<synchronous>, transform_indices = @transform_3, window_bounds = array<i64: 1, 512>}, {pipeline_mode = #tpu.pipeline_mode<synchronous>, transform_indices = @transform_4, window_bounds = array<i64: 512, 256>}, {pipeline_mode = #tpu.pipeline_mode<synchronous>, transform_indices = @transform_5, window_bounds = array<i64: 1, 256>}, {pipeline_mode = #tpu.pipeline_mode<synchronous>, transform_indices = @transform_6, window_bounds = array<i64: 128, 512>}, {pipeline_mode = #tpu.pipeline_mode<synchronous>, transform_indices = @transform_7, window_bounds = array<i64: 1, 512>}, {pipeline_mode = #tpu.pipeline_mode<synchronous>, transform_indices = @transform_8, window_bounds = array<i64: 512, 784>}, {pipeline_mode = #tpu.pipeline_mode<synchronous>, transform_indices = @transform_9, window_bounds = array<i64: 1, 784>}, {transform_indices = @transform_10, window_bounds = array<i64: 8, 784>}, {transform_indices = @transform_11, window_bounds = array<i64: 8, 256>}]} {
    %c0 = arith.constant 0 : index
    %c0_0 = arith.constant 0 : index
    %0 = vector.load %arg1[%c0, %c0_0] : memref<8x784xbf16, #tpu.memory_space<vmem>>, vector<8x784xbf16>
    %c0_1 = arith.constant 0 : index
    %c0_2 = arith.constant 0 : index
    %1 = vector.load %arg3[%c0_1, %c0_2] : memref<784x512xbf16, #tpu.memory_space<vmem>>, vector<784x512xbf16>
    %cst = arith.constant dense<0.000000e+00> : vector<8x512xf32>
    %2 = tpu.matmul %0, %1, %cst {dimension_numbers = #tpu.dot_dimension_numbers<[1], [0], [0], [1], [0, 0, 1, 1], [], []>} : vector<8x784xbf16>, vector<784x512xbf16>, vector<8x512xf32> -> vector<8x512xf32>
    %c0_3 = arith.constant 0 : index
    %c0_4 = arith.constant 0 : index
    %3 = vector.load %arg4[%c0_3, %c0_4] : memref<1x512xf32, #tpu.memory_space<vmem>>, vector<1x512xf32>
    %4 = vector.broadcast %3 : vector<1x512xf32> to vector<8x512xf32>
    %5 = arith.addf %2, %4 : vector<8x512xf32>
    %cst_5 = arith.constant 0.000000e+00 : f32
    %6 = vector.broadcast %cst_5 : f32 to vector<8x512xf32>
    %7 = arith.maximumf %5, %6 : vector<8x512xf32>
    %8 = arith.truncf %7 : vector<8x512xf32> to vector<8x512xbf16>
    %c0_6 = arith.constant 0 : index
    %c0_7 = arith.constant 0 : index
    %9 = vector.load %arg5[%c0_6, %c0_7] : memref<512x256xbf16, #tpu.memory_space<vmem>>, vector<512x256xbf16>
    %cst_8 = arith.constant dense<0.000000e+00> : vector<8x256xf32>
    %10 = tpu.matmul %8, %9, %cst_8 {dimension_numbers = #tpu.dot_dimension_numbers<[1], [0], [0], [1], [0, 0, 1, 1], [], []>} : vector<8x512xbf16>, vector<512x256xbf16>, vector<8x256xf32> -> vector<8x256xf32>
    %c0_9 = arith.constant 0 : index
    %c0_10 = arith.constant 0 : index
    %11 = vector.load %arg6[%c0_9, %c0_10] : memref<1x256xf32, #tpu.memory_space<vmem>>, vector<1x256xf32>
    %12 = vector.broadcast %11 : vector<1x256xf32> to vector<8x256xf32>
    %13 = arith.addf %10, %12 : vector<8x256xf32>
    %c0_11 = arith.constant 0 : index
    %c0_12 = arith.constant 0 : index
    %14 = vector.load %arg12[%c0_11, %c0_12] : memref<8x256xf32, #tpu.memory_space<vmem>>, vector<8x256xf32>
    tpu.vector_store %arg12[%c0_11, %c0_12], %13 {strides = array<i32>} : memref<8x256xf32, #tpu.memory_space<vmem>>, vector<8x256xf32>,
    %15 = vector.extract_strided_slice %13 {offsets = [0, 0], sizes = [8, 128], strides = [1, 1]} : vector<8x256xf32> to vector<8x128xf32>
    %16 = vector.extract_strided_slice %13 {offsets = [0, 128], sizes = [8, 128], strides = [1, 1]} : vector<8x256xf32> to vector<8x128xf32>
    %cst_13 = arith.constant 5.000000e-01 : f32
    %17 = vector.broadcast %cst_13 : f32 to vector<8x128xf32>
    %18 = arith.mulf %17, %16 : vector<8x128xf32>
    %19 = math.exp %18 : vector<8x128xf32>
    %c0_14 = arith.constant 0 : index
    %c0_15 = arith.constant 0 : index
    %20 = vector.load %arg2[%c0_14, %c0_15] : memref<8x128xf32, #tpu.memory_space<vmem>>, vector<8x128xf32>
    %21 = arith.mulf %20, %19 : vector<8x128xf32>
    %22 = arith.addf %15, %21 : vector<8x128xf32>
    %23 = arith.truncf %22 : vector<8x128xf32> to vector<8x128xbf16>
    %c0_16 = arith.constant 0 : index
    %c0_17 = arith.constant 0 : index
    %24 = vector.load %arg7[%c0_16, %c0_17] : memref<128x512xbf16, #tpu.memory_space<vmem>>, vector<128x512xbf16>
    %cst_18 = arith.constant dense<0.000000e+00> : vector<8x512xf32>
    %25 = tpu.matmul %23, %24, %cst_18 {dimension_numbers = #tpu.dot_dimension_numbers<[1], [0], [0], [1], [0, 0, 1, 1], [], []>} : vector<8x128xbf16>, vector<128x512xbf16>, vector<8x512xf32> -> vector<8x512xf32>
    %c0_19 = arith.constant 0 : index
    %c0_20 = arith.constant 0 : index
    %26 = vector.load %arg8[%c0_19, %c0_20] : memref<1x512xf32, #tpu.memory_space<vmem>>, vector<1x512xf32>
    %27 = vector.broadcast %26 : vector<1x512xf32> to vector<8x512xf32>
    %28 = arith.addf %25, %27 : vector<8x512xf32>
    %cst_21 = arith.constant 0.000000e+00 : f32
    %29 = vector.broadcast %cst_21 : f32 to vector<8x512xf32>
    %30 = arith.maximumf %28, %29 : vector<8x512xf32>
    %31 = arith.truncf %30 : vector<8x512xf32> to vector<8x512xbf16>
    %c0_22 = arith.constant 0 : index
    %c0_23 = arith.constant 0 : index
    %32 = vector.load %arg9[%c0_22, %c0_23] : memref<512x784xbf16, #tpu.memory_space<vmem>>, vector<512x784xbf16>
    %cst_24 = arith.constant dense<0.000000e+00> : vector<8x784xf32>
    %33 = tpu.matmul %31, %32, %cst_24 {dimension_numbers = #tpu.dot_dimension_numbers<[1], [0], [0], [1], [0, 0, 1, 1], [], []>} : vector<8x512xbf16>, vector<512x784xbf16>, vector<8x784xf32> -> vector<8x784xf32>
    %c0_25 = arith.constant 0 : index
    %c0_26 = arith.constant 0 : index
    %34 = vector.load %arg10[%c0_25, %c0_26] : memref<1x784xf32, #tpu.memory_space<vmem>>, vector<1x784xf32>
    %35 = vector.broadcast %34 : vector<1x784xf32> to vector<8x784xf32>
    %36 = arith.addf %33, %35 : vector<8x784xf32>
    %cst_27 = arith.constant 0.000000e+00 : f32
    %37 = vector.broadcast %cst_27 : f32 to vector<8x784xf32>
    %38 = arith.subf %37, %36 : vector<8x784xf32>
    %39 = math.exp %38 : vector<8x784xf32>
    %cst_28 = arith.constant 1.000000e+00 : f32
    %40 = vector.broadcast %cst_28 : f32 to vector<8x784xf32>
    %41 = arith.addf %40, %39 : vector<8x784xf32>
    %42 = tpu.reciprocal %41 {approx = true} : vector<8x784xf32> -> vector<8x784xf32>
    %43 = arith.truncf %42 : vector<8x784xf32> to vector<8x784xbf16>
    %c0_29 = arith.constant 0 : index
    %c0_30 = arith.constant 0 : index
    %44 = vector.load %arg11[%c0_29, %c0_30] : memref<8x784xbf16, #tpu.memory_space<vmem>>, vector<8x784xbf16>
    tpu.vector_store %arg11[%c0_29, %c0_30], %43 {strides = array<i32>} : memref<8x784xbf16, #tpu.memory_space<vmem>>, vector<8x784xbf16>,
    return
  }
  func.func @transform_0(%arg0: i32) -> (i32, i32) {
    %c0_i32 = arith.constant 0 : i32
    %c0_i32_0 = arith.constant 0 : i32
    return %arg0, %c0_i32 : i32, i32
  }
  func.func @transform_1(%arg0: i32) -> (i32, i32) {
    %c0_i32 = arith.constant 0 : i32
    %c0_i32_0 = arith.constant 0 : i32
    return %arg0, %c0_i32 : i32, i32
  }
  func.func @transform_2(%arg0: i32) -> (i32, i32) {
    %c0_i32 = arith.constant 0 : i32
    %c0_i32_0 = arith.constant 0 : i32
    %c0_i32_1 = arith.constant 0 : i32
    return %c0_i32, %c0_i32_0 : i32, i32
  }
  func.func @transform_3(%arg0: i32) -> (i32, i32) {
    %c0_i32 = arith.constant 0 : i32
    %c0_i32_0 = arith.constant 0 : i32
    %c0_i32_1 = arith.constant 0 : i32
    return %c0_i32, %c0_i32_0 : i32, i32
  }
  func.func @transform_4(%arg0: i32) -> (i32, i32) {
    %c0_i32 = arith.constant 0 : i32
    %c0_i32_0 = arith.constant 0 : i32
    %c0_i32_1 = arith.constant 0 : i32
    return %c0_i32, %c0_i32_0 : i32, i32
  }
  func.func @transform_5(%arg0: i32) -> (i32, i32) {
    %c0_i32 = arith.constant 0 : i32
    %c0_i32_0 = arith.constant 0 : i32
    %c0_i32_1 = arith.constant 0 : i32
    return %c0_i32, %c0_i32_0 : i32, i32
  }
  func.func @transform_6(%arg0: i32) -> (i32, i32) {
    %c0_i32 = arith.constant 0 : i32
    %c0_i32_0 = arith.constant 0 : i32
    %c0_i32_1 = arith.constant 0 : i32
    return %c0_i32, %c0_i32_0 : i32, i32
  }
  func.func @transform_7(%arg0: i32) -> (i32, i32) {
    %c0_i32 = arith.constant 0 : i32
    %c0_i32_0 = arith.constant 0 : i32
    %c0_i32_1 = arith.constant 0 : i32
    return %c0_i32, %c0_i32_0 : i32, i32
  }
  func.func @transform_8(%arg0: i32) -> (i32, i32) {
    %c0_i32 = arith.constant 0 : i32
    %c0_i32_0 = arith.constant 0 : i32
    %c0_i32_1 = arith.constant 0 : i32
    return %c0_i32, %c0_i32_0 : i32, i32
  }
  func.func @transform_9(%arg0: i32) -> (i32, i32) {
    %c0_i32 = arith.constant 0 : i32
    %c0_i32_0 = arith.constant 0 : i32
    %c0_i32_1 = arith.constant 0 : i32
    return %c0_i32, %c0_i32_0 : i32, i32
  }
  func.func @transform_10(%arg0: i32) -> (i32, i32) {
    %c0_i32 = arith.constant 0 : i32
    %c0_i32_0 = arith.constant 0 : i32
    return %arg0, %c0_i32 : i32, i32
  }
  func.func @transform_11(%arg0: i32) -> (i32, i32) {
    %c0_i32 = arith.constant 0 : i32
    %c0_i32_0 = arith.constant 0 : i32
    return %arg0, %c0_i32 : i32, i32
  }
}

</mosaic_0001>

<llo_original>
// kernel: vae_forward.1
$region0: #{vae_forward.1}
  #allocation0 [shape = 'u32[]', space=smem, size = 0x4, offset = 0x4, fixed_abs, tag = 'smem constant byte address 0x4 - core index']
  #allocation1 [shape = 'u32[144,128]{1,0:T(1,128)}', space=vmem, size = 0x12000, scoped, tag = 'internal scratch']
  %s0 = inlined_call_operand.vmem [shape: bf16[8,784], index: 0, kind: input, shape index: {}]
  %s1 = inlined_call_operand.vmem [shape: f32[8,128], index: 1, kind: input, shape index: {}]
  %s2 = inlined_call_operand.vmem [shape: bf16[784,512], index: 2, kind: input, shape index: {}]
  %s3 = inlined_call_operand.vmem [shape: f32[1,512], index: 3, kind: input, shape index: {}]
  %s4 = inlined_call_operand.vmem [shape: bf16[512,256], index: 4, kind: input, shape index: {}]
  %s5 = inlined_call_operand.vmem [shape: f32[1,256], index: 5, kind: input, shape index: {}]
  %s6 = inlined_call_operand.vmem [shape: bf16[128,512], index: 6, kind: input, shape index: {}]
  %s7 = inlined_call_operand.vmem [shape: f32[1,512], index: 7, kind: input, shape index: {}]
  %s8 = inlined_call_operand.vmem [shape: bf16[512,784], index: 8, kind: input, shape index: {}]
  %s9 = inlined_call_operand.vmem [shape: f32[1,784], index: 9, kind: input, shape index: {}]
  %s10 = inlined_call_operand.hbm [shape: bf16[8,784], index: 10, kind: output, shape index: {0}]
  %s11 = inlined_call_operand.vmem [shape: f32[8,256], index: 11, kind: output, shape index: {1}]
  %12 = xla_tuple %s10, %s11
  %s13 = sld [smem:[#allocation0]]
  $region58: #{vae_forward.1} parent=0
    _
  %s15 = ssub.s32 1, %s13
  %s16 = scalar_select 0, %s15, %s13
  $region1: #{vae_forward.1} parent=0
    #allocation2 [shape = 'u8[14336]{0}', space=vmem, size = 0x3800, scoped, tag = 'output window, operand 0, single buffered']
    #allocation3 [shape = 's32[1]{0}', space=sflag, size = 0x4, scoped, tag = 'scoped memory for vae_forward.1']
    %17 = vsyncpa [#allocation3], 0
    // Predicated region
    $region2: #{vae_forward.1} parent=1 // pred_check
      _
    $region3: #{vae_forward.1} parent=1 // pred_check_branch
      %19 = sbr.rel (0) target = $region5
    $region4: #{vae_forward.1} parent=1 // pred_region
      _
    $region5: #{vae_forward.1} parent=1 // pred_fallthru
      _
    // Predicated region
    $region6: #{vae_forward.1} parent=1 // pred_check
      _
    $region7: #{vae_forward.1} parent=1 // pred_check_branch
      %21 = sbr.rel (0) target = $region9
    $region8: #{vae_forward.1} parent=1 // pred_region
      _
    $region9: #{vae_forward.1} parent=1 // pred_fallthru
      _
    // Predicated region
    $region10: #{vae_forward.1} parent=1 // pred_check
      _
    $region11: #{vae_forward.1} parent=1 // pred_check_branch
      %23 = sbr.rel (0) target = $region13
    $region12: #{vae_forward.1} parent=1 // pred_region
      _
    $region13: #{vae_forward.1} parent=1 // pred_fallthru
      _
    // Predicated region
    $region14: #{vae_forward.1} parent=1 // pred_check
      _
    $region15: #{vae_forward.1} parent=1 // pred_check_branch
      %25 = sbr.rel (0) target = $region17
    $region16: #{vae_forward.1} parent=1 // pred_region
      _
    $region17: #{vae_forward.1} parent=1 // pred_fallthru
      _
    // Predicated region
    $region18: #{vae_forward.1} parent=1 // pred_check
      _
    $region19: #{vae_forward.1} parent=1 // pred_check_branch
      %27 = sbr.rel (0) target = $region21
    $region20: #{vae_forward.1} parent=1 // pred_region
      _
    $region21: #{vae_forward.1} parent=1 // pred_fallthru
      _
    // Predicated region
    $region22: #{vae_forward.1} parent=1 // pred_check
      _
    $region23: #{vae_forward.1} parent=1 // pred_check_branch
      %29 = sbr.rel (0) target = $region25
    $region24: #{vae_forward.1} parent=1 // pred_region
      _
    $region25: #{vae_forward.1} parent=1 // pred_fallthru
      _
    // Predicated region
    $region26: #{vae_forward.1} parent=1 // pred_check
      _
    $region27: #{vae_forward.1} parent=1 // pred_check_branch
      %31 = sbr.rel (0) target = $region29
    $region28: #{vae_forward.1} parent=1 // pred_region
      _
    $region29: #{vae_forward.1} parent=1 // pred_fallthru
      _
    // Predicated region
    $region30: #{vae_forward.1} parent=1 // pred_check
      _
    $region31: #{vae_forward.1} parent=1 // pred_check_branch
      %33 = sbr.rel (0) target = $region33
    $region32: #{vae_forward.1} parent=1 // pred_region
      _
    $region33: #{vae_forward.1} parent=1 // pred_fallthru
      _
    // Predicated region
    $region34: #{vae_forward.1} parent=1 // pred_check
      _
    $region35: #{vae_forward.1} parent=1 // pred_check_branch
      %35 = sbr.rel (0) target = $region37
    $region36: #{vae_forward.1} parent=1 // pred_region
      _
    $region37: #{vae_forward.1} parent=1 // pred_fallthru
      _
    // Predicated region
    $region38: #{vae_forward.1} parent=1 // pred_check
      _
    $region39: #{vae_forward.1} parent=1 // pred_check_branch
      %37 = sbr.rel (0) target = $region41
    $region40: #{vae_forward.1} parent=1 // pred_region
      _
    $region41: #{vae_forward.1} parent=1 // pred_fallthru
      _
    %v39 = vld [vmem:[%s0] sm:$0xff]
    %v40 = vld [vmem:[%s0 + $0x8] sm:$0xff]
    %v41 = vld [vmem:[%s0 + $0x10] sm:$0xff]
    %v42 = vld [vmem:[%s0 + $0x18] sm:$0xf]
    %v43 = vld [vmem:[%s2] sm:$0xff]
    %v44 = vld [vmem:[%s2 + $0x8] sm:$0xff]
    %v45 = vld [vmem:[%s2 + $0x10] sm:$0xff]
    %v46 = vld [vmem:[%s2 + $0x18] sm:$0xff]
    %v47 = vld [vmem:[%s2 + $0x20] sm:$0xff]
    %v48 = vld [vmem:[%s2 + $0x28] sm:$0xff]
    %v49 = vld [vmem:[%s2 + $0x30] sm:$0xff]
    %v50 = vld [vmem:[%s2 + $0x38] sm:$0xff]
    %v51 = vld [vmem:[%s2 + $0x40] sm:$0xff]
    %v52 = vld [vmem:[%s2 + $0x48] sm:$0xff]
    %v53 = vld [vmem:[%s2 + $0x50] sm:$0xff]
    %v54 = vld [vmem:[%s2 + $0x58] sm:$0xff]
    %v55 = vld [vmem:[%s2 + $0x60] sm:$0xff]
    %v56 = vld [vmem:[%s2 + $0x68] sm:$0xff]
    %v57 = vld [vmem:[%s2 + $0x70] sm:$0xff]
    %v58 = vld [vmem:[%s2 + $0x78] sm:$0xff]
    %v59 = vld [vmem:[%s2 + $0x80] sm:$0xff]
    %v60 = vld [vmem:[%s2 + $0x88] sm:$0xff]
    %v61 = vld [vmem:[%s2 + $0x90] sm:$0xff]
    %v62 = vld [vmem:[%s2 + $0x98] sm:$0xff]
    %v63 = vld [vmem:[%s2 + $0xa0] sm:$0xff]
    %v64 = vld [vmem:[%s2 + $0xa8] sm:$0xff]
    %v65 = vld [vmem:[%s2 + $0xb0] sm:$0xff]
    %v66 = vld [vmem:[%s2 + $0xb8] sm:$0xff]
    %v67 = vld [vmem:[%s2 + $0xc0] sm:$0xff]
    %v68 = vld [vmem:[%s2 + $0xc8] sm:$0xff]
    %v69 = vld [vmem:[%s2 + $0xd0] sm:$0xff]
    %v70 = vld [vmem:[%s2 + $0xd8] sm:$0xff]
    %v71 = vld [vmem:[%s2 + $0xe0] sm:$0xff]
    %v72 = vld [vmem:[%s2 + $0xe8] sm:$0xff]
    %v73 = vld [vmem:[%s2 + $0xf0] sm:$0xff]
    %v74 = vld [vmem:[%s2 + $0xf8] sm:$0xff]
    %v75 = vld [vmem:[%s2 + $0x100] sm:$0xff]
    %v76 = vld [vmem:[%s2 + $0x108] sm:$0xff]
    %v77 = vld [vmem:[%s2 + $0x110] sm:$0xff]
    %v78 = vld [vmem:[%s2 + $0x118] sm:$0xff]
    %v79 = vld [vmem:[%s2 + $0x120] sm:$0xff]
    %v80 = vld [vmem:[%s2 + $0x128] sm:$0xff]
    %v81 = vld [vmem:[%s2 + $0x130] sm:$0xff]
    %v82 = vld [vmem:[%s2 + $0x138] sm:$0xff]
    %v83 = vld [vmem:[%s2 + $0x140] sm:$0xff]
    %v84 = vld [vmem:[%s2 + $0x148] sm:$0xff]
    %v85 = vld [vmem:[%s2 + $0x150] sm:$0xff]
    %v86 = vld [vmem:[%s2 + $0x158] sm:$0xff]
    %v87 = vld [vmem:[%s2 + $0x160] sm:$0xff]
    %v88 = vld [vmem:[%s2 + $0x168] sm:$0xff]
    %v89 = vld [vmem:[%s2 + $0x170] sm:$0xff]
    %v90 = vld [vmem:[%s2 + $0x178] sm:$0xff]
    %v91 = vld [vmem:[%s2 + $0x180] sm:$0xff]
    %v92 = vld [vmem:[%s2 + $0x188] sm:$0xff]
    %v93 = vld [vmem:[%s2 + $0x190] sm:$0xff]
    %v94 = vld [vmem:[%s2 + $0x198] sm:$0xff]
    %v95 = vld [vmem:[%s2 + $0x1a0] sm:$0xff]
    %v96 = vld [vmem:[%s2 + $0x1a8] sm:$0xff]
    %v97 = vld [vmem:[%s2 + $0x1b0] sm:$0xff]
    %v98 = vld [vmem:[%s2 + $0x1b8] sm:$0xff]
    %v99 = vld [vmem:[%s2 + $0x1c0] sm:$0xff]
    %v100 = vld [vmem:[%s2 + $0x1c8] sm:$0xff]
    %v101 = vld [vmem:[%s2 + $0x1d0] sm:$0xff]
    %v102 = vld [vmem:[%s2 + $0x1d8] sm:$0xff]
    %v103 = vld [vmem:[%s2 + $0x1e0] sm:$0xff]
    %v104 = vld [vmem:[%s2 + $0x1e8] sm:$0xff]
    %v105 = vld [vmem:[%s2 + $0x1f0] sm:$0xff]
    %v106 = vld [vmem:[%s2 + $0x1f8] sm:$0xff]
    %v107 = vld [vmem:[%s2 + $0x200] sm:$0xff]
    %v108 = vld [vmem:[%s2 + $0x208] sm:$0xff]
    %v109 = vld [vmem:[%s2 + $0x210] sm:$0xff]
    %v110 = vld [vmem:[%s2 + $0x218] sm:$0xff]
    %v111 = vld [vmem:[%s2 + $0x220] sm:$0xff]
    %v112 = vld [vmem:[%s2 + $0x228] sm:$0xff]
    %v113 = vld [vmem:[%s2 + $0x230] sm:$0xff]
    %v114 = vld [vmem:[%s2 + $0x238] sm:$0xff]
    %v115 = vld [vmem:[%s2 + $0x240] sm:$0xff]
    %v116 = vld [vmem:[%s2 + $0x248] sm:$0xff]
    %v117 = vld [vmem:[%s2 + $0x250] sm:$0xff]
    %v118 = vld [vmem:[%s2 + $0x258] sm:$0xff]
    %v119 = vld [vmem:[%s2 + $0x260] sm:$0xff]
    %v120 = vld [vmem:[%s2 + $0x268] sm:$0xff]
    %v121 = vld [vmem:[%s2 + $0x270] sm:$0xff]
    %v122 = vld [vmem:[%s2 + $0x278] sm:$0xff]
    %v123 = vld [vmem:[%s2 + $0x280] sm:$0xff]
    %v124 = vld [vmem:[%s2 + $0x288] sm:$0xff]
    %v125 = vld [vmem:[%s2 + $0x290] sm:$0xff]
    %v126 = vld [vmem:[%s2 + $0x298] sm:$0xff]
    %v127 = vld [vmem:[%s2 + $0x2a0] sm:$0xff]
    %v128 = vld [vmem:[%s2 + $0x2a8] sm:$0xff]
    %v129 = vld [vmem:[%s2 + $0x2b0] sm:$0xff]
    %v130 = vld [vmem:[%s2 + $0x2b8] sm:$0xff]
    %v131 = vld [vmem:[%s2 + $0x2c0] sm:$0xff]
    %v132 = vld [vmem:[%s2 + $0x2c8] sm:$0xff]
    %v133 = vld [vmem:[%s2 + $0x2d0] sm:$0xff]
    %v134 = vld [vmem:[%s2 + $0x2d8] sm:$0xff]
    %v135 = vld [vmem:[%s2 + $0x2e0] sm:$0xff]
    %v136 = vld [vmem:[%s2 + $0x2e8] sm:$0xff]
    %v137 = vld [vmem:[%s2 + $0x2f0] sm:$0xff]
    %v138 = vld [vmem:[%s2 + $0x2f8] sm:$0xff]
    %v139 = vld [vmem:[%s2 + $0x300] sm:$0xff]
    %v140 = vld [vmem:[%s2 + $0x308] sm:$0xff]
    %v141 = vld [vmem:[%s2 + $0x310] sm:$0xff]
    %v142 = vld [vmem:[%s2 + $0x318] sm:$0xff]
    %v143 = vld [vmem:[%s2 + $0x320] sm:$0xff]
    %v144 = vld [vmem:[%s2 + $0x328] sm:$0xff]
    %v145 = vld [vmem:[%s2 + $0x330] sm:$0xff]
    %v146 = vld [vmem:[%s2 + $0x338] sm:$0xff]
    %v147 = vld [vmem:[%s2 + $0x340] sm:$0xff]
    %v148 = vld [vmem:[%s2 + $0x348] sm:$0xff]
    %v149 = vld [vmem:[%s2 + $0x350] sm:$0xff]
    %v150 = vld [vmem:[%s2 + $0x358] sm:$0xff]
    %v151 = vld [vmem:[%s2 + $0x360] sm:$0xff]
    %v152 = vld [vmem:[%s2 + $0x368] sm:$0xff]
    %v153 = vld [vmem:[%s2 + $0x370] sm:$0xff]
    %v154 = vld [vmem:[%s2 + $0x378] sm:$0xff]
    %v155 = vld [vmem:[%s2 + $0x380] sm:$0xff]
    %v156 = vld [vmem:[%s2 + $0x388] sm:$0xff]
    %v157 = vld [vmem:[%s2 + $0x390] sm:$0xff]
    %v158 = vld [vmem:[%s2 + $0x398] sm:$0xff]
    %v159 = vld [vmem:[%s2 + $0x3a0] sm:$0xff]
    %v160 = vld [vmem:[%s2 + $0x3a8] sm:$0xff]
    %v161 = vld [vmem:[%s2 + $0x3b0] sm:$0xff]
    %v162 = vld [vmem:[%s2 + $0x3b8] sm:$0xff]
    %v163 = vld [vmem:[%s2 + $0x3c0] sm:$0xff]
    %v164 = vld [vmem:[%s2 + $0x3c8] sm:$0xff]
    %v165 = vld [vmem:[%s2 + $0x3d0] sm:$0xff]
    %v166 = vld [vmem:[%s2 + $0x3d8] sm:$0xff]
    %v167 = vld [vmem:[%s2 + $0x3e0] sm:$0xff]
    %v168 = vld [vmem:[%s2 + $0x3e8] sm:$0xff]
    %v169 = vld [vmem:[%s2 + $0x3f0] sm:$0xff]
    %v170 = vld [vmem:[%s2 + $0x3f8] sm:$0xff]
    %v171 = vld [vmem:[%s2 + $0x400] sm:$0xff]
    %v172 = vld [vmem:[%s2 + $0x408] sm:$0xff]
    %v173 = vld [vmem:[%s2 + $0x410] sm:$0xff]
    %v174 = vld [vmem:[%s2 + $0x418] sm:$0xff]
    %v175 = vld [vmem:[%s2 + $0x420] sm:$0xff]
    %v176 = vld [vmem:[%s2 + $0x428] sm:$0xff]
    %v177 = vld [vmem:[%s2 + $0x430] sm:$0xff]
    %v178 = vld [vmem:[%s2 + $0x438] sm:$0xff]
    %v179 = vld [vmem:[%s2 + $0x440] sm:$0xff]
    %v180 = vld [vmem:[%s2 + $0x448] sm:$0xff]
    %v181 = vld [vmem:[%s2 + $0x450] sm:$0xff]
    %v182 = vld [vmem:[%s2 + $0x458] sm:$0xff]
    %v183 = vld [vmem:[%s2 + $0x460] sm:$0xff]
    %v184 = vld [vmem:[%s2 + $0x468] sm:$0xff]
    %v185 = vld [vmem:[%s2 + $0x470] sm:$0xff]
    %v186 = vld [vmem:[%s2 + $0x478] sm:$0xff]
    %v187 = vld [vmem:[%s2 + $0x480] sm:$0xff]
    %v188 = vld [vmem:[%s2 + $0x488] sm:$0xff]
    %v189 = vld [vmem:[%s2 + $0x490] sm:$0xff]
    %v190 = vld [vmem:[%s2 + $0x498] sm:$0xff]
    %v191 = vld [vmem:[%s2 + $0x4a0] sm:$0xff]
    %v192 = vld [vmem:[%s2 + $0x4a8] sm:$0xff]
    %v193 = vld [vmem:[%s2 + $0x4b0] sm:$0xff]
    %v194 = vld [vmem:[%s2 + $0x4b8] sm:$0xff]
    %v195 = vld [vmem:[%s2 + $0x4c0] sm:$0xff]
    %v196 = vld [vmem:[%s2 + $0x4c8] sm:$0xff]
    %v197 = vld [vmem:[%s2 + $0x4d0] sm:$0xff]
    %v198 = vld [vmem:[%s2 + $0x4d8] sm:$0xff]
    %v199 = vld [vmem:[%s2 + $0x4e0] sm:$0xff]
    %v200 = vld [vmem:[%s2 + $0x4e8] sm:$0xff]
    %v201 = vld [vmem:[%s2 + $0x4f0] sm:$0xff]
    %v202 = vld [vmem:[%s2 + $0x4f8] sm:$0xff]
    %v203 = vld [vmem:[%s2 + $0x500] sm:$0xff]
    %v204 = vld [vmem:[%s2 + $0x508] sm:$0xff]
    %v205 = vld [vmem:[%s2 + $0x510] sm:$0xff]
    %v206 = vld [vmem:[%s2 + $0x518] sm:$0xff]
    %v207 = vld [vmem:[%s2 + $0x520] sm:$0xff]
    %v208 = vld [vmem:[%s2 + $0x528] sm:$0xff]
    %v209 = vld [vmem:[%s2 + $0x530] sm:$0xff]
    %v210 = vld [vmem:[%s2 + $0x538] sm:$0xff]
    %v211 = vld [vmem:[%s2 + $0x540] sm:$0xff]
    %v212 = vld [vmem:[%s2 + $0x548] sm:$0xff]
    %v213 = vld [vmem:[%s2 + $0x550] sm:$0xff]
    %v214 = vld [vmem:[%s2 + $0x558] sm:$0xff]
    %v215 = vld [vmem:[%s2 + $0x560] sm:$0xff]
    %v216 = vld [vmem:[%s2 + $0x568] sm:$0xff]
    %v217 = vld [vmem:[%s2 + $0x570] sm:$0xff]
    %v218 = vld [vmem:[%s2 + $0x578] sm:$0xff]
    %v219 = vld [vmem:[%s2 + $0x580] sm:$0xff]
    %v220 = vld [vmem:[%s2 + $0x588] sm:$0xff]
    %v221 = vld [vmem:[%s2 + $0x590] sm:$0xff]
    %v222 = vld [vmem:[%s2 + $0x598] sm:$0xff]
    %v223 = vld [vmem:[%s2 + $0x5a0] sm:$0xff]
    %v224 = vld [vmem:[%s2 + $0x5a8] sm:$0xff]
    %v225 = vld [vmem:[%s2 + $0x5b0] sm:$0xff]
    %v226 = vld [vmem:[%s2 + $0x5b8] sm:$0xff]
    %v227 = vld [vmem:[%s2 + $0x5c0] sm:$0xff]
    %v228 = vld [vmem:[%s2 + $0x5c8] sm:$0xff]
    %v229 = vld [vmem:[%s2 + $0x5d0] sm:$0xff]
    %v230 = vld [vmem:[%s2 + $0x5d8] sm:$0xff]
    %v231 = vld [vmem:[%s2 + $0x5e0] sm:$0xff]
    %v232 = vld [vmem:[%s2 + $0x5e8] sm:$0xff]
    %v233 = vld [vmem:[%s2 + $0x5f0] sm:$0xff]
    %v234 = vld [vmem:[%s2 + $0x5f8] sm:$0xff]
    %v235 = vld [vmem:[%s2 + $0x600] sm:$0xff]
    %v236 = vld [vmem:[%s2 + $0x608] sm:$0xff]
    %v237 = vld [vmem:[%s2 + $0x610] sm:$0xff]
    %v238 = vld [vmem:[%s2 + $0x618] sm:$0xff]
    %v239 = vld [vmem:[%s3] sm:$0xf]
    %v241 = vlaneseq
    %v242 = vshrl.u32 %v241, 7
    %v243 = vsub.s32 0, %v242
    %v244 = vrot.slane %v239, %v243
    %v245 = vlaneseq
    %v246 = vshrl.u32 %v245, 7
    %v247 = vsub.s32 1, %v246
    %v248 = vrot.slane %v239, %v247
    %v249 = vlaneseq
    %v250 = vshrl.u32 %v249, 7
    %v251 = vsub.s32 2, %v250
    %v252 = vrot.slane %v239, %v251
    %v253 = vlaneseq
    %v254 = vshrl.u32 %v253, 7
    %v255 = vsub.s32 3, %v254
    %v256 = vrot.slane %v239, %v255
    %v265 = vunpack.c.l.b16 %v39
    %v266 = vunpack.c.h.b16 %v39
    %v267 = vunpack.c.l.b16 %v40
    %v268 = vunpack.c.h.b16 %v40
    %v269 = vunpack.c.l.b16 %v41
    %v270 = vunpack.c.h.b16 %v41
    %v271 = vunpack.c.l.b16 %v42
    %v272 = vpack.c.b16 %v265, %v265
    %v273 = vpack.c.b16 %v266, %v266
    %v274 = vpack.c.b16 %v267, %v267
    %v275 = vpack.c.b16 %v268, %v268
    %v276 = vpack.c.b16 %v269, %v269
    %v277 = vpack.c.b16 %v270, %v270
    %v278 = vpack.c.b16 %v271, %v271
    %v481 = vunpack.c.l.b16 %v43
    %v482 = vunpack.c.h.b16 %v43
    %v483 = vunpack.c.l.b16 %v44
    %v484 = vunpack.c.h.b16 %v44
    %v485 = vunpack.c.l.b16 %v45
    %v486 = vunpack.c.h.b16 %v45
    %v487 = vunpack.c.l.b16 %v46
    %v488 = vunpack.c.h.b16 %v46
    %v489 = vunpack.c.l.b16 %v47
    %v490 = vunpack.c.h.b16 %v47
    %v491 = vunpack.c.l.b16 %v48
    %v492 = vunpack.c.h.b16 %v48
    %v493 = vunpack.c.l.b16 %v49
    %v494 = vunpack.c.h.b16 %v49
    %v495 = vunpack.c.l.b16 %v50
    %v496 = vunpack.c.h.b16 %v50
    %v497 = vunpack.c.l.b16 %v51
    %v498 = vunpack.c.h.b16 %v51
    %v499 = vunpack.c.l.b16 %v52
    %v500 = vunpack.c.h.b16 %v52
    %v501 = vunpack.c.l.b16 %v53
    %v502 = vunpack.c.h.b16 %v53
    %v503 = vunpack.c.l.b16 %v54
    %v504 = vunpack.c.h.b16 %v54
    %v505 = vunpack.c.l.b16 %v55
    %v506 = vunpack.c.h.b16 %v55
    %v507 = vunpack.c.l.b16 %v56
    %v508 = vunpack.c.h.b16 %v56
    %v509 = vunpack.c.l.b16 %v57
    %v510 = vunpack.c.h.b16 %v57
    %v511 = vunpack.c.l.b16 %v58
    %v512 = vunpack.c.h.b16 %v58
    %v513 = vunpack.c.l.b16 %v59
    %v514 = vunpack.c.h.b16 %v59
    %v515 = vunpack.c.l.b16 %v60
    %v516 = vunpack.c.h.b16 %v60
    %v517 = vunpack.c.l.b16 %v61
    %v518 = vunpack.c.h.b16 %v61
    %v519 = vunpack.c.l.b16 %v62
    %v520 = vunpack.c.h.b16 %v62
    %v521 = vunpack.c.l.b16 %v63
    %v522 = vunpack.c.h.b16 %v63
    %v523 = vunpack.c.l.b16 %v64
    %v524 = vunpack.c.h.b16 %v64
    %v525 = vunpack.c.l.b16 %v65
    %v526 = vunpack.c.h.b16 %v65
    %v527 = vunpack.c.l.b16 %v66
    %v528 = vunpack.c.h.b16 %v66
    %v529 = vunpack.c.l.b16 %v67
    %v530 = vunpack.c.h.b16 %v67
    %v531 = vunpack.c.l.b16 %v68
    %v532 = vunpack.c.h.b16 %v68
    %v533 = vunpack.c.l.b16 %v69
    %v534 = vunpack.c.h.b16 %v69
    %v535 = vunpack.c.l.b16 %v70
    %v536 = vunpack.c.h.b16 %v70
    %v537 = vunpack.c.l.b16 %v71
    %v538 = vunpack.c.h.b16 %v71
    %v539 = vunpack.c.l.b16 %v72
    %v540 = vunpack.c.h.b16 %v72
    %v541 = vunpack.c.l.b16 %v73
    %v542 = vunpack.c.h.b16 %v73
    %v543 = vunpack.c.l.b16 %v74
    %v544 = vunpack.c.h.b16 %v74
    %v545 = vunpack.c.l.b16 %v75
    %v546 = vunpack.c.h.b16 %v75
    %v547 = vunpack.c.l.b16 %v76
    %v548 = vunpack.c.h.b16 %v76
    %v549 = vunpack.c.l.b16 %v77
    %v550 = vunpack.c.h.b16 %v77
    %v551 = vunpack.c.l.b16 %v78
    %v552 = vunpack.c.h.b16 %v78
    %v553 = vunpack.c.l.b16 %v79
    %v554 = vunpack.c.h.b16 %v79
    %v555 = vunpack.c.l.b16 %v80
    %v556 = vunpack.c.h.b16 %v80
    %v557 = vunpack.c.l.b16 %v81
    %v558 = vunpack.c.h.b16 %v81
    %v559 = vunpack.c.l.b16 %v82
    %v560 = vunpack.c.h.b16 %v82
    %v561 = vunpack.c.l.b16 %v83
    %v562 = vunpack.c.h.b16 %v83
    %v563 = vunpack.c.l.b16 %v84
    %v564 = vunpack.c.h.b16 %v84
    %v565 = vunpack.c.l.b16 %v85
    %v566 = vunpack.c.h.b16 %v85
    %v567 = vunpack.c.l.b16 %v86
    %v568 = vunpack.c.h.b16 %v86
    %v569 = vunpack.c.l.b16 %v87
    %v570 = vunpack.c.h.b16 %v87
    %v571 = vunpack.c.l.b16 %v88
    %v572 = vunpack.c.h.b16 %v88
    %v573 = vunpack.c.l.b16 %v89
    %v574 = vunpack.c.h.b16 %v89
    %v575 = vunpack.c.l.b16 %v90
    %v576 = vunpack.c.h.b16 %v90
    %v577 = vunpack.c.l.b16 %v91
    %v578 = vunpack.c.h.b16 %v91
    %v579 = vunpack.c.l.b16 %v92
    %v580 = vunpack.c.h.b16 %v92
    %v581 = vunpack.c.l.b16 %v93
    %v582 = vunpack.c.h.b16 %v93
    %v583 = vunpack.c.l.b16 %v94
    %v584 = vunpack.c.h.b16 %v94
    %v585 = vunpack.c.l.b16 %v95
    %v586 = vunpack.c.h.b16 %v95
    %v587 = vunpack.c.l.b16 %v96
    %v588 = vunpack.c.h.b16 %v96
    %v589 = vunpack.c.l.b16 %v97
    %v590 = vunpack.c.h.b16 %v97
    %v591 = vunpack.c.l.b16 %v98
    %v592 = vunpack.c.h.b16 %v98
    %v593 = vunpack.c.l.b16 %v99
    %v594 = vunpack.c.h.b16 %v99
    %v595 = vunpack.c.l.b16 %v100
    %v596 = vunpack.c.h.b16 %v100
    %v597 = vunpack.c.l.b16 %v101
    %v598 = vunpack.c.h.b16 %v101
    %v599 = vunpack.c.l.b16 %v102
    %v600 = vunpack.c.h.b16 %v102
    %v601 = vunpack.c.l.b16 %v103
    %v602 = vunpack.c.h.b16 %v103
    %v603 = vunpack.c.l.b16 %v104
    %v604 = vunpack.c.h.b16 %v104
    %v605 = vunpack.c.l.b16 %v105
    %v606 = vunpack.c.h.b16 %v105
    %v607 = vunpack.c.l.b16 %v106
    %v608 = vunpack.c.h.b16 %v106
    %v609 = vunpack.c.l.b16 %v107
    %v610 = vunpack.c.h.b16 %v107
    %v611 = vunpack.c.l.b16 %v108
    %v612 = vunpack.c.h.b16 %v108
    %v613 = vunpack.c.l.b16 %v109
    %v614 = vunpack.c.h.b16 %v109
    %v615 = vunpack.c.l.b16 %v110
    %v616 = vunpack.c.h.b16 %v110
    %v617 = vunpack.c.l.b16 %v111
    %v618 = vunpack.c.h.b16 %v111
    %v619 = vunpack.c.l.b16 %v112
    %v620 = vunpack.c.h.b16 %v112
    %v621 = vunpack.c.l.b16 %v113
    %v622 = vunpack.c.h.b16 %v113
    %v623 = vunpack.c.l.b16 %v114
    %v624 = vunpack.c.h.b16 %v114
    %v625 = vunpack.c.l.b16 %v115
    %v626 = vunpack.c.h.b16 %v115
    %v627 = vunpack.c.l.b16 %v116
    %v628 = vunpack.c.h.b16 %v116
    %v629 = vunpack.c.l.b16 %v117
    %v630 = vunpack.c.h.b16 %v117
    %v631 = vunpack.c.l.b16 %v118
    %v632 = vunpack.c.h.b16 %v118
    %v633 = vunpack.c.l.b16 %v119
    %v634 = vunpack.c.h.b16 %v119
    %v635 = vunpack.c.l.b16 %v120
    %v636 = vunpack.c.h.b16 %v120
    %v637 = vunpack.c.l.b16 %v121
    %v638 = vunpack.c.h.b16 %v121
    %v639 = vunpack.c.l.b16 %v122
    %v640 = vunpack.c.h.b16 %v122
    %v641 = vunpack.c.l.b16 %v123
    %v642 = vunpack.c.h.b16 %v123
    %v643 = vunpack.c.l.b16 %v124
    %v644 = vunpack.c.h.b16 %v124
    %v645 = vunpack.c.l.b16 %v125
    %v646 = vunpack.c.h.b16 %v125
    %v647 = vunpack.c.l.b16 %v126
    %v648 = vunpack.c.h.b16 %v126
    %v649 = vunpack.c.l.b16 %v127
    %v650 = vunpack.c.h.b16 %v127
    %v651 = vunpack.c.l.b16 %v128
    %v652 = vunpack.c.h.b16 %v128
    %v653 = vunpack.c.l.b16 %v129
    %v654 = vunpack.c.h.b16 %v129
    %v655 = vunpack.c.l.b16 %v130
    %v656 = vunpack.c.h.b16 %v130
    %v657 = vunpack.c.l.b16 %v131
    %v658 = vunpack.c.h.b16 %v131
    %v659 = vunpack.c.l.b16 %v132
    %v660 = vunpack.c.h.b16 %v132
    %v661 = vunpack.c.l.b16 %v133
    %v662 = vunpack.c.h.b16 %v133
    %v663 = vunpack.c.l.b16 %v134
    %v664 = vunpack.c.h.b16 %v134
    %v665 = vunpack.c.l.b16 %v135
    %v666 = vunpack.c.h.b16 %v135
    %v667 = vunpack.c.l.b16 %v136
    %v668 = vunpack.c.h.b16 %v136
    %v669 = vunpack.c.l.b16 %v137
    %v670 = vunpack.c.h.b16 %v137
    %v671 = vunpack.c.l.b16 %v138
    %v672 = vunpack.c.h.b16 %v138
    %v673 = vunpack.c.l.b16 %v139
    %v674 = vunpack.c.h.b16 %v139
    %v675 = vunpack.c.l.b16 %v140
    %v676 = vunpack.c.h.b16 %v140
    %v677 = vunpack.c.l.b16 %v141
    %v678 = vunpack.c.h.b16 %v141
    %v679 = vunpack.c.l.b16 %v142
    %v680 = vunpack.c.h.b16 %v142
    %v681 = vunpack.c.l.b16 %v143
    %v682 = vunpack.c.h.b16 %v143
    %v683 = vunpack.c.l.b16 %v144
    %v684 = vunpack.c.h.b16 %v144
    %v685 = vunpack.c.l.b16 %v145
    %v686 = vunpack.c.h.b16 %v145
    %v687 = vunpack.c.l.b16 %v146
    %v688 = vunpack.c.h.b16 %v146
    %v689 = vunpack.c.l.b16 %v147
    %v690 = vunpack.c.h.b16 %v147
    %v691 = vunpack.c.l.b16 %v148
    %v692 = vunpack.c.h.b16 %v148
    %v693 = vunpack.c.l.b16 %v149
    %v694 = vunpack.c.h.b16 %v149
    %v695 = vunpack.c.l.b16 %v150
    %v696 = vunpack.c.h.b16 %v150
    %v697 = vunpack.c.l.b16 %v151
    %v698 = vunpack.c.h.b16 %v151
    %v699 = vunpack.c.l.b16 %v152
    %v700 = vunpack.c.h.b16 %v152
    %v701 = vunpack.c.l.b16 %v153
    %v702 = vunpack.c.h.b16 %v153
    %v703 = vunpack.c.l.b16 %v154
    %v704 = vunpack.c.h.b16 %v154
    %v705 = vunpack.c.l.b16 %v155
    %v706 = vunpack.c.h.b16 %v155
    %v707 = vunpack.c.l.b16 %v156
    %v708 = vunpack.c.h.b16 %v156
    %v709 = vunpack.c.l.b16 %v157
    %v710 = vunpack.c.h.b16 %v157
    %v711 = vunpack.c.l.b16 %v158
    %v712 = vunpack.c.h.b16 %v158
    %v713 = vunpack.c.l.b16 %v159
    %v714 = vunpack.c.h.b16 %v159
    %v715 = vunpack.c.l.b16 %v160
    %v716 = vunpack.c.h.b16 %v160
    %v717 = vunpack.c.l.b16 %v161
    %v718 = vunpack.c.h.b16 %v161
    %v719 = vunpack.c.l.b16 %v162
    %v720 = vunpack.c.h.b16 %v162
    %v721 = vunpack.c.l.b16 %v163
    %v722 = vunpack.c.h.b16 %v163
    %v723 = vunpack.c.l.b16 %v164
    %v724 = vunpack.c.h.b16 %v164
    %v725 = vunpack.c.l.b16 %v165
    %v726 = vunpack.c.h.b16 %v165
    %v727 = vunpack.c.l.b16 %v166
    %v728 = vunpack.c.h.b16 %v166
    %v729 = vunpack.c.l.b16 %v167
    %v730 = vunpack.c.h.b16 %v167
    %v731 = vunpack.c.l.b16 %v168
    %v732 = vunpack.c.h.b16 %v168
    %v733 = vunpack.c.l.b16 %v169
    %v734 = vunpack.c.h.b16 %v169
    %v735 = vunpack.c.l.b16 %v170
    %v736 = vunpack.c.h.b16 %v170
    %v737 = vunpack.c.l.b16 %v171
    %v738 = vunpack.c.h.b16 %v171
    %v739 = vunpack.c.l.b16 %v172
    %v740 = vunpack.c.h.b16 %v172
    %v741 = vunpack.c.l.b16 %v173
    %v742 = vunpack.c.h.b16 %v173
    %v743 = vunpack.c.l.b16 %v174
    %v744 = vunpack.c.h.b16 %v174
    %v745 = vunpack.c.l.b16 %v175
    %v746 = vunpack.c.h.b16 %v175
    %v747 = vunpack.c.l.b16 %v176
    %v748 = vunpack.c.h.b16 %v176
    %v749 = vunpack.c.l.b16 %v177
    %v750 = vunpack.c.h.b16 %v177
    %v751 = vunpack.c.l.b16 %v178
    %v752 = vunpack.c.h.b16 %v178
    %v753 = vunpack.c.l.b16 %v179
    %v754 = vunpack.c.h.b16 %v179
    %v755 = vunpack.c.l.b16 %v180
    %v756 = vunpack.c.h.b16 %v180
    %v757 = vunpack.c.l.b16 %v181
    %v758 = vunpack.c.h.b16 %v181
    %v759 = vunpack.c.l.b16 %v182
    %v760 = vunpack.c.h.b16 %v182
    %v761 = vunpack.c.l.b16 %v183
    %v762 = vunpack.c.h.b16 %v183
    %v763 = vunpack.c.l.b16 %v184
    %v764 = vunpack.c.h.b16 %v184
    %v765 = vunpack.c.l.b16 %v185
    %v766 = vunpack.c.h.b16 %v185
    %v767 = vunpack.c.l.b16 %v186
    %v768 = vunpack.c.h.b16 %v186
    %v769 = vunpack.c.l.b16 %v187
    %v770 = vunpack.c.h.b16 %v187
    %v771 = vunpack.c.l.b16 %v188
    %v772 = vunpack.c.h.b16 %v188
    %v773 = vunpack.c.l.b16 %v189
    %v774 = vunpack.c.h.b16 %v189
    %v775 = vunpack.c.l.b16 %v190
    %v776 = vunpack.c.h.b16 %v190
    %v777 = vunpack.c.l.b16 %v191
    %v778 = vunpack.c.h.b16 %v191
    %v779 = vunpack.c.l.b16 %v192
    %v780 = vunpack.c.h.b16 %v192
    %v781 = vunpack.c.l.b16 %v193
    %v782 = vunpack.c.h.b16 %v193
    %v783 = vunpack.c.l.b16 %v194
    %v784 = vunpack.c.h.b16 %v194
    %v785 = vunpack.c.l.b16 %v195
    %v786 = vunpack.c.h.b16 %v195
    %v787 = vunpack.c.l.b16 %v196
    %v788 = vunpack.c.h.b16 %v196
    %v789 = vunpack.c.l.b16 %v197
    %v790 = vunpack.c.h.b16 %v197
    %v791 = vunpack.c.l.b16 %v198
    %v792 = vunpack.c.h.b16 %v198
    %v793 = vunpack.c.l.b16 %v199
    %v794 = vunpack.c.h.b16 %v199
    %v795 = vunpack.c.l.b16 %v200
    %v796 = vunpack.c.h.b16 %v200
    %v797 = vunpack.c.l.b16 %v201
    %v798 = vunpack.c.h.b16 %v201
    %v799 = vunpack.c.l.b16 %v202
    %v800 = vunpack.c.h.b16 %v202
    %v801 = vunpack.c.l.b16 %v203
    %v802 = vunpack.c.h.b16 %v203
    %v803 = vunpack.c.l.b16 %v204
    %v804 = vunpack.c.h.b16 %v204
    %v805 = vunpack.c.l.b16 %v205
    %v806 = vunpack.c.h.b16 %v205
    %v807 = vunpack.c.l.b16 %v206
    %v808 = vunpack.c.h.b16 %v206
    %v809 = vunpack.c.l.b16 %v207
    %v810 = vunpack.c.h.b16 %v207
    %v811 = vunpack.c.l.b16 %v208
    %v812 = vunpack.c.h.b16 %v208
    %v813 = vunpack.c.l.b16 %v209
    %v814 = vunpack.c.h.b16 %v209
    %v815 = vunpack.c.l.b16 %v210
    %v816 = vunpack.c.h.b16 %v210
    %v817 = vunpack.c.l.b16 %v211
    %v818 = vunpack.c.h.b16 %v211
    %v819 = vunpack.c.l.b16 %v212
    %v820 = vunpack.c.h.b16 %v212
    %v821 = vunpack.c.l.b16 %v213
    %v822 = vunpack.c.h.b16 %v213
    %v823 = vunpack.c.l.b16 %v214
    %v824 = vunpack.c.h.b16 %v214
    %v825 = vunpack.c.l.b16 %v215
    %v826 = vunpack.c.h.b16 %v215
    %v827 = vunpack.c.l.b16 %v216
    %v828 = vunpack.c.h.b16 %v216
    %v829 = vunpack.c.l.b16 %v217
    %v830 = vunpack.c.h.b16 %v217
    %v831 = vunpack.c.l.b16 %v218
    %v832 = vunpack.c.h.b16 %v218
    %v833 = vunpack.c.l.b16 %v219
    %v834 = vunpack.c.h.b16 %v219
    %v835 = vunpack.c.l.b16 %v220
    %v836 = vunpack.c.h.b16 %v220
    %v837 = vunpack.c.l.b16 %v221
    %v838 = vunpack.c.h.b16 %v221
    %v839 = vunpack.c.l.b16 %v222
    %v840 = vunpack.c.h.b16 %v222
    %v841 = vunpack.c.l.b16 %v223
    %v842 = vunpack.c.h.b16 %v223
    %v843 = vunpack.c.l.b16 %v224
    %v844 = vunpack.c.h.b16 %v224
    %v845 = vunpack.c.l.b16 %v225
    %v846 = vunpack.c.h.b16 %v225
    %v847 = vunpack.c.l.b16 %v226
    %v848 = vunpack.c.h.b16 %v226
    %v849 = vunpack.c.l.b16 %v227
    %v850 = vunpack.c.h.b16 %v227
    %v851 = vunpack.c.l.b16 %v228
    %v852 = vunpack.c.h.b16 %v228
    %v853 = vunpack.c.l.b16 %v229
    %v854 = vunpack.c.h.b16 %v229
    %v855 = vunpack.c.l.b16 %v230
    %v856 = vunpack.c.h.b16 %v230
    %v857 = vunpack.c.l.b16 %v231
    %v858 = vunpack.c.h.b16 %v231
    %v859 = vunpack.c.l.b16 %v232
    %v860 = vunpack.c.h.b16 %v232
    %v861 = vunpack.c.l.b16 %v233
    %v862 = vunpack.c.h.b16 %v233
    %v863 = vunpack.c.l.b16 %v234
    %v864 = vunpack.c.h.b16 %v234
    %v865 = vunpack.c.l.b16 %v235
    %v866 = vunpack.c.h.b16 %v235
    %v867 = vunpack.c.l.b16 %v236
    %v868 = vunpack.c.h.b16 %v236
    %v869 = vunpack.c.l.b16 %v237
    %v870 = vunpack.c.h.b16 %v237
    %v871 = vunpack.c.l.b16 %v238
    %v872 = vunpack.c.h.b16 %v238
    %v873 = vpack.c.b16 %v485, %v481
    %v874 = vpack.c.b16 %v486, %v482
    %v875 = vpack.c.b16 %v487, %v483
    %v876 = vpack.c.b16 %v488, %v484
    %v877 = vpack.c.b16 %v493, %v489
    %v878 = vpack.c.b16 %v494, %v490
    %v879 = vpack.c.b16 %v495, %v491
    %v880 = vpack.c.b16 %v496, %v492
    %v881 = vpack.c.b16 %v501, %v497
    %v882 = vpack.c.b16 %v502, %v498
    %v883 = vpack.c.b16 %v503, %v499
    %v884 = vpack.c.b16 %v504, %v500
    %v885 = vpack.c.b16 %v509, %v505
    %v886 = vpack.c.b16 %v510, %v506
    %v887 = vpack.c.b16 %v511, %v507
    %v888 = vpack.c.b16 %v512, %v508
    %v889 = vpack.c.b16 %v517, %v513
    %v890 = vpack.c.b16 %v518, %v514
    %v891 = vpack.c.b16 %v519, %v515
    %v892 = vpack.c.b16 %v520, %v516
    %v893 = vpack.c.b16 %v525, %v521
    %v894 = vpack.c.b16 %v526, %v522
    %v895 = vpack.c.b16 %v527, %v523
    %v896 = vpack.c.b16 %v528, %v524
    %v897 = vpack.c.b16 %v533, %v529
    %v898 = vpack.c.b16 %v534, %v530
    %v899 = vpack.c.b16 %v535, %v531
    %v900 = vpack.c.b16 %v536, %v532
    %v901 = vpack.c.b16 %v541, %v537
    %v902 = vpack.c.b16 %v542, %v538
    %v903 = vpack.c.b16 %v543, %v539
    %v904 = vpack.c.b16 %v544, %v540
    %v905 = vpack.c.b16 %v549, %v545
    %v906 = vpack.c.b16 %v550, %v546
    %v907 = vpack.c.b16 %v551, %v547
    %v908 = vpack.c.b16 %v552, %v548
    %v909 = vpack.c.b16 %v557, %v553
    %v910 = vpack.c.b16 %v558, %v554
    %v911 = vpack.c.b16 %v559, %v555
    %v912 = vpack.c.b16 %v560, %v556
    %v913 = vpack.c.b16 %v565, %v561
    %v914 = vpack.c.b16 %v566, %v562
    %v915 = vpack.c.b16 %v567, %v563
    %v916 = vpack.c.b16 %v568, %v564
    %v917 = vpack.c.b16 %v573, %v569
    %v918 = vpack.c.b16 %v574, %v570
    %v919 = vpack.c.b16 %v575, %v571
    %v920 = vpack.c.b16 %v576, %v572
    %v921 = vpack.c.b16 %v581, %v577
    %v922 = vpack.c.b16 %v582, %v578
    %v923 = vpack.c.b16 %v583, %v579
    %v924 = vpack.c.b16 %v584, %v580
    %v925 = vpack.c.b16 %v589, %v585
    %v926 = vpack.c.b16 %v590, %v586
    %v927 = vpack.c.b16 %v591, %v587
    %v928 = vpack.c.b16 %v592, %v588
    %v929 = vpack.c.b16 %v597, %v593
    %v930 = vpack.c.b16 %v598, %v594
    %v931 = vpack.c.b16 %v599, %v595
    %v932 = vpack.c.b16 %v600, %v596
    %v933 = vpack.c.b16 %v605, %v601
    %v934 = vpack.c.b16 %v606, %v602
    %v935 = vpack.c.b16 %v607, %v603
    %v936 = vpack.c.b16 %v608, %v604
    %v937 = vpack.c.b16 %v613, %v609
    %v938 = vpack.c.b16 %v614, %v610
    %v939 = vpack.c.b16 %v615, %v611
    %v940 = vpack.c.b16 %v616, %v612
    %v941 = vpack.c.b16 %v621, %v617
    %v942 = vpack.c.b16 %v622, %v618
    %v943 = vpack.c.b16 %v623, %v619
    %v944 = vpack.c.b16 %v624, %v620
    %v945 = vpack.c.b16 %v629, %v625
    %v946 = vpack.c.b16 %v630, %v626
    %v947 = vpack.c.b16 %v631, %v627
    %v948 = vpack.c.b16 %v632, %v628
    %v949 = vpack.c.b16 %v637, %v633
    %v950 = vpack.c.b16 %v638, %v634
    %v951 = vpack.c.b16 %v639, %v635
    %v952 = vpack.c.b16 %v640, %v636
    %v953 = vpack.c.b16 %v645, %v641
    %v954 = vpack.c.b16 %v646, %v642
    %v955 = vpack.c.b16 %v647, %v643
    %v956 = vpack.c.b16 %v648, %v644
    %v957 = vpack.c.b16 %v653, %v649
    %v958 = vpack.c.b16 %v654, %v650
    %v959 = vpack.c.b16 %v655, %v651
    %v960 = vpack.c.b16 %v656, %v652
    %v961 = vpack.c.b16 %v661, %v657
    %v962 = vpack.c.b16 %v662, %v658
    %v963 = vpack.c.b16 %v663, %v659
    %v964 = vpack.c.b16 %v664, %v660
    %v965 = vpack.c.b16 %v669, %v665
    %v966 = vpack.c.b16 %v670, %v666
    %v967 = vpack.c.b16 %v671, %v667
    %v968 = vpack.c.b16 %v672, %v668
    %v969 = vpack.c.b16 %v677, %v673
    %v970 = vpack.c.b16 %v678, %v674
    %v971 = vpack.c.b16 %v679, %v675
    %v972 = vpack.c.b16 %v680, %v676
    %v973 = vpack.c.b16 %v685, %v681
    %v974 = vpack.c.b16 %v686, %v682
    %v975 = vpack.c.b16 %v687, %v683
    %v976 = vpack.c.b16 %v688, %v684
    %v977 = vpack.c.b16 %v693, %v689
    %v978 = vpack.c.b16 %v694, %v690
    %v979 = vpack.c.b16 %v695, %v691
    %v980 = vpack.c.b16 %v696, %v692
    %v981 = vpack.c.b16 %v701, %v697
    %v982 = vpack.c.b16 %v702, %v698
    %v983 = vpack.c.b16 %v703, %v699
    %v984 = vpack.c.b16 %v704, %v700
    %v985 = vpack.c.b16 %v709, %v705
    %v986 = vpack.c.b16 %v710, %v706
    %v987 = vpack.c.b16 %v711, %v707
    %v988 = vpack.c.b16 %v712, %v708
    %v989 = vpack.c.b16 %v717, %v713
    %v990 = vpack.c.b16 %v718, %v714
    %v991 = vpack.c.b16 %v719, %v715
    %v992 = vpack.c.b16 %v720, %v716
    %v993 = vpack.c.b16 %v725, %v721
    %v994 = vpack.c.b16 %v726, %v722
    %v995 = vpack.c.b16 %v727, %v723
    %v996 = vpack.c.b16 %v728, %v724
    %v997 = vpack.c.b16 %v733, %v729
    %v998 = vpack.c.b16 %v734, %v730
    %v999 = vpack.c.b16 %v735, %v731
    %v1000 = vpack.c.b16 %v736, %v732
    %v1001 = vpack.c.b16 %v741, %v737
    %v1002 = vpack.c.b16 %v742, %v738
    %v1003 = vpack.c.b16 %v743, %v739
    %v1004 = vpack.c.b16 %v744, %v740
    %v1005 = vpack.c.b16 %v749, %v745
    %v1006 = vpack.c.b16 %v750, %v746
    %v1007 = vpack.c.b16 %v751, %v747
    %v1008 = vpack.c.b16 %v752, %v748
    %v1009 = vpack.c.b16 %v757, %v753
    %v1010 = vpack.c.b16 %v758, %v754
    %v1011 = vpack.c.b16 %v759, %v755
    %v1012 = vpack.c.b16 %v760, %v756
    %v1013 = vpack.c.b16 %v765, %v761
    %v1014 = vpack.c.b16 %v766, %v762
    %v1015 = vpack.c.b16 %v767, %v763
    %v1016 = vpack.c.b16 %v768, %v764
    %v1017 = vpack.c.b16 %v773, %v769
    %v1018 = vpack.c.b16 %v774, %v770
    %v1019 = vpack.c.b16 %v775, %v771
    %v1020 = vpack.c.b16 %v776, %v772
    %v1021 = vpack.c.b16 %v781, %v777
    %v1022 = vpack.c.b16 %v782, %v778
    %v1023 = vpack.c.b16 %v783, %v779
    %v1024 = vpack.c.b16 %v784, %v780
    %v1025 = vpack.c.b16 %v789, %v785
    %v1026 = vpack.c.b16 %v790, %v786
    %v1027 = vpack.c.b16 %v791, %v787
    %v1028 = vpack.c.b16 %v792, %v788
    %v1029 = vpack.c.b16 %v797, %v793
    %v1030 = vpack.c.b16 %v798, %v794
    %v1031 = vpack.c.b16 %v799, %v795
    %v1032 = vpack.c.b16 %v800, %v796
    %v1033 = vpack.c.b16 %v805, %v801
    %v1034 = vpack.c.b16 %v806, %v802
    %v1035 = vpack.c.b16 %v807, %v803
    %v1036 = vpack.c.b16 %v808, %v804
    %v1037 = vpack.c.b16 %v813, %v809
    %v1038 = vpack.c.b16 %v814, %v810
    %v1039 = vpack.c.b16 %v815, %v811
    %v1040 = vpack.c.b16 %v816, %v812
    %v1041 = vpack.c.b16 %v821, %v817
    %v1042 = vpack.c.b16 %v822, %v818
    %v1043 = vpack.c.b16 %v823, %v819
    %v1044 = vpack.c.b16 %v824, %v820
    %v1045 = vpack.c.b16 %v829, %v825
    %v1046 = vpack.c.b16 %v830, %v826
    %v1047 = vpack.c.b16 %v831, %v827
    %v1048 = vpack.c.b16 %v832, %v828
    %v1049 = vpack.c.b16 %v837, %v833
    %v1050 = vpack.c.b16 %v838, %v834
    %v1051 = vpack.c.b16 %v839, %v835
    %v1052 = vpack.c.b16 %v840, %v836
    %v1053 = vpack.c.b16 %v845, %v841
    %v1054 = vpack.c.b16 %v846, %v842
    %v1055 = vpack.c.b16 %v847, %v843
    %v1056 = vpack.c.b16 %v848, %v844
    %v1057 = vpack.c.b16 %v853, %v849
    %v1058 = vpack.c.b16 %v854, %v850
    %v1059 = vpack.c.b16 %v855, %v851
    %v1060 = vpack.c.b16 %v856, %v852
    %v1061 = vpack.c.b16 %v861, %v857
    %v1062 = vpack.c.b16 %v862, %v858
    %v1063 = vpack.c.b16 %v863, %v859
    %v1064 = vpack.c.b16 %v864, %v860
    %v1065 = vpack.c.b16 %v869, %v865
    %v1066 = vpack.c.b16 %v870, %v866
    %v1067 = vpack.c.b16 %v871, %v867
    %v1068 = vpack.c.b16 %v872, %v868
    %vm1265 = vcmask 130048
    %v1267 = vsel %vm1265, %v278, 0
    %1269 = vmatprep.subr.bf16.mxu0 %v874
    %1270 = vmatpush1.bf16.msra.mxu0 %v873
    %1271 = vmatprep.subr.bf16.mxu0 %v878
    %1272 = vmatpush1.bf16.msra.mxu0 %v877
    %1273 = vmatprep.subr.bf16.mxu0 %v882
    %1274 = vmatpush1.bf16.msra.mxu0 %v881
    %1275 = vmatprep.subr.bf16.mxu0 %v886
    %1276 = vmatpush1.bf16.msra.mxu0 %v885
    %1277 = vmatprep.subr.bf16.mxu0 %v890
    %1278 = vmatpush1.bf16.msra.mxu0 %v889
    %1279 = vmatprep.subr.bf16.mxu0 %v894
    %1280 = vmatpush1.bf16.msra.mxu0 %v893
    %1281 = vmatprep.subr.bf16.mxu0 %v898
    %1282 = vmatpush1.bf16.msra.mxu0 %v897
    %1283 = vmatprep.subr.bf16.mxu0 %v902
    %1284 = vmatpush1.bf16.msra.mxu0 %v901
    %1285 = vmatprep.subr.bf16.mxu0 %v906
    %1286 = vmatpush1.bf16.msra.mxu0 %v905
    %1287 = vmatprep.subr.bf16.mxu0 %v910
    %1288 = vmatpush1.bf16.msra.mxu0 %v909
    %1289 = vmatprep.subr.bf16.mxu0 %v914
    %1290 = vmatpush1.bf16.msra.mxu0 %v913
    %1291 = vmatprep.subr.bf16.mxu0 %v918
    %1292 = vmatpush1.bf16.msra.mxu0 %v917
    %1293 = vmatprep.subr.bf16.mxu0 %v922
    %1294 = vmatpush1.bf16.msra.mxu0 %v921
    %1295 = vmatprep.subr.bf16.mxu0 %v926
    %1296 = vmatpush1.bf16.msra.mxu0 %v925
    %1297 = vmatprep.subr.bf16.mxu0 %v930
    %1298 = vmatpush1.bf16.msra.mxu0 %v929
    %1299 = vmatprep.subr.bf16.mxu0 %v934
    %1300 = vmatpush1.bf16.msra.mxu0 %v933
    %1301 = vmatprep.mubr.bf16.mxu0 %v273
    %1302 = vmatmul.mubr.bf16.gmra.mrb[0].mxu0 %v272
    %v1303 = vpop.f32.mrb[0].mxu0
    %v1304 = vadd.f32 %v244, %v1303
    %v1305 = vpop.f32.mrb[0].mxu0
    %v1306 = vadd.f32 %v248, %v1305
    %v1307 = vpop.f32.mrb[0].mxu0
    %v1308 = vpop.f32.mrb[0].mxu0
    %1309 = vdwg.mxu0
    %1310 = vmatprep.subr.bf16.mxu0 %v938
    %1311 = vmatpush1.bf16.msra.mxu0 %v937
    %1312 = vmatprep.subr.bf16.mxu0 %v942
    %1313 = vmatpush1.bf16.msra.mxu0 %v941
    %1314 = vmatprep.subr.bf16.mxu0 %v946
    %1315 = vmatpush1.bf16.msra.mxu0 %v945
    %1316 = vmatprep.subr.bf16.mxu0 %v950
    %1317 = vmatpush1.bf16.msra.mxu0 %v949
    %1318 = vmatprep.subr.bf16.mxu0 %v954
    %1319 = vmatpush1.bf16.msra.mxu0 %v953
    %1320 = vmatprep.subr.bf16.mxu0 %v958
    %1321 = vmatpush1.bf16.msra.mxu0 %v957
    %1322 = vmatprep.subr.bf16.mxu0 %v962
    %1323 = vmatpush1.bf16.msra.mxu0 %v961
    %1324 = vmatprep.subr.bf16.mxu0 %v966
    %1325 = vmatpush1.bf16.msra.mxu0 %v965
    %1326 = vmatprep.subr.bf16.mxu0 %v970
    %1327 = vmatpush1.bf16.msra.mxu0 %v969
    %1328 = vmatprep.subr.bf16.mxu0 %v974
    %1329 = vmatpush1.bf16.msra.mxu0 %v973
    %1330 = vmatprep.subr.bf16.mxu0 %v978
    %1331 = vmatpush1.bf16.msra.mxu0 %v977
    %1332 = vmatprep.subr.bf16.mxu0 %v982
    %1333 = vmatpush1.bf16.msra.mxu0 %v981
    %1334 = vmatprep.subr.bf16.mxu0 %v986
    %1335 = vmatpush1.bf16.msra.mxu0 %v985
    %1336 = vmatprep.subr.bf16.mxu0 %v990
    %1337 = vmatpush1.bf16.msra.mxu0 %v989
    %1338 = vmatprep.subr.bf16.mxu0 %v994
    %1339 = vmatpush1.bf16.msra.mxu0 %v993
    %1340 = vmatprep.subr.bf16.mxu0 %v998
    %1341 = vmatpush1.bf16.msra.mxu0 %v997
    %1342 = vmatprep.mubr.bf16.mxu0 %v275
    %1343 = vmatmul.mubr.bf16.gmra.mrb[0].mxu0 %v274
    %v1344 = vpop.f32.mrb[0].mxu0
    %v1345 = vadd.f32 %v1304, %v1344
    %v1346 = vpop.f32.mrb[0].mxu0
    %v1347 = vadd.f32 %v1306, %v1346
    %v1348 = vpop.f32.mrb[0].mxu0
    %v1349 = vpop.f32.mrb[0].mxu0
    %1350 = vdwg.mxu0
    %1351 = vmatprep.subr.bf16.mxu0 %v1002
    %1352 = vmatpush1.bf16.msra.mxu0 %v1001
    %1353 = vmatprep.subr.bf16.mxu0 %v1006
    %1354 = vmatpush1.bf16.msra.mxu0 %v1005
    %1355 = vmatprep.subr.bf16.mxu0 %v1010
    %1356 = vmatpush1.bf16.msra.mxu0 %v1009
    %1357 = vmatprep.subr.bf16.mxu0 %v1014
    %1358 = vmatpush1.bf16.msra.mxu0 %v1013
    %1359 = vmatprep.subr.bf16.mxu0 %v1018
    %1360 = vmatpush1.bf16.msra.mxu0 %v1017
    %1361 = vmatprep.subr.bf16.mxu0 %v1022
    %1362 = vmatpush1.bf16.msra.mxu0 %v1021
    %1363 = vmatprep.subr.bf16.mxu0 %v1026
    %1364 = vmatpush1.bf16.msra.mxu0 %v1025
    %1365 = vmatprep.subr.bf16.mxu0 %v1030
    %1366 = vmatpush1.bf16.msra.mxu0 %v1029
    %1367 = vmatprep.subr.bf16.mxu0 %v1034
    %1368 = vmatpush1.bf16.msra.mxu0 %v1033
    %1369 = vmatprep.subr.bf16.mxu0 %v1038
    %1370 = vmatpush1.bf16.msra.mxu0 %v1037
    %1371 = vmatprep.subr.bf16.mxu0 %v1042
    %1372 = vmatpush1.bf16.msra.mxu0 %v1041
    %1373 = vmatprep.subr.bf16.mxu0 %v1046
    %1374 = vmatpush1.bf16.msra.mxu0 %v1045
    %1375 = vmatprep.subr.bf16.mxu0 %v1050
    %1376 = vmatpush1.bf16.msra.mxu0 %v1049
    %1377 = vmatprep.subr.bf16.mxu0 %v1054
    %1378 = vmatpush1.bf16.msra.mxu0 %v1053
    %1379 = vmatprep.subr.bf16.mxu0 %v1058
    %1380 = vmatpush1.bf16.msra.mxu0 %v1057
    %1381 = vmatprep.subr.bf16.mxu0 %v1062
    %1382 = vmatpush1.bf16.msra.mxu0 %v1061
    %1383 = vmatprep.mubr.bf16.mxu0 %v277
    %1384 = vmatmul.mubr.bf16.gmra.mrb[0].mxu0 %v276
    %v1385 = vpop.f32.mrb[0].mxu0
    %v1386 = vadd.f32 %v1345, %v1385
    %v1387 = vpop.f32.mrb[0].mxu0
    %v1388 = vadd.f32 %v1347, %v1387
    %v1389 = vpop.f32.mrb[0].mxu0
    %v1390 = vpop.f32.mrb[0].mxu0
    %1391 = vdwg.mxu0
    %1392 = vmatprep.subr.bf16.mxu0 %v1066
    %1393 = vmatpush1.bf16.msra.mxu0 %v1065
    %1394 = vmatprep.subr.bf16.mxu0 0
    %1395 = vmatpush1.bf16.msra.mxu0 0
    %1396 = vmatprep.subr.bf16.mxu0 0
    %1397 = vmatpush1.bf16.msra.mxu0 0
    %1398 = vmatprep.subr.bf16.mxu0 0
    %1399 = vmatpush1.bf16.msra.mxu0 0
    %1400 = vmatprep.subr.bf16.mxu0 0
    %1401 = vmatpush1.bf16.msra.mxu0 0
    %1402 = vmatprep.subr.bf16.mxu0 0
    %1403 = vmatpush1.bf16.msra.mxu0 0
    %1404 = vmatprep.subr.bf16.mxu0 0
    %1405 = vmatpush1.bf16.msra.mxu0 0
    %1406 = vmatprep.subr.bf16.mxu0 0
    %1407 = vmatpush1.bf16.msra.mxu0 0
    %1408 = vmatprep.subr.bf16.mxu0 0
    %1409 = vmatpush1.bf16.msra.mxu0 0
    %1410 = vmatprep.subr.bf16.mxu0 0
    %1411 = vmatpush1.bf16.msra.mxu0 0
    %1412 = vmatprep.subr.bf16.mxu0 0
    %1413 = vmatpush1.bf16.msra.mxu0 0
    %1414 = vmatprep.subr.bf16.mxu0 0
    %1415 = vmatpush1.bf16.msra.mxu0 0
    %1416 = vmatprep.subr.bf16.mxu0 0
    %1417 = vmatpush1.bf16.msra.mxu0 0
    %1418 = vmatprep.subr.bf16.mxu0 0
    %1419 = vmatpush1.bf16.msra.mxu0 0
    %1420 = vmatprep.subr.bf16.mxu0 0
    %1421 = vmatpush1.bf16.msra.mxu0 0
    %1422 = vmatprep.subr.bf16.mxu0 0
    %1423 = vmatpush1.bf16.msra.mxu0 0
    %1424 = vmatprep.mubr.bf16.mxu0 0
    %1425 = vmatmul.mubr.bf16.gmra.mrb[0].mxu0 %v1267
    %v1426 = vpop.f32.mrb[0].mxu0
    %v1427 = vadd.f32 %v1386, %v1426
    %v1428 = vpop.f32.mrb[0].mxu0
    %v1429 = vadd.f32 %v1388, %v1428
    %v1430 = vpop.f32.mrb[0].mxu0
    %v1431 = vpop.f32.mrb[0].mxu0
    %1432 = vdwg.mxu0
    %1433 = vmatprep.subr.bf16.mxu0 %v876
    %1434 = vmatpush1.bf16.msra.mxu0 %v875
    %1435 = vmatprep.subr.bf16.mxu0 %v880
    %1436 = vmatpush1.bf16.msra.mxu0 %v879
    %1437 = vmatprep.subr.bf16.mxu0 %v884
    %1438 = vmatpush1.bf16.msra.mxu0 %v883
    %1439 = vmatprep.subr.bf16.mxu0 %v888
    %1440 = vmatpush1.bf16.msra.mxu0 %v887
    %1441 = vmatprep.subr.bf16.mxu0 %v892
    %1442 = vmatpush1.bf16.msra.mxu0 %v891
    %1443 = vmatprep.subr.bf16.mxu0 %v896
    %1444 = vmatpush1.bf16.msra.mxu0 %v895
    %1445 = vmatprep.subr.bf16.mxu0 %v900
    %1446 = vmatpush1.bf16.msra.mxu0 %v899
    %1447 = vmatprep.subr.bf16.mxu0 %v904
    %1448 = vmatpush1.bf16.msra.mxu0 %v903
    %1449 = vmatprep.subr.bf16.mxu0 %v908
    %1450 = vmatpush1.bf16.msra.mxu0 %v907
    %1451 = vmatprep.subr.bf16.mxu0 %v912
    %1452 = vmatpush1.bf16.msra.mxu0 %v911
    %1453 = vmatprep.subr.bf16.mxu0 %v916
    %1454 = vmatpush1.bf16.msra.mxu0 %v915
    %1455 = vmatprep.subr.bf16.mxu0 %v920
    %1456 = vmatpush1.bf16.msra.mxu0 %v919
    %1457 = vmatprep.subr.bf16.mxu0 %v924
    %1458 = vmatpush1.bf16.msra.mxu0 %v923
    %1459 = vmatprep.subr.bf16.mxu0 %v928
    %1460 = vmatpush1.bf16.msra.mxu0 %v927
    %1461 = vmatprep.subr.bf16.mxu0 %v932
    %1462 = vmatpush1.bf16.msra.mxu0 %v931
    %1463 = vmatprep.subr.bf16.mxu0 %v936
    %1464 = vmatpush1.bf16.msra.mxu0 %v935
    %1465 = vmatprep.mubr.bf16.mxu0 %v273
    %1466 = vmatmul.mubr.bf16.gmra.mrb[0].mxu0 %v272
    %v1467 = vpop.f32.mrb[0].mxu0
    %v1468 = vadd.f32 %v252, %v1467
    %v1469 = vpop.f32.mrb[0].mxu0
    %v1470 = vadd.f32 %v256, %v1469
    %v1471 = vpop.f32.mrb[0].mxu0
    %v1472 = vpop.f32.mrb[0].mxu0
    %1473 = vdwg.mxu0
    %1474 = vmatprep.subr.bf16.mxu0 %v940
    %1475 = vmatpush1.bf16.msra.mxu0 %v939
    %1476 = vmatprep.subr.bf16.mxu0 %v944
    %1477 = vmatpush1.bf16.msra.mxu0 %v943
    %1478 = vmatprep.subr.bf16.mxu0 %v948
    %1479 = vmatpush1.bf16.msra.mxu0 %v947
    %1480 = vmatprep.subr.bf16.mxu0 %v952
    %1481 = vmatpush1.bf16.msra.mxu0 %v951
    %1482 = vmatprep.subr.bf16.mxu0 %v956
    %1483 = vmatpush1.bf16.msra.mxu0 %v955
    %1484 = vmatprep.subr.bf16.mxu0 %v960
    %1485 = vmatpush1.bf16.msra.mxu0 %v959
    %1486 = vmatprep.subr.bf16.mxu0 %v964
    %1487 = vmatpush1.bf16.msra.mxu0 %v963
    %1488 = vmatprep.subr.bf16.mxu0 %v968
    %1489 = vmatpush1.bf16.msra.mxu0 %v967
    %1490 = vmatprep.subr.bf16.mxu0 %v972
    %1491 = vmatpush1.bf16.msra.mxu0 %v971
    %1492 = vmatprep.subr.bf16.mxu0 %v976
    %1493 = vmatpush1.bf16.msra.mxu0 %v975
    %1494 = vmatprep.subr.bf16.mxu0 %v980
    %1495 = vmatpush1.bf16.msra.mxu0 %v979
    %1496 = vmatprep.subr.bf16.mxu0 %v984
    %1497 = vmatpush1.bf16.msra.mxu0 %v983
    %1498 = vmatprep.subr.bf16.mxu0 %v988
    %1499 = vmatpush1.bf16.msra.mxu0 %v987
    %1500 = vmatprep.subr.bf16.mxu0 %v992
    %1501 = vmatpush1.bf16.msra.mxu0 %v991
    %1502 = vmatprep.subr.bf16.mxu0 %v996
    %1503 = vmatpush1.bf16.msra.mxu0 %v995
    %1504 = vmatprep.subr.bf16.mxu0 %v1000
    %1505 = vmatpush1.bf16.msra.mxu0 %v999
    %1506 = vmatprep.mubr.bf16.mxu0 %v275
    %1507 = vmatmul.mubr.bf16.gmra.mrb[0].mxu0 %v274
    %v1508 = vpop.f32.mrb[0].mxu0
    %v1509 = vadd.f32 %v1468, %v1508
    %v1510 = vpop.f32.mrb[0].mxu0
    %v1511 = vadd.f32 %v1470, %v1510
    %v1512 = vpop.f32.mrb[0].mxu0
    %v1513 = vpop.f32.mrb[0].mxu0
    %1514 = vdwg.mxu0
    %1515 = vmatprep.subr.bf16.mxu0 %v1004
    %1516 = vmatpush1.bf16.msra.mxu0 %v1003
    %1517 = vmatprep.subr.bf16.mxu0 %v1008
    %1518 = vmatpush1.bf16.msra.mxu0 %v1007
    %1519 = vmatprep.subr.bf16.mxu0 %v1012
    %1520 = vmatpush1.bf16.msra.mxu0 %v1011
    %1521 = vmatprep.subr.bf16.mxu0 %v1016
    %1522 = vmatpush1.bf16.msra.mxu0 %v1015
    %1523 = vmatprep.subr.bf16.mxu0 %v1020
    %1524 = vmatpush1.bf16.msra.mxu0 %v1019
    %1525 = vmatprep.subr.bf16.mxu0 %v1024
    %1526 = vmatpush1.bf16.msra.mxu0 %v1023
    %1527 = vmatprep.subr.bf16.mxu0 %v1028
    %1528 = vmatpush1.bf16.msra.mxu0 %v1027
    %1529 = vmatprep.subr.bf16.mxu0 %v1032
    %1530 = vmatpush1.bf16.msra.mxu0 %v1031
    %1531 = vmatprep.subr.bf16.mxu0 %v1036
    %1532 = vmatpush1.bf16.msra.mxu0 %v1035
    %1533 = vmatprep.subr.bf16.mxu0 %v1040
    %1534 = vmatpush1.bf16.msra.mxu0 %v1039
    %1535 = vmatprep.subr.bf16.mxu0 %v1044
    %1536 = vmatpush1.bf16.msra.mxu0 %v1043
    %1537 = vmatprep.subr.bf16.mxu0 %v1048
    %1538 = vmatpush1.bf16.msra.mxu0 %v1047
    %1539 = vmatprep.subr.bf16.mxu0 %v1052
    %1540 = vmatpush1.bf16.msra.mxu0 %v1051
    %1541 = vmatprep.subr.bf16.mxu0 %v1056
    %1542 = vmatpush1.bf16.msra.mxu0 %v1055
    %1543 = vmatprep.subr.bf16.mxu0 %v1060
    %1544 = vmatpush1.bf16.msra.mxu0 %v1059
    %1545 = vmatprep.subr.bf16.mxu0 %v1064
    %1546 = vmatpush1.bf16.msra.mxu0 %v1063
    %1547 = vmatprep.mubr.bf16.mxu0 %v277
    %1548 = vmatmul.mubr.bf16.gmra.mrb[0].mxu0 %v276
    %v1549 = vpop.f32.mrb[0].mxu0
    %v1550 = vadd.f32 %v1509, %v1549
    %v1551 = vpop.f32.mrb[0].mxu0
    %v1552 = vadd.f32 %v1511, %v1551
    %v1553 = vpop.f32.mrb[0].mxu0
    %v1554 = vpop.f32.mrb[0].mxu0
    %1555 = vdwg.mxu0
    %1556 = vmatprep.subr.bf16.mxu0 %v1068
    %1557 = vmatpush1.bf16.msra.mxu0 %v1067
    %1558 = vmatprep.subr.bf16.mxu0 0
    %1559 = vmatpush1.bf16.msra.mxu0 0
    %1560 = vmatprep.subr.bf16.mxu0 0
    %1561 = vmatpush1.bf16.msra.mxu0 0
    %1562 = vmatprep.subr.bf16.mxu0 0
    %1563 = vmatpush1.bf16.msra.mxu0 0
    %1564 = vmatprep.subr.bf16.mxu0 0
    %1565 = vmatpush1.bf16.msra.mxu0 0
    %1566 = vmatprep.subr.bf16.mxu0 0
    %1567 = vmatpush1.bf16.msra.mxu0 0
    %1568 = vmatprep.subr.bf16.mxu0 0
    %1569 = vmatpush1.bf16.msra.mxu0 0
    %1570 = vmatprep.subr.bf16.mxu0 0
    %1571 = vmatpush1.bf16.msra.mxu0 0
    %1572 = vmatprep.subr.bf16.mxu0 0
    %1573 = vmatpush1.bf16.msra.mxu0 0
    %1574 = vmatprep.subr.bf16.mxu0 0
    %1575 = vmatpush1.bf16.msra.mxu0 0
    %1576 = vmatprep.subr.bf16.mxu0 0
    %1577 = vmatpush1.bf16.msra.mxu0 0
    %1578 = vmatprep.subr.bf16.mxu0 0
    %1579 = vmatpush1.bf16.msra.mxu0 0
    %1580 = vmatprep.subr.bf16.mxu0 0
    %1581 = vmatpush1.bf16.msra.mxu0 0
    %1582 = vmatprep.subr.bf16.mxu0 0
    %1583 = vmatpush1.bf16.msra.mxu0 0
    %1584 = vmatprep.subr.bf16.mxu0 0
    %1585 = vmatpush1.bf16.msra.mxu0 0
    %1586 = vmatprep.subr.bf16.mxu0 0
    %1587 = vmatpush1.bf16.msra.mxu0 0
    %1588 = vmatprep.mubr.bf16.mxu0 0
    %1589 = vmatmul.mubr.bf16.gmra.mrb[0].mxu0 %v1267
    %v1590 = vpop.f32.mrb[0].mxu0
    %v1591 = vadd.f32 %v1550, %v1590
    %v1592 = vpop.f32.mrb[0].mxu0
    %v1593 = vadd.f32 %v1552, %v1592
    %v1594 = vpop.f32.mrb[0].mxu0
    %v1595 = vpop.f32.mrb[0].mxu0
    %1596 = vdwg.mxu0
    %v1597 = vmax.f32 %v1427, 0.0
    %v1598 = vmax.f32 %v1429, 0.0
    %v1599 = vmax.f32 %v1591, 0.0
    %v1600 = vmax.f32 %v1593, 0.0
    %v1601 = vpack.c.bf16 %v1597, %v1597
    %v1602 = vpack.c.bf16 %v1598, %v1598
    %v1603 = vpack.c.bf16 %v1599, %v1599
    %v1604 = vpack.c.bf16 %v1600, %v1600
    %v1605 = vld [vmem:[%s4] sm:$0xff]
    %v1606 = vld [vmem:[%s4 + $0x8] sm:$0xff]
    %v1607 = vld [vmem:[%s4 + $0x10] sm:$0xff]
    %v1608 = vld [vmem:[%s4 + $0x18] sm:$0xff]
    %v1609 = vld [vmem:[%s4 + $0x20] sm:$0xff]
    %v1610 = vld [vmem:[%s4 + $0x28] sm:$0xff]
    %v1611 = vld [vmem:[%s4 + $0x30] sm:$0xff]
    %v1612 = vld [vmem:[%s4 + $0x38] sm:$0xff]
    %v1613 = vld [vmem:[%s4 + $0x40] sm:$0xff]
    %v1614 = vld [vmem:[%s4 + $0x48] sm:$0xff]
    %v1615 = vld [vmem:[%s4 + $0x50] sm:$0xff]
    %v1616 = vld [vmem:[%s4 + $0x58] sm:$0xff]
    %v1617 = vld [vmem:[%s4 + $0x60] sm:$0xff]
    %v1618 = vld [vmem:[%s4 + $0x68] sm:$0xff]
    %v1619 = vld [vmem:[%s4 + $0x70] sm:$0xff]
    %v1620 = vld [vmem:[%s4 + $0x78] sm:$0xff]
    %v1621 = vld [vmem:[%s4 + $0x80] sm:$0xff]
    %v1622 = vld [vmem:[%s4 + $0x88] sm:$0xff]
    %v1623 = vld [vmem:[%s4 + $0x90] sm:$0xff]
    %v1624 = vld [vmem:[%s4 + $0x98] sm:$0xff]
    %v1625 = vld [vmem:[%s4 + $0xa0] sm:$0xff]
    %v1626 = vld [vmem:[%s4 + $0xa8] sm:$0xff]
    %v1627 = vld [vmem:[%s4 + $0xb0] sm:$0xff]
    %v1628 = vld [vmem:[%s4 + $0xb8] sm:$0xff]
    %v1629 = vld [vmem:[%s4 + $0xc0] sm:$0xff]
    %v1630 = vld [vmem:[%s4 + $0xc8] sm:$0xff]
    %v1631 = vld [vmem:[%s4 + $0xd0] sm:$0xff]
    %v1632 = vld [vmem:[%s4 + $0xd8] sm:$0xff]
    %v1633 = vld [vmem:[%s4 + $0xe0] sm:$0xff]
    %v1634 = vld [vmem:[%s4 + $0xe8] sm:$0xff]
    %v1635 = vld [vmem:[%s4 + $0xf0] sm:$0xff]
    %v1636 = vld [vmem:[%s4 + $0xf8] sm:$0xff]
    %v1637 = vld [vmem:[%s4 + $0x100] sm:$0xff]
    %v1638 = vld [vmem:[%s4 + $0x108] sm:$0xff]
    %v1639 = vld [vmem:[%s4 + $0x110] sm:$0xff]
    %v1640 = vld [vmem:[%s4 + $0x118] sm:$0xff]
    %v1641 = vld [vmem:[%s4 + $0x120] sm:$0xff]
    %v1642 = vld [vmem:[%s4 + $0x128] sm:$0xff]
    %v1643 = vld [vmem:[%s4 + $0x130] sm:$0xff]
    %v1644 = vld [vmem:[%s4 + $0x138] sm:$0xff]
    %v1645 = vld [vmem:[%s4 + $0x140] sm:$0xff]
    %v1646 = vld [vmem:[%s4 + $0x148] sm:$0xff]
    %v1647 = vld [vmem:[%s4 + $0x150] sm:$0xff]
    %v1648 = vld [vmem:[%s4 + $0x158] sm:$0xff]
    %v1649 = vld [vmem:[%s4 + $0x160] sm:$0xff]
    %v1650 = vld [vmem:[%s4 + $0x168] sm:$0xff]
    %v1651 = vld [vmem:[%s4 + $0x170] sm:$0xff]
    %v1652 = vld [vmem:[%s4 + $0x178] sm:$0xff]
    %v1653 = vld [vmem:[%s4 + $0x180] sm:$0xff]
    %v1654 = vld [vmem:[%s4 + $0x188] sm:$0xff]
    %v1655 = vld [vmem:[%s4 + $0x190] sm:$0xff]
    %v1656 = vld [vmem:[%s4 + $0x198] sm:$0xff]
    %v1657 = vld [vmem:[%s4 + $0x1a0] sm:$0xff]
    %v1658 = vld [vmem:[%s4 + $0x1a8] sm:$0xff]
    %v1659 = vld [vmem:[%s4 + $0x1b0] sm:$0xff]
    %v1660 = vld [vmem:[%s4 + $0x1b8] sm:$0xff]
    %v1661 = vld [vmem:[%s4 + $0x1c0] sm:$0xff]
    %v1662 = vld [vmem:[%s4 + $0x1c8] sm:$0xff]
    %v1663 = vld [vmem:[%s4 + $0x1d0] sm:$0xff]
    %v1664 = vld [vmem:[%s4 + $0x1d8] sm:$0xff]
    %v1665 = vld [vmem:[%s4 + $0x1e0] sm:$0xff]
    %v1666 = vld [vmem:[%s4 + $0x1e8] sm:$0xff]
    %v1667 = vld [vmem:[%s4 + $0x1f0] sm:$0xff]
    %v1668 = vld [vmem:[%s4 + $0x1f8] sm:$0xff]
    %v1669 = vld [vmem:[%s5] sm:$0x3]
    %v1671 = vlaneseq
    %v1672 = vshrl.u32 %v1671, 7
    %v1673 = vsub.s32 0, %v1672
    %v1674 = vrot.slane %v1669, %v1673
    %v1675 = vlaneseq
    %v1676 = vshrl.u32 %v1675, 7
    %v1677 = vsub.s32 1, %v1676
    %v1678 = vrot.slane %v1669, %v1677
    %v1745 = vunpack.c.l.b16 %v1605
    %v1746 = vunpack.c.h.b16 %v1605
    %v1747 = vunpack.c.l.b16 %v1606
    %v1748 = vunpack.c.h.b16 %v1606
    %v1749 = vunpack.c.l.b16 %v1607
    %v1750 = vunpack.c.h.b16 %v1607
    %v1751 = vunpack.c.l.b16 %v1608
    %v1752 = vunpack.c.h.b16 %v1608
    %v1753 = vunpack.c.l.b16 %v1609
    %v1754 = vunpack.c.h.b16 %v1609
    %v1755 = vunpack.c.l.b16 %v1610
    %v1756 = vunpack.c.h.b16 %v1610
    %v1757 = vunpack.c.l.b16 %v1611
    %v1758 = vunpack.c.h.b16 %v1611
    %v1759 = vunpack.c.l.b16 %v1612
    %v1760 = vunpack.c.h.b16 %v1612
    %v1761 = vunpack.c.l.b16 %v1613
    %v1762 = vunpack.c.h.b16 %v1613
    %v1763 = vunpack.c.l.b16 %v1614
    %v1764 = vunpack.c.h.b16 %v1614
    %v1765 = vunpack.c.l.b16 %v1615
    %v1766 = vunpack.c.h.b16 %v1615
    %v1767 = vunpack.c.l.b16 %v1616
    %v1768 = vunpack.c.h.b16 %v1616
    %v1769 = vunpack.c.l.b16 %v1617
    %v1770 = vunpack.c.h.b16 %v1617
    %v1771 = vunpack.c.l.b16 %v1618
    %v1772 = vunpack.c.h.b16 %v1618
    %v1773 = vunpack.c.l.b16 %v1619
    %v1774 = vunpack.c.h.b16 %v1619
    %v1775 = vunpack.c.l.b16 %v1620
    %v1776 = vunpack.c.h.b16 %v1620
    %v1777 = vunpack.c.l.b16 %v1621
    %v1778 = vunpack.c.h.b16 %v1621
    %v1779 = vunpack.c.l.b16 %v1622
    %v1780 = vunpack.c.h.b16 %v1622
    %v1781 = vunpack.c.l.b16 %v1623
    %v1782 = vunpack.c.h.b16 %v1623
    %v1783 = vunpack.c.l.b16 %v1624
    %v1784 = vunpack.c.h.b16 %v1624
    %v1785 = vunpack.c.l.b16 %v1625
    %v1786 = vunpack.c.h.b16 %v1625
    %v1787 = vunpack.c.l.b16 %v1626
    %v1788 = vunpack.c.h.b16 %v1626
    %v1789 = vunpack.c.l.b16 %v1627
    %v1790 = vunpack.c.h.b16 %v1627
    %v1791 = vunpack.c.l.b16 %v1628
    %v1792 = vunpack.c.h.b16 %v1628
    %v1793 = vunpack.c.l.b16 %v1629
    %v1794 = vunpack.c.h.b16 %v1629
    %v1795 = vunpack.c.l.b16 %v1630
    %v1796 = vunpack.c.h.b16 %v1630
    %v1797 = vunpack.c.l.b16 %v1631
    %v1798 = vunpack.c.h.b16 %v1631
    %v1799 = vunpack.c.l.b16 %v1632
    %v1800 = vunpack.c.h.b16 %v1632
    %v1801 = vunpack.c.l.b16 %v1633
    %v1802 = vunpack.c.h.b16 %v1633
    %v1803 = vunpack.c.l.b16 %v1634
    %v1804 = vunpack.c.h.b16 %v1634
    %v1805 = vunpack.c.l.b16 %v1635
    %v1806 = vunpack.c.h.b16 %v1635
    %v1807 = vunpack.c.l.b16 %v1636
    %v1808 = vunpack.c.h.b16 %v1636
    %v1809 = vunpack.c.l.b16 %v1637
    %v1810 = vunpack.c.h.b16 %v1637
    %v1811 = vunpack.c.l.b16 %v1638
    %v1812 = vunpack.c.h.b16 %v1638
    %v1813 = vunpack.c.l.b16 %v1639
    %v1814 = vunpack.c.h.b16 %v1639
    %v1815 = vunpack.c.l.b16 %v1640
    %v1816 = vunpack.c.h.b16 %v1640
    %v1817 = vunpack.c.l.b16 %v1641
    %v1818 = vunpack.c.h.b16 %v1641
    %v1819 = vunpack.c.l.b16 %v1642
    %v1820 = vunpack.c.h.b16 %v1642
    %v1821 = vunpack.c.l.b16 %v1643
    %v1822 = vunpack.c.h.b16 %v1643
    %v1823 = vunpack.c.l.b16 %v1644
    %v1824 = vunpack.c.h.b16 %v1644
    %v1825 = vunpack.c.l.b16 %v1645
    %v1826 = vunpack.c.h.b16 %v1645
    %v1827 = vunpack.c.l.b16 %v1646
    %v1828 = vunpack.c.h.b16 %v1646
    %v1829 = vunpack.c.l.b16 %v1647
    %v1830 = vunpack.c.h.b16 %v1647
    %v1831 = vunpack.c.l.b16 %v1648
    %v1832 = vunpack.c.h.b16 %v1648
    %v1833 = vunpack.c.l.b16 %v1649
    %v1834 = vunpack.c.h.b16 %v1649
    %v1835 = vunpack.c.l.b16 %v1650
    %v1836 = vunpack.c.h.b16 %v1650
    %v1837 = vunpack.c.l.b16 %v1651
    %v1838 = vunpack.c.h.b16 %v1651
    %v1839 = vunpack.c.l.b16 %v1652
    %v1840 = vunpack.c.h.b16 %v1652
    %v1841 = vunpack.c.l.b16 %v1653
    %v1842 = vunpack.c.h.b16 %v1653
    %v1843 = vunpack.c.l.b16 %v1654
    %v1844 = vunpack.c.h.b16 %v1654
    %v1845 = vunpack.c.l.b16 %v1655
    %v1846 = vunpack.c.h.b16 %v1655
    %v1847 = vunpack.c.l.b16 %v1656
    %v1848 = vunpack.c.h.b16 %v1656
    %v1849 = vunpack.c.l.b16 %v1657
    %v1850 = vunpack.c.h.b16 %v1657
    %v1851 = vunpack.c.l.b16 %v1658
    %v1852 = vunpack.c.h.b16 %v1658
    %v1853 = vunpack.c.l.b16 %v1659
    %v1854 = vunpack.c.h.b16 %v1659
    %v1855 = vunpack.c.l.b16 %v1660
    %v1856 = vunpack.c.h.b16 %v1660
    %v1857 = vunpack.c.l.b16 %v1661
    %v1858 = vunpack.c.h.b16 %v1661
    %v1859 = vunpack.c.l.b16 %v1662
    %v1860 = vunpack.c.h.b16 %v1662
    %v1861 = vunpack.c.l.b16 %v1663
    %v1862 = vunpack.c.h.b16 %v1663
    %v1863 = vunpack.c.l.b16 %v1664
    %v1864 = vunpack.c.h.b16 %v1664
    %v1865 = vunpack.c.l.b16 %v1665
    %v1866 = vunpack.c.h.b16 %v1665
    %v1867 = vunpack.c.l.b16 %v1666
    %v1868 = vunpack.c.h.b16 %v1666
    %v1869 = vunpack.c.l.b16 %v1667
    %v1870 = vunpack.c.h.b16 %v1667
    %v1871 = vunpack.c.l.b16 %v1668
    %v1872 = vunpack.c.h.b16 %v1668
    %v1873 = vpack.c.b16 %v1747, %v1745
    %v1874 = vpack.c.b16 %v1748, %v1746
    %v1875 = vpack.c.b16 %v1751, %v1749
    %v1876 = vpack.c.b16 %v1752, %v1750
    %v1877 = vpack.c.b16 %v1755, %v1753
    %v1878 = vpack.c.b16 %v1756, %v1754
    %v1879 = vpack.c.b16 %v1759, %v1757
    %v1880 = vpack.c.b16 %v1760, %v1758
    %v1881 = vpack.c.b16 %v1763, %v1761
    %v1882 = vpack.c.b16 %v1764, %v1762
    %v1883 = vpack.c.b16 %v1767, %v1765
    %v1884 = vpack.c.b16 %v1768, %v1766
    %v1885 = vpack.c.b16 %v1771, %v1769
    %v1886 = vpack.c.b16 %v1772, %v1770
    %v1887 = vpack.c.b16 %v1775, %v1773
    %v1888 = vpack.c.b16 %v1776, %v1774
    %v1889 = vpack.c.b16 %v1779, %v1777
    %v1890 = vpack.c.b16 %v1780, %v1778
    %v1891 = vpack.c.b16 %v1783, %v1781
    %v1892 = vpack.c.b16 %v1784, %v1782
    %v1893 = vpack.c.b16 %v1787, %v1785
    %v1894 = vpack.c.b16 %v1788, %v1786
    %v1895 = vpack.c.b16 %v1791, %v1789
    %v1896 = vpack.c.b16 %v1792, %v1790
    %v1897 = vpack.c.b16 %v1795, %v1793
    %v1898 = vpack.c.b16 %v1796, %v1794
    %v1899 = vpack.c.b16 %v1799, %v1797
    %v1900 = vpack.c.b16 %v1800, %v1798
    %v1901 = vpack.c.b16 %v1803, %v1801
    %v1902 = vpack.c.b16 %v1804, %v1802
    %v1903 = vpack.c.b16 %v1807, %v1805
    %v1904 = vpack.c.b16 %v1808, %v1806
    %v1905 = vpack.c.b16 %v1811, %v1809
    %v1906 = vpack.c.b16 %v1812, %v1810
    %v1907 = vpack.c.b16 %v1815, %v1813
    %v1908 = vpack.c.b16 %v1816, %v1814
    %v1909 = vpack.c.b16 %v1819, %v1817
    %v1910 = vpack.c.b16 %v1820, %v1818
    %v1911 = vpack.c.b16 %v1823, %v1821
    %v1912 = vpack.c.b16 %v1824, %v1822
    %v1913 = vpack.c.b16 %v1827, %v1825
    %v1914 = vpack.c.b16 %v1828, %v1826
    %v1915 = vpack.c.b16 %v1831, %v1829
    %v1916 = vpack.c.b16 %v1832, %v1830
    %v1917 = vpack.c.b16 %v1835, %v1833
    %v1918 = vpack.c.b16 %v1836, %v1834
    %v1919 = vpack.c.b16 %v1839, %v1837
    %v1920 = vpack.c.b16 %v1840, %v1838
    %v1921 = vpack.c.b16 %v1843, %v1841
    %v1922 = vpack.c.b16 %v1844, %v1842
    %v1923 = vpack.c.b16 %v1847, %v1845
    %v1924 = vpack.c.b16 %v1848, %v1846
    %v1925 = vpack.c.b16 %v1851, %v1849
    %v1926 = vpack.c.b16 %v1852, %v1850
    %v1927 = vpack.c.b16 %v1855, %v1853
    %v1928 = vpack.c.b16 %v1856, %v1854
    %v1929 = vpack.c.b16 %v1859, %v1857
    %v1930 = vpack.c.b16 %v1860, %v1858
    %v1931 = vpack.c.b16 %v1863, %v1861
    %v1932 = vpack.c.b16 %v1864, %v1862
    %v1933 = vpack.c.b16 %v1867, %v1865
    %v1934 = vpack.c.b16 %v1868, %v1866
    %v1935 = vpack.c.b16 %v1871, %v1869
    %v1936 = vpack.c.b16 %v1872, %v1870
    %2001 = vmatprep.subr.bf16.mxu0 %v1874
    %2002 = vmatpush1.bf16.msra.mxu0 %v1873
    %2003 = vmatprep.subr.bf16.mxu0 %v1876
    %2004 = vmatpush1.bf16.msra.mxu0 %v1875
    %2005 = vmatprep.subr.bf16.mxu0 %v1878
    %2006 = vmatpush1.bf16.msra.mxu0 %v1877
    %2007 = vmatprep.subr.bf16.mxu0 %v1880
    %2008 = vmatpush1.bf16.msra.mxu0 %v1879
    %2009 = vmatprep.subr.bf16.mxu0 %v1882
    %2010 = vmatpush1.bf16.msra.mxu0 %v1881
    %2011 = vmatprep.subr.bf16.mxu0 %v1884
    %2012 = vmatpush1.bf16.msra.mxu0 %v1883
    %2013 = vmatprep.subr.bf16.mxu0 %v1886
    %2014 = vmatpush1.bf16.msra.mxu0 %v1885
    %2015 = vmatprep.subr.bf16.mxu0 %v1888
    %2016 = vmatpush1.bf16.msra.mxu0 %v1887
    %2017 = vmatprep.subr.bf16.mxu0 %v1890
    %2018 = vmatpush1.bf16.msra.mxu0 %v1889
    %2019 = vmatprep.subr.bf16.mxu0 %v1892
    %2020 = vmatpush1.bf16.msra.mxu0 %v1891
    %2021 = vmatprep.subr.bf16.mxu0 %v1894
    %2022 = vmatpush1.bf16.msra.mxu0 %v1893
    %2023 = vmatprep.subr.bf16.mxu0 %v1896
    %2024 = vmatpush1.bf16.msra.mxu0 %v1895
    %2025 = vmatprep.subr.bf16.mxu0 %v1898
    %2026 = vmatpush1.bf16.msra.mxu0 %v1897
    %2027 = vmatprep.subr.bf16.mxu0 %v1900
    %2028 = vmatpush1.bf16.msra.mxu0 %v1899
    %2029 = vmatprep.subr.bf16.mxu0 %v1902
    %2030 = vmatpush1.bf16.msra.mxu0 %v1901
    %2031 = vmatprep.subr.bf16.mxu0 %v1904
    %2032 = vmatpush1.bf16.msra.mxu0 %v1903
    %2033 = vmatprep.mubr.bf16.mxu0 %v1602
    %2034 = vmatmul.mubr.bf16.gmra.mrb[0].mxu0 %v1601
    %v2035 = vpop.f32.mrb[0].mxu0
    %v2036 = vadd.f32 %v1674, %v2035
    %v2037 = vpop.f32.mrb[0].mxu0
    %v2038 = vadd.f32 %v1678, %v2037
    %v2039 = vpop.f32.mrb[0].mxu0
    %v2040 = vpop.f32.mrb[0].mxu0
    %2041 = vdwg.mxu0
    %2042 = vmatprep.subr.bf16.mxu0 %v1906
    %2043 = vmatpush1.bf16.msra.mxu0 %v1905
    %2044 = vmatprep.subr.bf16.mxu0 %v1908
    %2045 = vmatpush1.bf16.msra.mxu0 %v1907
    %2046 = vmatprep.subr.bf16.mxu0 %v1910
    %2047 = vmatpush1.bf16.msra.mxu0 %v1909
    %2048 = vmatprep.subr.bf16.mxu0 %v1912
    %2049 = vmatpush1.bf16.msra.mxu0 %v1911
    %2050 = vmatprep.subr.bf16.mxu0 %v1914
    %2051 = vmatpush1.bf16.msra.mxu0 %v1913
    %2052 = vmatprep.subr.bf16.mxu0 %v1916
    %2053 = vmatpush1.bf16.msra.mxu0 %v1915
    %2054 = vmatprep.subr.bf16.mxu0 %v1918
    %2055 = vmatpush1.bf16.msra.mxu0 %v1917
    %2056 = vmatprep.subr.bf16.mxu0 %v1920
    %2057 = vmatpush1.bf16.msra.mxu0 %v1919
    %2058 = vmatprep.subr.bf16.mxu0 %v1922
    %2059 = vmatpush1.bf16.msra.mxu0 %v1921
    %2060 = vmatprep.subr.bf16.mxu0 %v1924
    %2061 = vmatpush1.bf16.msra.mxu0 %v1923
    %2062 = vmatprep.subr.bf16.mxu0 %v1926
    %2063 = vmatpush1.bf16.msra.mxu0 %v1925
    %2064 = vmatprep.subr.bf16.mxu0 %v1928
    %2065 = vmatpush1.bf16.msra.mxu0 %v1927
    %2066 = vmatprep.subr.bf16.mxu0 %v1930
    %2067 = vmatpush1.bf16.msra.mxu0 %v1929
    %2068 = vmatprep.subr.bf16.mxu0 %v1932
    %2069 = vmatpush1.bf16.msra.mxu0 %v1931
    %2070 = vmatprep.subr.bf16.mxu0 %v1934
    %2071 = vmatpush1.bf16.msra.mxu0 %v1933
    %2072 = vmatprep.subr.bf16.mxu0 %v1936
    %2073 = vmatpush1.bf16.msra.mxu0 %v1935
    %2074 = vmatprep.mubr.bf16.mxu0 %v1604
    %2075 = vmatmul.mubr.bf16.gmra.mrb[0].mxu0 %v1603
    %v2076 = vpop.f32.mrb[0].mxu0
    %v2077 = vadd.f32 %v2036, %v2076
    %v2078 = vpop.f32.mrb[0].mxu0
    %v2079 = vadd.f32 %v2038, %v2078
    %v2080 = vpop.f32.mrb[0].mxu0
    %v2081 = vpop.f32.mrb[0].mxu0
    %2082 = vdwg.mxu0
    %2083 = vst [vmem:[%s11] sm:$0xff] %v2077
    %2084 = vst [vmem:[%s11 + $0x8] sm:$0xff] %v2079
    %v2085 = vmul.f32 %v2079, 0.5
    %v2086 = vmul.f32 %v2085, 1.442695
    %v2087 = vpow.pop %v2086
    %v2088 = vld [vmem:[%s1] sm:$0xff]
    %v2089 = vmul.f32 %v2088, %v2087
    %v2090 = vadd.f32 %v2077, %v2089
    %v2091 = vpack.c.bf16 %v2090, %v2090
    %v2092 = vld [vmem:[%s6] sm:$0xff]
    %v2093 = vld [vmem:[%s6 + $0x8] sm:$0xff]
    %v2094 = vld [vmem:[%s6 + $0x10] sm:$0xff]
    %v2095 = vld [vmem:[%s6 + $0x18] sm:$0xff]
    %v2096 = vld [vmem:[%s6 + $0x20] sm:$0xff]
    %v2097 = vld [vmem:[%s6 + $0x28] sm:$0xff]
    %v2098 = vld [vmem:[%s6 + $0x30] sm:$0xff]
    %v2099 = vld [vmem:[%s6 + $0x38] sm:$0xff]
    %v2100 = vld [vmem:[%s6 + $0x40] sm:$0xff]
    %v2101 = vld [vmem:[%s6 + $0x48] sm:$0xff]
    %v2102 = vld [vmem:[%s6 + $0x50] sm:$0xff]
    %v2103 = vld [vmem:[%s6 + $0x58] sm:$0xff]
    %v2104 = vld [vmem:[%s6 + $0x60] sm:$0xff]
    %v2105 = vld [vmem:[%s6 + $0x68] sm:$0xff]
    %v2106 = vld [vmem:[%s6 + $0x70] sm:$0xff]
    %v2107 = vld [vmem:[%s6 + $0x78] sm:$0xff]
    %v2108 = vld [vmem:[%s6 + $0x80] sm:$0xff]
    %v2109 = vld [vmem:[%s6 + $0x88] sm:$0xff]
    %v2110 = vld [vmem:[%s6 + $0x90] sm:$0xff]
    %v2111 = vld [vmem:[%s6 + $0x98] sm:$0xff]
    %v2112 = vld [vmem:[%s6 + $0xa0] sm:$0xff]
    %v2113 = vld [vmem:[%s6 + $0xa8] sm:$0xff]
    %v2114 = vld [vmem:[%s6 + $0xb0] sm:$0xff]
    %v2115 = vld [vmem:[%s6 + $0xb8] sm:$0xff]
    %v2116 = vld [vmem:[%s6 + $0xc0] sm:$0xff]
    %v2117 = vld [vmem:[%s6 + $0xc8] sm:$0xff]
    %v2118 = vld [vmem:[%s6 + $0xd0] sm:$0xff]
    %v2119 = vld [vmem:[%s6 + $0xd8] sm:$0xff]
    %v2120 = vld [vmem:[%s6 + $0xe0] sm:$0xff]
    %v2121 = vld [vmem:[%s6 + $0xe8] sm:$0xff]
    %v2122 = vld [vmem:[%s6 + $0xf0] sm:$0xff]
    %v2123 = vld [vmem:[%s6 + $0xf8] sm:$0xff]
    %v2124 = vld [vmem:[%s7] sm:$0xf]
    %v2126 = vlaneseq
    %v2127 = vshrl.u32 %v2126, 7
    %v2128 = vsub.s32 0, %v2127
    %v2129 = vrot.slane %v2124, %v2128
    %v2130 = vlaneseq
    %v2131 = vshrl.u32 %v2130, 7
    %v2132 = vsub.s32 1, %v2131
    %v2133 = vrot.slane %v2124, %v2132
    %v2134 = vlaneseq
    %v2135 = vshrl.u32 %v2134, 7
    %v2136 = vsub.s32 2, %v2135
    %v2137 = vrot.slane %v2124, %v2136
    %v2138 = vlaneseq
    %v2139 = vshrl.u32 %v2138, 7
    %v2140 = vsub.s32 3, %v2139
    %v2141 = vrot.slane %v2124, %v2140
    %v2178 = vunpack.c.l.b16 %v2092
    %v2179 = vunpack.c.h.b16 %v2092
    %v2180 = vunpack.c.l.b16 %v2093
    %v2181 = vunpack.c.h.b16 %v2093
    %v2182 = vunpack.c.l.b16 %v2094
    %v2183 = vunpack.c.h.b16 %v2094
    %v2184 = vunpack.c.l.b16 %v2095
    %v2185 = vunpack.c.h.b16 %v2095
    %v2186 = vunpack.c.l.b16 %v2096
    %v2187 = vunpack.c.h.b16 %v2096
    %v2188 = vunpack.c.l.b16 %v2097
    %v2189 = vunpack.c.h.b16 %v2097
    %v2190 = vunpack.c.l.b16 %v2098
    %v2191 = vunpack.c.h.b16 %v2098
    %v2192 = vunpack.c.l.b16 %v2099
    %v2193 = vunpack.c.h.b16 %v2099
    %v2194 = vunpack.c.l.b16 %v2100
    %v2195 = vunpack.c.h.b16 %v2100
    %v2196 = vunpack.c.l.b16 %v2101
    %v2197 = vunpack.c.h.b16 %v2101
    %v2198 = vunpack.c.l.b16 %v2102
    %v2199 = vunpack.c.h.b16 %v2102
    %v2200 = vunpack.c.l.b16 %v2103
    %v2201 = vunpack.c.h.b16 %v2103
    %v2202 = vunpack.c.l.b16 %v2104
    %v2203 = vunpack.c.h.b16 %v2104
    %v2204 = vunpack.c.l.b16 %v2105
    %v2205 = vunpack.c.h.b16 %v2105
    %v2206 = vunpack.c.l.b16 %v2106
    %v2207 = vunpack.c.h.b16 %v2106
    %v2208 = vunpack.c.l.b16 %v2107
    %v2209 = vunpack.c.h.b16 %v2107
    %v2210 = vunpack.c.l.b16 %v2108
    %v2211 = vunpack.c.h.b16 %v2108
    %v2212 = vunpack.c.l.b16 %v2109
    %v2213 = vunpack.c.h.b16 %v2109
    %v2214 = vunpack.c.l.b16 %v2110
    %v2215 = vunpack.c.h.b16 %v2110
    %v2216 = vunpack.c.l.b16 %v2111
    %v2217 = vunpack.c.h.b16 %v2111
    %v2218 = vunpack.c.l.b16 %v2112
    %v2219 = vunpack.c.h.b16 %v2112
    %v2220 = vunpack.c.l.b16 %v2113
    %v2221 = vunpack.c.h.b16 %v2113
    %v2222 = vunpack.c.l.b16 %v2114
    %v2223 = vunpack.c.h.b16 %v2114
    %v2224 = vunpack.c.l.b16 %v2115
    %v2225 = vunpack.c.h.b16 %v2115
    %v2226 = vunpack.c.l.b16 %v2116
    %v2227 = vunpack.c.h.b16 %v2116
    %v2228 = vunpack.c.l.b16 %v2117
    %v2229 = vunpack.c.h.b16 %v2117
    %v2230 = vunpack.c.l.b16 %v2118
    %v2231 = vunpack.c.h.b16 %v2118
    %v2232 = vunpack.c.l.b16 %v2119
    %v2233 = vunpack.c.h.b16 %v2119
    %v2234 = vunpack.c.l.b16 %v2120
    %v2235 = vunpack.c.h.b16 %v2120
    %v2236 = vunpack.c.l.b16 %v2121
    %v2237 = vunpack.c.h.b16 %v2121
    %v2238 = vunpack.c.l.b16 %v2122
    %v2239 = vunpack.c.h.b16 %v2122
    %v2240 = vunpack.c.l.b16 %v2123
    %v2241 = vunpack.c.h.b16 %v2123
    %v2242 = vpack.c.b16 %v2182, %v2178
    %v2243 = vpack.c.b16 %v2183, %v2179
    %v2244 = vpack.c.b16 %v2184, %v2180
    %v2245 = vpack.c.b16 %v2185, %v2181
    %v2246 = vpack.c.b16 %v2190, %v2186
    %v2247 = vpack.c.b16 %v2191, %v2187
    %v2248 = vpack.c.b16 %v2192, %v2188
    %v2249 = vpack.c.b16 %v2193, %v2189
    %v2250 = vpack.c.b16 %v2198, %v2194
    %v2251 = vpack.c.b16 %v2199, %v2195
    %v2252 = vpack.c.b16 %v2200, %v2196
    %v2253 = vpack.c.b16 %v2201, %v2197
    %v2254 = vpack.c.b16 %v2206, %v2202
    %v2255 = vpack.c.b16 %v2207, %v2203
    %v2256 = vpack.c.b16 %v2208, %v2204
    %v2257 = vpack.c.b16 %v2209, %v2205
    %v2258 = vpack.c.b16 %v2214, %v2210
    %v2259 = vpack.c.b16 %v2215, %v2211
    %v2260 = vpack.c.b16 %v2216, %v2212
    %v2261 = vpack.c.b16 %v2217, %v2213
    %v2262 = vpack.c.b16 %v2222, %v2218
    %v2263 = vpack.c.b16 %v2223, %v2219
    %v2264 = vpack.c.b16 %v2224, %v2220
    %v2265 = vpack.c.b16 %v2225, %v2221
    %v2266 = vpack.c.b16 %v2230, %v2226
    %v2267 = vpack.c.b16 %v2231, %v2227
    %v2268 = vpack.c.b16 %v2232, %v2228
    %v2269 = vpack.c.b16 %v2233, %v2229
    %v2270 = vpack.c.b16 %v2238, %v2234
    %v2271 = vpack.c.b16 %v2239, %v2235
    %v2272 = vpack.c.b16 %v2240, %v2236
    %v2273 = vpack.c.b16 %v2241, %v2237
    %2306 = vmatprep.subr.bf16.mxu0 %v2243
    %2307 = vmatpush1.bf16.msra.mxu0 %v2242
    %2308 = vmatprep.subr.bf16.mxu0 %v2247
    %2309 = vmatpush1.bf16.msra.mxu0 %v2246
    %2310 = vmatprep.subr.bf16.mxu0 %v2251
    %2311 = vmatpush1.bf16.msra.mxu0 %v2250
    %2312 = vmatprep.subr.bf16.mxu0 %v2255
    %2313 = vmatpush1.bf16.msra.mxu0 %v2254
    %2314 = vmatprep.subr.bf16.mxu0 %v2259
    %2315 = vmatpush1.bf16.msra.mxu0 %v2258
    %2316 = vmatprep.subr.bf16.mxu0 %v2263
    %2317 = vmatpush1.bf16.msra.mxu0 %v2262
    %2318 = vmatprep.subr.bf16.mxu0 %v2267
    %2319 = vmatpush1.bf16.msra.mxu0 %v2266
    %2320 = vmatprep.subr.bf16.mxu0 %v2271
    %2321 = vmatpush1.bf16.msra.mxu0 %v2270
    %2322 = vmatprep.subr.bf16.mxu0 0
    %2323 = vmatpush1.bf16.msra.mxu0 0
    %2324 = vmatprep.subr.bf16.mxu0 0
    %2325 = vmatpush1.bf16.msra.mxu0 0
    %2326 = vmatprep.subr.bf16.mxu0 0
    %2327 = vmatpush1.bf16.msra.mxu0 0
    %2328 = vmatprep.subr.bf16.mxu0 0
    %2329 = vmatpush1.bf16.msra.mxu0 0
    %2330 = vmatprep.subr.bf16.mxu0 0
    %2331 = vmatpush1.bf16.msra.mxu0 0
    %2332 = vmatprep.subr.bf16.mxu0 0
    %2333 = vmatpush1.bf16.msra.mxu0 0
    %2334 = vmatprep.subr.bf16.mxu0 0
    %2335 = vmatpush1.bf16.msra.mxu0 0
    %2336 = vmatprep.subr.bf16.mxu0 0
    %2337 = vmatpush1.bf16.msra.mxu0 0
    %2338 = vmatprep.mubr.bf16.mxu0 0
    %2339 = vmatmul.mubr.bf16.gmra.mrb[0].mxu0 %v2091
    %v2340 = vpop.f32.mrb[0].mxu0
    %v2341 = vadd.f32 %v2129, %v2340
    %v2342 = vpop.f32.mrb[0].mxu0
    %v2343 = vadd.f32 %v2133, %v2342
    %v2344 = vpop.f32.mrb[0].mxu0
    %v2345 = vpop.f32.mrb[0].mxu0
    %2346 = vdwg.mxu0
    %2347 = vmatprep.subr.bf16.mxu0 %v2245
    %2348 = vmatpush1.bf16.msra.mxu0 %v2244
    %2349 = vmatprep.subr.bf16.mxu0 %v2249
    %2350 = vmatpush1.bf16.msra.mxu0 %v2248
    %2351 = vmatprep.subr.bf16.mxu0 %v2253
    %2352 = vmatpush1.bf16.msra.mxu0 %v2252
    %2353 = vmatprep.subr.bf16.mxu0 %v2257
    %2354 = vmatpush1.bf16.msra.mxu0 %v2256
    %2355 = vmatprep.subr.bf16.mxu0 %v2261
    %2356 = vmatpush1.bf16.msra.mxu0 %v2260
    %2357 = vmatprep.subr.bf16.mxu0 %v2265
    %2358 = vmatpush1.bf16.msra.mxu0 %v2264
    %2359 = vmatprep.subr.bf16.mxu0 %v2269
    %2360 = vmatpush1.bf16.msra.mxu0 %v2268
    %2361 = vmatprep.subr.bf16.mxu0 %v2273
    %2362 = vmatpush1.bf16.msra.mxu0 %v2272
    %2363 = vmatprep.subr.bf16.mxu0 0
    %2364 = vmatpush1.bf16.msra.mxu0 0
    %2365 = vmatprep.subr.bf16.mxu0 0
    %2366 = vmatpush1.bf16.msra.mxu0 0
    %2367 = vmatprep.subr.bf16.mxu0 0
    %2368 = vmatpush1.bf16.msra.mxu0 0
    %2369 = vmatprep.subr.bf16.mxu0 0
    %2370 = vmatpush1.bf16.msra.mxu0 0
    %2371 = vmatprep.subr.bf16.mxu0 0
    %2372 = vmatpush1.bf16.msra.mxu0 0
    %2373 = vmatprep.subr.bf16.mxu0 0
    %2374 = vmatpush1.bf16.msra.mxu0 0
    %2375 = vmatprep.subr.bf16.mxu0 0
    %2376 = vmatpush1.bf16.msra.mxu0 0
    %2377 = vmatprep.subr.bf16.mxu0 0
    %2378 = vmatpush1.bf16.msra.mxu0 0
    %2379 = vmatprep.mubr.bf16.mxu0 0
    %2380 = vmatmul.mubr.bf16.gmra.mrb[0].mxu0 %v2091
    %v2381 = vpop.f32.mrb[0].mxu0
    %v2382 = vadd.f32 %v2137, %v2381
    %v2383 = vpop.f32.mrb[0].mxu0
    %v2384 = vadd.f32 %v2141, %v2383
    %v2385 = vpop.f32.mrb[0].mxu0
    %v2386 = vpop.f32.mrb[0].mxu0
    %2387 = vdwg.mxu0
    %v2388 = vmax.f32 %v2341, 0.0
    %v2389 = vmax.f32 %v2343, 0.0
    %v2390 = vmax.f32 %v2382, 0.0
    %v2391 = vmax.f32 %v2384, 0.0
    %v2392 = vpack.c.bf16 %v2388, %v2388
    %v2393 = vpack.c.bf16 %v2389, %v2389
    %v2394 = vpack.c.bf16 %v2390, %v2390
    %v2395 = vpack.c.bf16 %v2391, %v2391
    %v2396 = vld [vmem:[%s8] sm:$0xff]
    %v2397 = vld [vmem:[%s8 + $0x8] sm:$0xff]
    %v2398 = vld [vmem:[%s8 + $0x10] sm:$0xff]
    %v2399 = vld [vmem:[%s8 + $0x18] sm:$0xf]
    %v2400 = vld [vmem:[%s8 + $0x1c] sm:$0xff]
    %v2401 = vld [vmem:[%s8 + $0x24] sm:$0xff]
    %v2402 = vld [vmem:[%s8 + $0x2c] sm:$0xff]
    %v2403 = vld [vmem:[%s8 + $0x34] sm:$0xf]
    %v2404 = vld [vmem:[%s8 + $0x38] sm:$0xff]
    %v2405 = vld [vmem:[%s8 + $0x40] sm:$0xff]
    %v2406 = vld [vmem:[%s8 + $0x48] sm:$0xff]
    %v2407 = vld [vmem:[%s8 + $0x50] sm:$0xf]
    %v2408 = vld [vmem:[%s8 + $0x54] sm:$0xff]
    %v2409 = vld [vmem:[%s8 + $0x5c] sm:$0xff]
    %v2410 = vld [vmem:[%s8 + $0x64] sm:$0xff]
    %v2411 = vld [vmem:[%s8 + $0x6c] sm:$0xf]
    %v2412 = vld [vmem:[%s8 + $0x70] sm:$0xff]
    %v2413 = vld [vmem:[%s8 + $0x78] sm:$0xff]
    %v2414 = vld [vmem:[%s8 + $0x80] sm:$0xff]
    %v2415 = vld [vmem:[%s8 + $0x88] sm:$0xf]
    %v2416 = vld [vmem:[%s8 + $0x8c] sm:$0xff]
    %v2417 = vld [vmem:[%s8 + $0x94] sm:$0xff]
    %v2418 = vld [vmem:[%s8 + $0x9c] sm:$0xff]
    %v2419 = vld [vmem:[%s8 + $0xa4] sm:$0xf]
    %v2420 = vld [vmem:[%s8 + $0xa8] sm:$0xff]
    %v2421 = vld [vmem:[%s8 + $0xb0] sm:$0xff]
    %v2422 = vld [vmem:[%s8 + $0xb8] sm:$0xff]
    %v2423 = vld [vmem:[%s8 + $0xc0] sm:$0xf]
    %v2424 = vld [vmem:[%s8 + $0xc4] sm:$0xff]
    %v2425 = vld [vmem:[%s8 + $0xcc] sm:$0xff]
    %v2426 = vld [vmem:[%s8 + $0xd4] sm:$0xff]
    %v2427 = vld [vmem:[%s8 + $0xdc] sm:$0xf]
    %v2428 = vld [vmem:[%s8 + $0xe0] sm:$0xff]
    %v2429 = vld [vmem:[%s8 + $0xe8] sm:$0xff]
    %v2430 = vld [vmem:[%s8 + $0xf0] sm:$0xff]
    %v2431 = vld [vmem:[%s8 + $0xf8] sm:$0xf]
    %v2432 = vld [vmem:[%s8 + $0xfc] sm:$0xff]
    %v2433 = vld [vmem:[%s8 + $0x104] sm:$0xff]
    %v2434 = vld [vmem:[%s8 + $0x10c] sm:$0xff]
    %v2435 = vld [vmem:[%s8 + $0x114] sm:$0xf]
    %v2436 = vld [vmem:[%s8 + $0x118] sm:$0xff]
    %v2437 = vld [vmem:[%s8 + $0x120] sm:$0xff]
    %v2438 = vld [vmem:[%s8 + $0x128] sm:$0xff]
    %v2439 = vld [vmem:[%s8 + $0x130] sm:$0xf]
    %v2440 = vld [vmem:[%s8 + $0x134] sm:$0xff]
    %v2441 = vld [vmem:[%s8 + $0x13c] sm:$0xff]
    %v2442 = vld [vmem:[%s8 + $0x144] sm:$0xff]
    %v2443 = vld [vmem:[%s8 + $0x14c] sm:$0xf]
    %v2444 = vld [vmem:[%s8 + $0x150] sm:$0xff]
    %v2445 = vld [vmem:[%s8 + $0x158] sm:$0xff]
    %v2446 = vld [vmem:[%s8 + $0x160] sm:$0xff]
    %v2447 = vld [vmem:[%s8 + $0x168] sm:$0xf]
    %v2448 = vld [vmem:[%s8 + $0x16c] sm:$0xff]
    %v2449 = vld [vmem:[%s8 + $0x174] sm:$0xff]
    %v2450 = vld [vmem:[%s8 + $0x17c] sm:$0xff]
    %v2451 = vld [vmem:[%s8 + $0x184] sm:$0xf]
    %v2452 = vld [vmem:[%s8 + $0x188] sm:$0xff]
    %v2453 = vld [vmem:[%s8 + $0x190] sm:$0xff]
    %v2454 = vld [vmem:[%s8 + $0x198] sm:$0xff]
    %v2455 = vld [vmem:[%s8 + $0x1a0] sm:$0xf]
    %v2456 = vld [vmem:[%s8 + $0x1a4] sm:$0xff]
    %v2457 = vld [vmem:[%s8 + $0x1ac] sm:$0xff]
    %v2458 = vld [vmem:[%s8 + $0x1b4] sm:$0xff]
    %v2459 = vld [vmem:[%s8 + $0x1bc] sm:$0xf]
    %v2460 = vld [vmem:[%s8 + $0x1c0] sm:$0xff]
    %v2461 = vld [vmem:[%s8 + $0x1c8] sm:$0xff]
    %v2462 = vld [vmem:[%s8 + $0x1d0] sm:$0xff]
    %v2463 = vld [vmem:[%s8 + $0x1d8] sm:$0xf]
    %v2464 = vld [vmem:[%s8 + $0x1dc] sm:$0xff]
    %v2465 = vld [vmem:[%s8 + $0x1e4] sm:$0xff]
    %v2466 = vld [vmem:[%s8 + $0x1ec] sm:$0xff]
    %v2467 = vld [vmem:[%s8 + $0x1f4] sm:$0xf]
    %v2468 = vld [vmem:[%s8 + $0x1f8] sm:$0xff]
    %v2469 = vld [vmem:[%s8 + $0x200] sm:$0xff]
    %v2470 = vld [vmem:[%s8 + $0x208] sm:$0xff]
    %v2471 = vld [vmem:[%s8 + $0x210] sm:$0xf]
    %v2472 = vld [vmem:[%s8 + $0x214] sm:$0xff]
    %v2473 = vld [vmem:[%s8 + $0x21c] sm:$0xff]
    %v2474 = vld [vmem:[%s8 + $0x224] sm:$0xff]
    %v2475 = vld [vmem:[%s8 + $0x22c] sm:$0xf]
    %v2476 = vld [vmem:[%s8 + $0x230] sm:$0xff]
    %v2477 = vld [vmem:[%s8 + $0x238] sm:$0xff]
    %v2478 = vld [vmem:[%s8 + $0x240] sm:$0xff]
    %v2479 = vld [vmem:[%s8 + $0x248] sm:$0xf]
    %v2480 = vld [vmem:[%s8 + $0x24c] sm:$0xff]
    %v2481 = vld [vmem:[%s8 + $0x254] sm:$0xff]
    %v2482 = vld [vmem:[%s8 + $0x25c] sm:$0xff]
    %v2483 = vld [vmem:[%s8 + $0x264] sm:$0xf]
    %v2484 = vld [vmem:[%s8 + $0x268] sm:$0xff]
    %v2485 = vld [vmem:[%s8 + $0x270] sm:$0xff]
    %v2486 = vld [vmem:[%s8 + $0x278] sm:$0xff]
    %v2487 = vld [vmem:[%s8 + $0x280] sm:$0xf]
    %v2488 = vld [vmem:[%s8 + $0x284] sm:$0xff]
    %v2489 = vld [vmem:[%s8 + $0x28c] sm:$0xff]
    %v2490 = vld [vmem:[%s8 + $0x294] sm:$0xff]
    %v2491 = vld [vmem:[%s8 + $0x29c] sm:$0xf]
    %v2492 = vld [vmem:[%s8 + $0x2a0] sm:$0xff]
    %v2493 = vld [vmem:[%s8 + $0x2a8] sm:$0xff]
    %v2494 = vld [vmem:[%s8 + $0x2b0] sm:$0xff]
    %v2495 = vld [vmem:[%s8 + $0x2b8] sm:$0xf]
    %v2496 = vld [vmem:[%s8 + $0x2bc] sm:$0xff]
    %v2497 = vld [vmem:[%s8 + $0x2c4] sm:$0xff]
    %v2498 = vld [vmem:[%s8 + $0x2cc] sm:$0xff]
    %v2499 = vld [vmem:[%s8 + $0x2d4] sm:$0xf]
    %v2500 = vld [vmem:[%s8 + $0x2d8] sm:$0xff]
    %v2501 = vld [vmem:[%s8 + $0x2e0] sm:$0xff]
    %v2502 = vld [vmem:[%s8 + $0x2e8] sm:$0xff]
    %v2503 = vld [vmem:[%s8 + $0x2f0] sm:$0xf]
    %v2504 = vld [vmem:[%s8 + $0x2f4] sm:$0xff]
    %v2505 = vld [vmem:[%s8 + $0x2fc] sm:$0xff]
    %v2506 = vld [vmem:[%s8 + $0x304] sm:$0xff]
    %v2507 = vld [vmem:[%s8 + $0x30c] sm:$0xf]
    %v2508 = vld [vmem:[%s8 + $0x310] sm:$0xff]
    %v2509 = vld [vmem:[%s8 + $0x318] sm:$0xff]
    %v2510 = vld [vmem:[%s8 + $0x320] sm:$0xff]
    %v2511 = vld [vmem:[%s8 + $0x328] sm:$0xf]
    %v2512 = vld [vmem:[%s8 + $0x32c] sm:$0xff]
    %v2513 = vld [vmem:[%s8 + $0x334] sm:$0xff]
    %v2514 = vld [vmem:[%s8 + $0x33c] sm:$0xff]
    %v2515 = vld [vmem:[%s8 + $0x344] sm:$0xf]
    %v2516 = vld [vmem:[%s8 + $0x348] sm:$0xff]
    %v2517 = vld [vmem:[%s8 + $0x350] sm:$0xff]
    %v2518 = vld [vmem:[%s8 + $0x358] sm:$0xff]
    %v2519 = vld [vmem:[%s8 + $0x360] sm:$0xf]
    %v2520 = vld [vmem:[%s8 + $0x364] sm:$0xff]
    %v2521 = vld [vmem:[%s8 + $0x36c] sm:$0xff]
    %v2522 = vld [vmem:[%s8 + $0x374] sm:$0xff]
    %v2523 = vld [vmem:[%s8 + $0x37c] sm:$0xf]
    %v2524 = vld [vmem:[%s8 + $0x380] sm:$0xff]
    %v2525 = vld [vmem:[%s8 + $0x388] sm:$0xff]
    %v2526 = vld [vmem:[%s8 + $0x390] sm:$0xff]
    %v2527 = vld [vmem:[%s8 + $0x398] sm:$0xf]
    %v2528 = vld [vmem:[%s8 + $0x39c] sm:$0xff]
    %v2529 = vld [vmem:[%s8 + $0x3a4] sm:$0xff]
    %v2530 = vld [vmem:[%s8 + $0x3ac] sm:$0xff]
    %v2531 = vld [vmem:[%s8 + $0x3b4] sm:$0xf]
    %v2532 = vld [vmem:[%s8 + $0x3b8] sm:$0xff]
    %v2533 = vld [vmem:[%s8 + $0x3c0] sm:$0xff]
    %v2534 = vld [vmem:[%s8 + $0x3c8] sm:$0xff]
    %v2535 = vld [vmem:[%s8 + $0x3d0] sm:$0xf]
    %v2536 = vld [vmem:[%s8 + $0x3d4] sm:$0xff]
    %v2537 = vld [vmem:[%s8 + $0x3dc] sm:$0xff]
    %v2538 = vld [vmem:[%s8 + $0x3e4] sm:$0xff]
    %v2539 = vld [vmem:[%s8 + $0x3ec] sm:$0xf]
    %v2540 = vld [vmem:[%s8 + $0x3f0] sm:$0xff]
    %v2541 = vld [vmem:[%s8 + $0x3f8] sm:$0xff]
    %v2542 = vld [vmem:[%s8 + $0x400] sm:$0xff]
    %v2543 = vld [vmem:[%s8 + $0x408] sm:$0xf]
    %v2544 = vld [vmem:[%s8 + $0x40c] sm:$0xff]
    %v2545 = vld [vmem:[%s8 + $0x414] sm:$0xff]
    %v2546 = vld [vmem:[%s8 + $0x41c] sm:$0xff]
    %v2547 = vld [vmem:[%s8 + $0x424] sm:$0xf]
    %v2548 = vld [vmem:[%s8 + $0x428] sm:$0xff]
    %v2549 = vld [vmem:[%s8 + $0x430] sm:$0xff]
    %v2550 = vld [vmem:[%s8 + $0x438] sm:$0xff]
    %v2551 = vld [vmem:[%s8 + $0x440] sm:$0xf]
    %v2552 = vld [vmem:[%s8 + $0x444] sm:$0xff]
    %v2553 = vld [vmem:[%s8 + $0x44c] sm:$0xff]
    %v2554 = vld [vmem:[%s8 + $0x454] sm:$0xff]
    %v2555 = vld [vmem:[%s8 + $0x45c] sm:$0xf]
    %v2556 = vld [vmem:[%s8 + $0x460] sm:$0xff]
    %v2557 = vld [vmem:[%s8 + $0x468] sm:$0xff]
    %v2558 = vld [vmem:[%s8 + $0x470] sm:$0xff]
    %v2559 = vld [vmem:[%s8 + $0x478] sm:$0xf]
    %v2560 = vld [vmem:[%s8 + $0x47c] sm:$0xff]
    %v2561 = vld [vmem:[%s8 + $0x484] sm:$0xff]
    %v2562 = vld [vmem:[%s8 + $0x48c] sm:$0xff]
    %v2563 = vld [vmem:[%s8 + $0x494] sm:$0xf]
    %v2564 = vld [vmem:[%s8 + $0x498] sm:$0xff]
    %v2565 = vld [vmem:[%s8 + $0x4a0] sm:$0xff]
    %v2566 = vld [vmem:[%s8 + $0x4a8] sm:$0xff]
    %v2567 = vld [vmem:[%s8 + $0x4b0] sm:$0xf]
    %v2568 = vld [vmem:[%s8 + $0x4b4] sm:$0xff]
    %v2569 = vld [vmem:[%s8 + $0x4bc] sm:$0xff]
    %v2570 = vld [vmem:[%s8 + $0x4c4] sm:$0xff]
    %v2571 = vld [vmem:[%s8 + $0x4cc] sm:$0xf]
    %v2572 = vld [vmem:[%s8 + $0x4d0] sm:$0xff]
    %v2573 = vld [vmem:[%s8 + $0x4d8] sm:$0xff]
    %v2574 = vld [vmem:[%s8 + $0x4e0] sm:$0xff]
    %v2575 = vld [vmem:[%s8 + $0x4e8] sm:$0xf]
    %v2576 = vld [vmem:[%s8 + $0x4ec] sm:$0xff]
    %v2577 = vld [vmem:[%s8 + $0x4f4] sm:$0xff]
    %v2578 = vld [vmem:[%s8 + $0x4fc] sm:$0xff]
    %v2579 = vld [vmem:[%s8 + $0x504] sm:$0xf]
    %v2580 = vld [vmem:[%s8 + $0x508] sm:$0xff]
    %v2581 = vld [vmem:[%s8 + $0x510] sm:$0xff]
    %v2582 = vld [vmem:[%s8 + $0x518] sm:$0xff]
    %v2583 = vld [vmem:[%s8 + $0x520] sm:$0xf]
    %v2584 = vld [vmem:[%s8 + $0x524] sm:$0xff]
    %v2585 = vld [vmem:[%s8 + $0x52c] sm:$0xff]
    %v2586 = vld [vmem:[%s8 + $0x534] sm:$0xff]
    %v2587 = vld [vmem:[%s8 + $0x53c] sm:$0xf]
    %v2588 = vld [vmem:[%s8 + $0x540] sm:$0xff]
    %v2589 = vld [vmem:[%s8 + $0x548] sm:$0xff]
    %v2590 = vld [vmem:[%s8 + $0x550] sm:$0xff]
    %v2591 = vld [vmem:[%s8 + $0x558] sm:$0xf]
    %v2592 = vld [vmem:[%s8 + $0x55c] sm:$0xff]
    %v2593 = vld [vmem:[%s8 + $0x564] sm:$0xff]
    %v2594 = vld [vmem:[%s8 + $0x56c] sm:$0xff]
    %v2595 = vld [vmem:[%s8 + $0x574] sm:$0xf]
    %v2596 = vld [vmem:[%s8 + $0x578] sm:$0xff]
    %v2597 = vld [vmem:[%s8 + $0x580] sm:$0xff]
    %v2598 = vld [vmem:[%s8 + $0x588] sm:$0xff]
    %v2599 = vld [vmem:[%s8 + $0x590] sm:$0xf]
    %v2600 = vld [vmem:[%s8 + $0x594] sm:$0xff]
    %v2601 = vld [vmem:[%s8 + $0x59c] sm:$0xff]
    %v2602 = vld [vmem:[%s8 + $0x5a4] sm:$0xff]
    %v2603 = vld [vmem:[%s8 + $0x5ac] sm:$0xf]
    %v2604 = vld [vmem:[%s8 + $0x5b0] sm:$0xff]
    %v2605 = vld [vmem:[%s8 + $0x5b8] sm:$0xff]
    %v2606 = vld [vmem:[%s8 + $0x5c0] sm:$0xff]
    %v2607 = vld [vmem:[%s8 + $0x5c8] sm:$0xf]
    %v2608 = vld [vmem:[%s8 + $0x5cc] sm:$0xff]
    %v2609 = vld [vmem:[%s8 + $0x5d4] sm:$0xff]
    %v2610 = vld [vmem:[%s8 + $0x5dc] sm:$0xff]
    %v2611 = vld [vmem:[%s8 + $0x5e4] sm:$0xf]
    %v2612 = vld [vmem:[%s8 + $0x5e8] sm:$0xff]
    %v2613 = vld [vmem:[%s8 + $0x5f0] sm:$0xff]
    %v2614 = vld [vmem:[%s8 + $0x5f8] sm:$0xff]
    %v2615 = vld [vmem:[%s8 + $0x600] sm:$0xf]
    %v2616 = vld [vmem:[%s8 + $0x604] sm:$0xff]
    %v2617 = vld [vmem:[%s8 + $0x60c] sm:$0xff]
    %v2618 = vld [vmem:[%s8 + $0x614] sm:$0xff]
    %v2619 = vld [vmem:[%s8 + $0x61c] sm:$0xf]
    %v2620 = vld [vmem:[%s8 + $0x620] sm:$0xff]
    %v2621 = vld [vmem:[%s8 + $0x628] sm:$0xff]
    %v2622 = vld [vmem:[%s8 + $0x630] sm:$0xff]
    %v2623 = vld [vmem:[%s8 + $0x638] sm:$0xf]
    %v2624 = vld [vmem:[%s8 + $0x63c] sm:$0xff]
    %v2625 = vld [vmem:[%s8 + $0x644] sm:$0xff]
    %v2626 = vld [vmem:[%s8 + $0x64c] sm:$0xff]
    %v2627 = vld [vmem:[%s8 + $0x654] sm:$0xf]
    %v2628 = vld [vmem:[%s8 + $0x658] sm:$0xff]
    %v2629 = vld [vmem:[%s8 + $0x660] sm:$0xff]
    %v2630 = vld [vmem:[%s8 + $0x668] sm:$0xff]
    %v2631 = vld [vmem:[%s8 + $0x670] sm:$0xf]
    %v2632 = vld [vmem:[%s8 + $0x674] sm:$0xff]
    %v2633 = vld [vmem:[%s8 + $0x67c] sm:$0xff]
    %v2634 = vld [vmem:[%s8 + $0x684] sm:$0xff]
    %v2635 = vld [vmem:[%s8 + $0x68c] sm:$0xf]
    %v2636 = vld [vmem:[%s8 + $0x690] sm:$0xff]
    %v2637 = vld [vmem:[%s8 + $0x698] sm:$0xff]
    %v2638 = vld [vmem:[%s8 + $0x6a0] sm:$0xff]
    %v2639 = vld [vmem:[%s8 + $0x6a8] sm:$0xf]
    %v2640 = vld [vmem:[%s8 + $0x6ac] sm:$0xff]
    %v2641 = vld [vmem:[%s8 + $0x6b4] sm:$0xff]
    %v2642 = vld [vmem:[%s8 + $0x6bc] sm:$0xff]
    %v2643 = vld [vmem:[%s8 + $0x6c4] sm:$0xf]
    %v2644 = vld [vmem:[%s8 + $0x6c8] sm:$0xff]
    %v2645 = vld [vmem:[%s8 + $0x6d0] sm:$0xff]
    %v2646 = vld [vmem:[%s8 + $0x6d8] sm:$0xff]
    %v2647 = vld [vmem:[%s8 + $0x6e0] sm:$0xf]
    %v2648 = vld [vmem:[%s8 + $0x6e4] sm:$0xff]
    %v2649 = vld [vmem:[%s8 + $0x6ec] sm:$0xff]
    %v2650 = vld [vmem:[%s8 + $0x6f4] sm:$0xff]
    %v2651 = vld [vmem:[%s8 + $0x6fc] sm:$0xf]
    %v2652 = vld [vmem:[%s9] sm:$0x7f]
    %v2654 = vlaneseq
    %v2655 = vshrl.u32 %v2654, 7
    %v2656 = vsub.s32 0, %v2655
    %v2657 = vrot.slane %v2652, %v2656
    %v2658 = vlaneseq
    %v2659 = vshrl.u32 %v2658, 7
    %v2660 = vsub.s32 1, %v2659
    %v2661 = vrot.slane %v2652, %v2660
    %v2662 = vlaneseq
    %v2663 = vshrl.u32 %v2662, 7
    %v2664 = vsub.s32 2, %v2663
    %v2665 = vrot.slane %v2652, %v2664
    %v2666 = vlaneseq
    %v2667 = vshrl.u32 %v2666, 7
    %v2668 = vsub.s32 3, %v2667
    %v2669 = vrot.slane %v2652, %v2668
    %v2670 = vlaneseq
    %v2671 = vshrl.u32 %v2670, 7
    %v2672 = vsub.s32 4, %v2671
    %v2673 = vrot.slane %v2652, %v2672
    %v2674 = vlaneseq
    %v2675 = vshrl.u32 %v2674, 7
    %v2676 = vsub.s32 5, %v2675
    %v2677 = vrot.slane %v2652, %v2676
    %v2678 = vlaneseq
    %v2679 = vshrl.u32 %v2678, 7
    %v2680 = vsub.s32 6, %v2679
    %v2681 = vrot.slane %v2652, %v2680
    %v2945 = vunpack.c.l.b16 %v2396
    %v2946 = vunpack.c.h.b16 %v2396
    %v2947 = vunpack.c.l.b16 %v2397
    %v2948 = vunpack.c.h.b16 %v2397
    %v2949 = vunpack.c.l.b16 %v2398
    %v2950 = vunpack.c.h.b16 %v2398
    %v2951 = vunpack.c.l.b16 %v2399
    %v2952 = vunpack.c.l.b16 %v2400
    %v2953 = vunpack.c.h.b16 %v2400
    %v2954 = vunpack.c.l.b16 %v2401
    %v2955 = vunpack.c.h.b16 %v2401
    %v2956 = vunpack.c.l.b16 %v2402
    %v2957 = vunpack.c.h.b16 %v2402
    %v2958 = vunpack.c.l.b16 %v2403
    %v2959 = vunpack.c.l.b16 %v2404
    %v2960 = vunpack.c.h.b16 %v2404
    %v2961 = vunpack.c.l.b16 %v2405
    %v2962 = vunpack.c.h.b16 %v2405
    %v2963 = vunpack.c.l.b16 %v2406
    %v2964 = vunpack.c.h.b16 %v2406
    %v2965 = vunpack.c.l.b16 %v2407
    %v2966 = vunpack.c.l.b16 %v2408
    %v2967 = vunpack.c.h.b16 %v2408
    %v2968 = vunpack.c.l.b16 %v2409
    %v2969 = vunpack.c.h.b16 %v2409
    %v2970 = vunpack.c.l.b16 %v2410
    %v2971 = vunpack.c.h.b16 %v2410
    %v2972 = vunpack.c.l.b16 %v2411
    %v2973 = vunpack.c.l.b16 %v2412
    %v2974 = vunpack.c.h.b16 %v2412
    %v2975 = vunpack.c.l.b16 %v2413
    %v2976 = vunpack.c.h.b16 %v2413
    %v2977 = vunpack.c.l.b16 %v2414
    %v2978 = vunpack.c.h.b16 %v2414
    %v2979 = vunpack.c.l.b16 %v2415
    %v2980 = vunpack.c.l.b16 %v2416
    %v2981 = vunpack.c.h.b16 %v2416
    %v2982 = vunpack.c.l.b16 %v2417
    %v2983 = vunpack.c.h.b16 %v2417
    %v2984 = vunpack.c.l.b16 %v2418
    %v2985 = vunpack.c.h.b16 %v2418
    %v2986 = vunpack.c.l.b16 %v2419
    %v2987 = vunpack.c.l.b16 %v2420
    %v2988 = vunpack.c.h.b16 %v2420
    %v2989 = vunpack.c.l.b16 %v2421
    %v2990 = vunpack.c.h.b16 %v2421
    %v2991 = vunpack.c.l.b16 %v2422
    %v2992 = vunpack.c.h.b16 %v2422
    %v2993 = vunpack.c.l.b16 %v2423
    %v2994 = vunpack.c.l.b16 %v2424
    %v2995 = vunpack.c.h.b16 %v2424
    %v2996 = vunpack.c.l.b16 %v2425
    %v2997 = vunpack.c.h.b16 %v2425
    %v2998 = vunpack.c.l.b16 %v2426
    %v2999 = vunpack.c.h.b16 %v2426
    %v3000 = vunpack.c.l.b16 %v2427
    %v3001 = vunpack.c.l.b16 %v2428
    %v3002 = vunpack.c.h.b16 %v2428
    %v3003 = vunpack.c.l.b16 %v2429
    %v3004 = vunpack.c.h.b16 %v2429
    %v3005 = vunpack.c.l.b16 %v2430
    %v3006 = vunpack.c.h.b16 %v2430
    %v3007 = vunpack.c.l.b16 %v2431
    %v3008 = vunpack.c.l.b16 %v2432
    %v3009 = vunpack.c.h.b16 %v2432
    %v3010 = vunpack.c.l.b16 %v2433
    %v3011 = vunpack.c.h.b16 %v2433
    %v3012 = vunpack.c.l.b16 %v2434
    %v3013 = vunpack.c.h.b16 %v2434
    %v3014 = vunpack.c.l.b16 %v2435
    %v3015 = vunpack.c.l.b16 %v2436
    %v3016 = vunpack.c.h.b16 %v2436
    %v3017 = vunpack.c.l.b16 %v2437
    %v3018 = vunpack.c.h.b16 %v2437
    %v3019 = vunpack.c.l.b16 %v2438
    %v3020 = vunpack.c.h.b16 %v2438
    %v3021 = vunpack.c.l.b16 %v2439
    %v3022 = vunpack.c.l.b16 %v2440
    %v3023 = vunpack.c.h.b16 %v2440
    %v3024 = vunpack.c.l.b16 %v2441
    %v3025 = vunpack.c.h.b16 %v2441
    %v3026 = vunpack.c.l.b16 %v2442
    %v3027 = vunpack.c.h.b16 %v2442
    %v3028 = vunpack.c.l.b16 %v2443
    %v3029 = vunpack.c.l.b16 %v2444
    %v3030 = vunpack.c.h.b16 %v2444
    %v3031 = vunpack.c.l.b16 %v2445
    %v3032 = vunpack.c.h.b16 %v2445
    %v3033 = vunpack.c.l.b16 %v2446
    %v3034 = vunpack.c.h.b16 %v2446
    %v3035 = vunpack.c.l.b16 %v2447
    %v3036 = vunpack.c.l.b16 %v2448
    %v3037 = vunpack.c.h.b16 %v2448
    %v3038 = vunpack.c.l.b16 %v2449
    %v3039 = vunpack.c.h.b16 %v2449
    %v3040 = vunpack.c.l.b16 %v2450
    %v3041 = vunpack.c.h.b16 %v2450
    %v3042 = vunpack.c.l.b16 %v2451
    %v3043 = vunpack.c.l.b16 %v2452
    %v3044 = vunpack.c.h.b16 %v2452
    %v3045 = vunpack.c.l.b16 %v2453
    %v3046 = vunpack.c.h.b16 %v2453
    %v3047 = vunpack.c.l.b16 %v2454
    %v3048 = vunpack.c.h.b16 %v2454
    %v3049 = vunpack.c.l.b16 %v2455
    %v3050 = vunpack.c.l.b16 %v2456
    %v3051 = vunpack.c.h.b16 %v2456
    %v3052 = vunpack.c.l.b16 %v2457
    %v3053 = vunpack.c.h.b16 %v2457
    %v3054 = vunpack.c.l.b16 %v2458
    %v3055 = vunpack.c.h.b16 %v2458
    %v3056 = vunpack.c.l.b16 %v2459
    %v3057 = vunpack.c.l.b16 %v2460
    %v3058 = vunpack.c.h.b16 %v2460
    %v3059 = vunpack.c.l.b16 %v2461
    %v3060 = vunpack.c.h.b16 %v2461
    %v3061 = vunpack.c.l.b16 %v2462
    %v3062 = vunpack.c.h.b16 %v2462
    %v3063 = vunpack.c.l.b16 %v2463
    %v3064 = vunpack.c.l.b16 %v2464
    %v3065 = vunpack.c.h.b16 %v2464
    %v3066 = vunpack.c.l.b16 %v2465
    %v3067 = vunpack.c.h.b16 %v2465
    %v3068 = vunpack.c.l.b16 %v2466
    %v3069 = vunpack.c.h.b16 %v2466
    %v3070 = vunpack.c.l.b16 %v2467
    %v3071 = vunpack.c.l.b16 %v2468
    %v3072 = vunpack.c.h.b16 %v2468
    %v3073 = vunpack.c.l.b16 %v2469
    %v3074 = vunpack.c.h.b16 %v2469
    %v3075 = vunpack.c.l.b16 %v2470
    %v3076 = vunpack.c.h.b16 %v2470
    %v3077 = vunpack.c.l.b16 %v2471
    %v3078 = vunpack.c.l.b16 %v2472
    %v3079 = vunpack.c.h.b16 %v2472
    %v3080 = vunpack.c.l.b16 %v2473
    %v3081 = vunpack.c.h.b16 %v2473
    %v3082 = vunpack.c.l.b16 %v2474
    %v3083 = vunpack.c.h.b16 %v2474
    %v3084 = vunpack.c.l.b16 %v2475
    %v3085 = vunpack.c.l.b16 %v2476
    %v3086 = vunpack.c.h.b16 %v2476
    %v3087 = vunpack.c.l.b16 %v2477
    %v3088 = vunpack.c.h.b16 %v2477
    %v3089 = vunpack.c.l.b16 %v2478
    %v3090 = vunpack.c.h.b16 %v2478
    %v3091 = vunpack.c.l.b16 %v2479
    %v3092 = vunpack.c.l.b16 %v2480
    %v3093 = vunpack.c.h.b16 %v2480
    %v3094 = vunpack.c.l.b16 %v2481
    %v3095 = vunpack.c.h.b16 %v2481
    %v3096 = vunpack.c.l.b16 %v2482
    %v3097 = vunpack.c.h.b16 %v2482
    %v3098 = vunpack.c.l.b16 %v2483
    %v3099 = vunpack.c.l.b16 %v2484
    %v3100 = vunpack.c.h.b16 %v2484
    %v3101 = vunpack.c.l.b16 %v2485
    %v3102 = vunpack.c.h.b16 %v2485
    %v3103 = vunpack.c.l.b16 %v2486
    %v3104 = vunpack.c.h.b16 %v2486
    %v3105 = vunpack.c.l.b16 %v2487
    %v3106 = vunpack.c.l.b16 %v2488
    %v3107 = vunpack.c.h.b16 %v2488
    %v3108 = vunpack.c.l.b16 %v2489
    %v3109 = vunpack.c.h.b16 %v2489
    %v3110 = vunpack.c.l.b16 %v2490
    %v3111 = vunpack.c.h.b16 %v2490
    %v3112 = vunpack.c.l.b16 %v2491
    %v3113 = vunpack.c.l.b16 %v2492
    %v3114 = vunpack.c.h.b16 %v2492
    %v3115 = vunpack.c.l.b16 %v2493
    %v3116 = vunpack.c.h.b16 %v2493
    %v3117 = vunpack.c.l.b16 %v2494
    %v3118 = vunpack.c.h.b16 %v2494
    %v3119 = vunpack.c.l.b16 %v2495
    %v3120 = vunpack.c.l.b16 %v2496
    %v3121 = vunpack.c.h.b16 %v2496
    %v3122 = vunpack.c.l.b16 %v2497
    %v3123 = vunpack.c.h.b16 %v2497
    %v3124 = vunpack.c.l.b16 %v2498
    %v3125 = vunpack.c.h.b16 %v2498
    %v3126 = vunpack.c.l.b16 %v2499
    %v3127 = vunpack.c.l.b16 %v2500
    %v3128 = vunpack.c.h.b16 %v2500
    %v3129 = vunpack.c.l.b16 %v2501
    %v3130 = vunpack.c.h.b16 %v2501
    %v3131 = vunpack.c.l.b16 %v2502
    %v3132 = vunpack.c.h.b16 %v2502
    %v3133 = vunpack.c.l.b16 %v2503
    %v3134 = vunpack.c.l.b16 %v2504
    %v3135 = vunpack.c.h.b16 %v2504
    %v3136 = vunpack.c.l.b16 %v2505
    %v3137 = vunpack.c.h.b16 %v2505
    %v3138 = vunpack.c.l.b16 %v2506
    %v3139 = vunpack.c.h.b16 %v2506
    %v3140 = vunpack.c.l.b16 %v2507
    %v3141 = vunpack.c.l.b16 %v2508
    %v3142 = vunpack.c.h.b16 %v2508
    %v3143 = vunpack.c.l.b16 %v2509
    %v3144 = vunpack.c.h.b16 %v2509
    %v3145 = vunpack.c.l.b16 %v2510
    %v3146 = vunpack.c.h.b16 %v2510
    %v3147 = vunpack.c.l.b16 %v2511
    %v3148 = vunpack.c.l.b16 %v2512
    %v3149 = vunpack.c.h.b16 %v2512
    %v3150 = vunpack.c.l.b16 %v2513
    %v3151 = vunpack.c.h.b16 %v2513
    %v3152 = vunpack.c.l.b16 %v2514
    %v3153 = vunpack.c.h.b16 %v2514
    %v3154 = vunpack.c.l.b16 %v2515
    %v3155 = vunpack.c.l.b16 %v2516
    %v3156 = vunpack.c.h.b16 %v2516
    %v3157 = vunpack.c.l.b16 %v2517
    %v3158 = vunpack.c.h.b16 %v2517
    %v3159 = vunpack.c.l.b16 %v2518
    %v3160 = vunpack.c.h.b16 %v2518
    %v3161 = vunpack.c.l.b16 %v2519
    %v3162 = vunpack.c.l.b16 %v2520
    %v3163 = vunpack.c.h.b16 %v2520
    %v3164 = vunpack.c.l.b16 %v2521
    %v3165 = vunpack.c.h.b16 %v2521
    %v3166 = vunpack.c.l.b16 %v2522
    %v3167 = vunpack.c.h.b16 %v2522
    %v3168 = vunpack.c.l.b16 %v2523
    %v3169 = vunpack.c.l.b16 %v2524
    %v3170 = vunpack.c.h.b16 %v2524
    %v3171 = vunpack.c.l.b16 %v2525
    %v3172 = vunpack.c.h.b16 %v2525
    %v3173 = vunpack.c.l.b16 %v2526
    %v3174 = vunpack.c.h.b16 %v2526
    %v3175 = vunpack.c.l.b16 %v2527
    %v3176 = vunpack.c.l.b16 %v2528
    %v3177 = vunpack.c.h.b16 %v2528
    %v3178 = vunpack.c.l.b16 %v2529
    %v3179 = vunpack.c.h.b16 %v2529
    %v3180 = vunpack.c.l.b16 %v2530
    %v3181 = vunpack.c.h.b16 %v2530
    %v3182 = vunpack.c.l.b16 %v2531
    %v3183 = vunpack.c.l.b16 %v2532
    %v3184 = vunpack.c.h.b16 %v2532
    %v3185 = vunpack.c.l.b16 %v2533
    %v3186 = vunpack.c.h.b16 %v2533
    %v3187 = vunpack.c.l.b16 %v2534
    %v3188 = vunpack.c.h.b16 %v2534
    %v3189 = vunpack.c.l.b16 %v2535
    %v3190 = vunpack.c.l.b16 %v2536
    %v3191 = vunpack.c.h.b16 %v2536
    %v3192 = vunpack.c.l.b16 %v2537
    %v3193 = vunpack.c.h.b16 %v2537
    %v3194 = vunpack.c.l.b16 %v2538
    %v3195 = vunpack.c.h.b16 %v2538
    %v3196 = vunpack.c.l.b16 %v2539
    %v3197 = vunpack.c.l.b16 %v2540
    %v3198 = vunpack.c.h.b16 %v2540
    %v3199 = vunpack.c.l.b16 %v2541
    %v3200 = vunpack.c.h.b16 %v2541
    %v3201 = vunpack.c.l.b16 %v2542
    %v3202 = vunpack.c.h.b16 %v2542
    %v3203 = vunpack.c.l.b16 %v2543
    %v3204 = vunpack.c.l.b16 %v2544
    %v3205 = vunpack.c.h.b16 %v2544
    %v3206 = vunpack.c.l.b16 %v2545
    %v3207 = vunpack.c.h.b16 %v2545
    %v3208 = vunpack.c.l.b16 %v2546
    %v3209 = vunpack.c.h.b16 %v2546
    %v3210 = vunpack.c.l.b16 %v2547
    %v3211 = vunpack.c.l.b16 %v2548
    %v3212 = vunpack.c.h.b16 %v2548
    %v3213 = vunpack.c.l.b16 %v2549
    %v3214 = vunpack.c.h.b16 %v2549
    %v3215 = vunpack.c.l.b16 %v2550
    %v3216 = vunpack.c.h.b16 %v2550
    %v3217 = vunpack.c.l.b16 %v2551
    %v3218 = vunpack.c.l.b16 %v2552
    %v3219 = vunpack.c.h.b16 %v2552
    %v3220 = vunpack.c.l.b16 %v2553
    %v3221 = vunpack.c.h.b16 %v2553
    %v3222 = vunpack.c.l.b16 %v2554
    %v3223 = vunpack.c.h.b16 %v2554
    %v3224 = vunpack.c.l.b16 %v2555
    %v3225 = vunpack.c.l.b16 %v2556
    %v3226 = vunpack.c.h.b16 %v2556
    %v3227 = vunpack.c.l.b16 %v2557
    %v3228 = vunpack.c.h.b16 %v2557
    %v3229 = vunpack.c.l.b16 %v2558
    %v3230 = vunpack.c.h.b16 %v2558
    %v3231 = vunpack.c.l.b16 %v2559
    %v3232 = vunpack.c.l.b16 %v2560
    %v3233 = vunpack.c.h.b16 %v2560
    %v3234 = vunpack.c.l.b16 %v2561
    %v3235 = vunpack.c.h.b16 %v2561
    %v3236 = vunpack.c.l.b16 %v2562
    %v3237 = vunpack.c.h.b16 %v2562
    %v3238 = vunpack.c.l.b16 %v2563
    %v3239 = vunpack.c.l.b16 %v2564
    %v3240 = vunpack.c.h.b16 %v2564
    %v3241 = vunpack.c.l.b16 %v2565
    %v3242 = vunpack.c.h.b16 %v2565
    %v3243 = vunpack.c.l.b16 %v2566
    %v3244 = vunpack.c.h.b16 %v2566
    %v3245 = vunpack.c.l.b16 %v2567
    %v3246 = vunpack.c.l.b16 %v2568
    %v3247 = vunpack.c.h.b16 %v2568
    %v3248 = vunpack.c.l.b16 %v2569
    %v3249 = vunpack.c.h.b16 %v2569
    %v3250 = vunpack.c.l.b16 %v2570
    %v3251 = vunpack.c.h.b16 %v2570
    %v3252 = vunpack.c.l.b16 %v2571
    %v3253 = vunpack.c.l.b16 %v2572
    %v3254 = vunpack.c.h.b16 %v2572
    %v3255 = vunpack.c.l.b16 %v2573
    %v3256 = vunpack.c.h.b16 %v2573
    %v3257 = vunpack.c.l.b16 %v2574
    %v3258 = vunpack.c.h.b16 %v2574
    %v3259 = vunpack.c.l.b16 %v2575
    %v3260 = vunpack.c.l.b16 %v2576
    %v3261 = vunpack.c.h.b16 %v2576
    %v3262 = vunpack.c.l.b16 %v2577
    %v3263 = vunpack.c.h.b16 %v2577
    %v3264 = vunpack.c.l.b16 %v2578
    %v3265 = vunpack.c.h.b16 %v2578
    %v3266 = vunpack.c.l.b16 %v2579
    %v3267 = vunpack.c.l.b16 %v2580
    %v3268 = vunpack.c.h.b16 %v2580
    %v3269 = vunpack.c.l.b16 %v2581
    %v3270 = vunpack.c.h.b16 %v2581
    %v3271 = vunpack.c.l.b16 %v2582
    %v3272 = vunpack.c.h.b16 %v2582
    %v3273 = vunpack.c.l.b16 %v2583
    %v3274 = vunpack.c.l.b16 %v2584
    %v3275 = vunpack.c.h.b16 %v2584
    %v3276 = vunpack.c.l.b16 %v2585
    %v3277 = vunpack.c.h.b16 %v2585
    %v3278 = vunpack.c.l.b16 %v2586
    %v3279 = vunpack.c.h.b16 %v2586
    %v3280 = vunpack.c.l.b16 %v2587
    %v3281 = vunpack.c.l.b16 %v2588
    %v3282 = vunpack.c.h.b16 %v2588
    %v3283 = vunpack.c.l.b16 %v2589
    %v3284 = vunpack.c.h.b16 %v2589
    %v3285 = vunpack.c.l.b16 %v2590
    %v3286 = vunpack.c.h.b16 %v2590
    %v3287 = vunpack.c.l.b16 %v2591
    %v3288 = vunpack.c.l.b16 %v2592
    %v3289 = vunpack.c.h.b16 %v2592
    %v3290 = vunpack.c.l.b16 %v2593
    %v3291 = vunpack.c.h.b16 %v2593
    %v3292 = vunpack.c.l.b16 %v2594
    %v3293 = vunpack.c.h.b16 %v2594
    %v3294 = vunpack.c.l.b16 %v2595
    %v3295 = vunpack.c.l.b16 %v2596
    %v3296 = vunpack.c.h.b16 %v2596
    %v3297 = vunpack.c.l.b16 %v2597
    %v3298 = vunpack.c.h.b16 %v2597
    %v3299 = vunpack.c.l.b16 %v2598
    %v3300 = vunpack.c.h.b16 %v2598
    %v3301 = vunpack.c.l.b16 %v2599
    %v3302 = vunpack.c.l.b16 %v2600
    %v3303 = vunpack.c.h.b16 %v2600
    %v3304 = vunpack.c.l.b16 %v2601
    %v3305 = vunpack.c.h.b16 %v2601
    %v3306 = vunpack.c.l.b16 %v2602
    %v3307 = vunpack.c.h.b16 %v2602
    %v3308 = vunpack.c.l.b16 %v2603
    %v3309 = vunpack.c.l.b16 %v2604
    %v3310 = vunpack.c.h.b16 %v2604
    %v3311 = vunpack.c.l.b16 %v2605
    %v3312 = vunpack.c.h.b16 %v2605
    %v3313 = vunpack.c.l.b16 %v2606
    %v3314 = vunpack.c.h.b16 %v2606
    %v3315 = vunpack.c.l.b16 %v2607
    %v3316 = vunpack.c.l.b16 %v2608
    %v3317 = vunpack.c.h.b16 %v2608
    %v3318 = vunpack.c.l.b16 %v2609
    %v3319 = vunpack.c.h.b16 %v2609
    %v3320 = vunpack.c.l.b16 %v2610
    %v3321 = vunpack.c.h.b16 %v2610
    %v3322 = vunpack.c.l.b16 %v2611
    %v3323 = vunpack.c.l.b16 %v2612
    %v3324 = vunpack.c.h.b16 %v2612
    %v3325 = vunpack.c.l.b16 %v2613
    %v3326 = vunpack.c.h.b16 %v2613
    %v3327 = vunpack.c.l.b16 %v2614
    %v3328 = vunpack.c.h.b16 %v2614
    %v3329 = vunpack.c.l.b16 %v2615
    %v3330 = vunpack.c.l.b16 %v2616
    %v3331 = vunpack.c.h.b16 %v2616
    %v3332 = vunpack.c.l.b16 %v2617
    %v3333 = vunpack.c.h.b16 %v2617
    %v3334 = vunpack.c.l.b16 %v2618
    %v3335 = vunpack.c.h.b16 %v2618
    %v3336 = vunpack.c.l.b16 %v2619
    %v3337 = vunpack.c.l.b16 %v2620
    %v3338 = vunpack.c.h.b16 %v2620
    %v3339 = vunpack.c.l.b16 %v2621
    %v3340 = vunpack.c.h.b16 %v2621
    %v3341 = vunpack.c.l.b16 %v2622
    %v3342 = vunpack.c.h.b16 %v2622
    %v3343 = vunpack.c.l.b16 %v2623
    %v3344 = vunpack.c.l.b16 %v2624
    %v3345 = vunpack.c.h.b16 %v2624
    %v3346 = vunpack.c.l.b16 %v2625
    %v3347 = vunpack.c.h.b16 %v2625
    %v3348 = vunpack.c.l.b16 %v2626
    %v3349 = vunpack.c.h.b16 %v2626
    %v3350 = vunpack.c.l.b16 %v2627
    %v3351 = vunpack.c.l.b16 %v2628
    %v3352 = vunpack.c.h.b16 %v2628
    %v3353 = vunpack.c.l.b16 %v2629
    %v3354 = vunpack.c.h.b16 %v2629
    %v3355 = vunpack.c.l.b16 %v2630
    %v3356 = vunpack.c.h.b16 %v2630
    %v3357 = vunpack.c.l.b16 %v2631
    %v3358 = vunpack.c.l.b16 %v2632
    %v3359 = vunpack.c.h.b16 %v2632
    %v3360 = vunpack.c.l.b16 %v2633
    %v3361 = vunpack.c.h.b16 %v2633
    %v3362 = vunpack.c.l.b16 %v2634
    %v3363 = vunpack.c.h.b16 %v2634
    %v3364 = vunpack.c.l.b16 %v2635
    %v3365 = vunpack.c.l.b16 %v2636
    %v3366 = vunpack.c.h.b16 %v2636
    %v3367 = vunpack.c.l.b16 %v2637
    %v3368 = vunpack.c.h.b16 %v2637
    %v3369 = vunpack.c.l.b16 %v2638
    %v3370 = vunpack.c.h.b16 %v2638
    %v3371 = vunpack.c.l.b16 %v2639
    %v3372 = vunpack.c.l.b16 %v2640
    %v3373 = vunpack.c.h.b16 %v2640
    %v3374 = vunpack.c.l.b16 %v2641
    %v3375 = vunpack.c.h.b16 %v2641
    %v3376 = vunpack.c.l.b16 %v2642
    %v3377 = vunpack.c.h.b16 %v2642
    %v3378 = vunpack.c.l.b16 %v2643
    %v3379 = vunpack.c.l.b16 %v2644
    %v3380 = vunpack.c.h.b16 %v2644
    %v3381 = vunpack.c.l.b16 %v2645
    %v3382 = vunpack.c.h.b16 %v2645
    %v3383 = vunpack.c.l.b16 %v2646
    %v3384 = vunpack.c.h.b16 %v2646
    %v3385 = vunpack.c.l.b16 %v2647
    %v3386 = vunpack.c.l.b16 %v2648
    %v3387 = vunpack.c.h.b16 %v2648
    %v3388 = vunpack.c.l.b16 %v2649
    %v3389 = vunpack.c.h.b16 %v2649
    %v3390 = vunpack.c.l.b16 %v2650
    %v3391 = vunpack.c.h.b16 %v2650
    %v3392 = vunpack.c.l.b16 %v2651
    %v3393 = vpack.c.b16 %v2952, %v2945
    %v3394 = vpack.c.b16 %v2953, %v2946
    %v3395 = vpack.c.b16 %v2954, %v2947
    %v3396 = vpack.c.b16 %v2955, %v2948
    %v3397 = vpack.c.b16 %v2956, %v2949
    %v3398 = vpack.c.b16 %v2957, %v2950
    %v3399 = vpack.c.b16 %v2958, %v2951
    %v3400 = vpack.c.b16 %v2966, %v2959
    %v3401 = vpack.c.b16 %v2967, %v2960
    %v3402 = vpack.c.b16 %v2968, %v2961
    %v3403 = vpack.c.b16 %v2969, %v2962
    %v3404 = vpack.c.b16 %v2970, %v2963
    %v3405 = vpack.c.b16 %v2971, %v2964
    %v3406 = vpack.c.b16 %v2972, %v2965
    %v3407 = vpack.c.b16 %v2980, %v2973
    %v3408 = vpack.c.b16 %v2981, %v2974
    %v3409 = vpack.c.b16 %v2982, %v2975
    %v3410 = vpack.c.b16 %v2983, %v2976
    %v3411 = vpack.c.b16 %v2984, %v2977
    %v3412 = vpack.c.b16 %v2985, %v2978
    %v3413 = vpack.c.b16 %v2986, %v2979
    %v3414 = vpack.c.b16 %v2994, %v2987
    %v3415 = vpack.c.b16 %v2995, %v2988
    %v3416 = vpack.c.b16 %v2996, %v2989
    %v3417 = vpack.c.b16 %v2997, %v2990
    %v3418 = vpack.c.b16 %v2998, %v2991
    %v3419 = vpack.c.b16 %v2999, %v2992
    %v3420 = vpack.c.b16 %v3000, %v2993
    %v3421 = vpack.c.b16 %v3008, %v3001
    %v3422 = vpack.c.b16 %v3009, %v3002
    %v3423 = vpack.c.b16 %v3010, %v3003
    %v3424 = vpack.c.b16 %v3011, %v3004
    %v3425 = vpack.c.b16 %v3012, %v3005
    %v3426 = vpack.c.b16 %v3013, %v3006
    %v3427 = vpack.c.b16 %v3014, %v3007
    %v3428 = vpack.c.b16 %v3022, %v3015
    %v3429 = vpack.c.b16 %v3023, %v3016
    %v3430 = vpack.c.b16 %v3024, %v3017
    %v3431 = vpack.c.b16 %v3025, %v3018
    %v3432 = vpack.c.b16 %v3026, %v3019
    %v3433 = vpack.c.b16 %v3027, %v3020
    %v3434 = vpack.c.b16 %v3028, %v3021
    %v3435 = vpack.c.b16 %v3036, %v3029
    %v3436 = vpack.c.b16 %v3037, %v3030
    %v3437 = vpack.c.b16 %v3038, %v3031
    %v3438 = vpack.c.b16 %v3039, %v3032
    %v3439 = vpack.c.b16 %v3040, %v3033
    %v3440 = vpack.c.b16 %v3041, %v3034
    %v3441 = vpack.c.b16 %v3042, %v3035
    %v3442 = vpack.c.b16 %v3050, %v3043
    %v3443 = vpack.c.b16 %v3051, %v3044
    %v3444 = vpack.c.b16 %v3052, %v3045
    %v3445 = vpack.c.b16 %v3053, %v3046
    %v3446 = vpack.c.b16 %v3054, %v3047
    %v3447 = vpack.c.b16 %v3055, %v3048
    %v3448 = vpack.c.b16 %v3056, %v3049
    %v3449 = vpack.c.b16 %v3064, %v3057
    %v3450 = vpack.c.b16 %v3065, %v3058
    %v3451 = vpack.c.b16 %v3066, %v3059
    %v3452 = vpack.c.b16 %v3067, %v3060
    %v3453 = vpack.c.b16 %v3068, %v3061
    %v3454 = vpack.c.b16 %v3069, %v3062
    %v3455 = vpack.c.b16 %v3070, %v3063
    %v3456 = vpack.c.b16 %v3078, %v3071
    %v3457 = vpack.c.b16 %v3079, %v3072
    %v3458 = vpack.c.b16 %v3080, %v3073
    %v3459 = vpack.c.b16 %v3081, %v3074
    %v3460 = vpack.c.b16 %v3082, %v3075
    %v3461 = vpack.c.b16 %v3083, %v3076
    %v3462 = vpack.c.b16 %v3084, %v3077
    %v3463 = vpack.c.b16 %v3092, %v3085
    %v3464 = vpack.c.b16 %v3093, %v3086
    %v3465 = vpack.c.b16 %v3094, %v3087
    %v3466 = vpack.c.b16 %v3095, %v3088
    %v3467 = vpack.c.b16 %v3096, %v3089
    %v3468 = vpack.c.b16 %v3097, %v3090
    %v3469 = vpack.c.b16 %v3098, %v3091
    %v3470 = vpack.c.b16 %v3106, %v3099
    %v3471 = vpack.c.b16 %v3107, %v3100
    %v3472 = vpack.c.b16 %v3108, %v3101
    %v3473 = vpack.c.b16 %v3109, %v3102
    %v3474 = vpack.c.b16 %v3110, %v3103
    %v3475 = vpack.c.b16 %v3111, %v3104
    %v3476 = vpack.c.b16 %v3112, %v3105
    %v3477 = vpack.c.b16 %v3120, %v3113
    %v3478 = vpack.c.b16 %v3121, %v3114
    %v3479 = vpack.c.b16 %v3122, %v3115
    %v3480 = vpack.c.b16 %v3123, %v3116
    %v3481 = vpack.c.b16 %v3124, %v3117
    %v3482 = vpack.c.b16 %v3125, %v3118
    %v3483 = vpack.c.b16 %v3126, %v3119
    %v3484 = vpack.c.b16 %v3134, %v3127
    %v3485 = vpack.c.b16 %v3135, %v3128
    %v3486 = vpack.c.b16 %v3136, %v3129
    %v3487 = vpack.c.b16 %v3137, %v3130
    %v3488 = vpack.c.b16 %v3138, %v3131
    %v3489 = vpack.c.b16 %v3139, %v3132
    %v3490 = vpack.c.b16 %v3140, %v3133
    %v3491 = vpack.c.b16 %v3148, %v3141
    %v3492 = vpack.c.b16 %v3149, %v3142
    %v3493 = vpack.c.b16 %v3150, %v3143
    %v3494 = vpack.c.b16 %v3151, %v3144
    %v3495 = vpack.c.b16 %v3152, %v3145
    %v3496 = vpack.c.b16 %v3153, %v3146
    %v3497 = vpack.c.b16 %v3154, %v3147
    %v3498 = vpack.c.b16 %v3162, %v3155
    %v3499 = vpack.c.b16 %v3163, %v3156
    %v3500 = vpack.c.b16 %v3164, %v3157
    %v3501 = vpack.c.b16 %v3165, %v3158
    %v3502 = vpack.c.b16 %v3166, %v3159
    %v3503 = vpack.c.b16 %v3167, %v3160
    %v3504 = vpack.c.b16 %v3168, %v3161
    %v3505 = vpack.c.b16 %v3176, %v3169
    %v3506 = vpack.c.b16 %v3177, %v3170
    %v3507 = vpack.c.b16 %v3178, %v3171
    %v3508 = vpack.c.b16 %v3179, %v3172
    %v3509 = vpack.c.b16 %v3180, %v3173
    %v3510 = vpack.c.b16 %v3181, %v3174
    %v3511 = vpack.c.b16 %v3182, %v3175
    %v3512 = vpack.c.b16 %v3190, %v3183
    %v3513 = vpack.c.b16 %v3191, %v3184
    %v3514 = vpack.c.b16 %v3192, %v3185
    %v3515 = vpack.c.b16 %v3193, %v3186
    %v3516 = vpack.c.b16 %v3194, %v3187
    %v3517 = vpack.c.b16 %v3195, %v3188
    %v3518 = vpack.c.b16 %v3196, %v3189
    %v3519 = vpack.c.b16 %v3204, %v3197
    %v3520 = vpack.c.b16 %v3205, %v3198
    %v3521 = vpack.c.b16 %v3206, %v3199
    %v3522 = vpack.c.b16 %v3207, %v3200
    %v3523 = vpack.c.b16 %v3208, %v3201
    %v3524 = vpack.c.b16 %v3209, %v3202
    %v3525 = vpack.c.b16 %v3210, %v3203
    %v3526 = vpack.c.b16 %v3218, %v3211
    %v3527 = vpack.c.b16 %v3219, %v3212
    %v3528 = vpack.c.b16 %v3220, %v3213
    %v3529 = vpack.c.b16 %v3221, %v3214
    %v3530 = vpack.c.b16 %v3222, %v3215
    %v3531 = vpack.c.b16 %v3223, %v3216
    %v3532 = vpack.c.b16 %v3224, %v3217
    %v3533 = vpack.c.b16 %v3232, %v3225
    %v3534 = vpack.c.b16 %v3233, %v3226
    %v3535 = vpack.c.b16 %v3234, %v3227
    %v3536 = vpack.c.b16 %v3235, %v3228
    %v3537 = vpack.c.b16 %v3236, %v3229
    %v3538 = vpack.c.b16 %v3237, %v3230
    %v3539 = vpack.c.b16 %v3238, %v3231
    %v3540 = vpack.c.b16 %v3246, %v3239
    %v3541 = vpack.c.b16 %v3247, %v3240
    %v3542 = vpack.c.b16 %v3248, %v3241
    %v3543 = vpack.c.b16 %v3249, %v3242
    %v3544 = vpack.c.b16 %v3250, %v3243
    %v3545 = vpack.c.b16 %v3251, %v3244
    %v3546 = vpack.c.b16 %v3252, %v3245
    %v3547 = vpack.c.b16 %v3260, %v3253
    %v3548 = vpack.c.b16 %v3261, %v3254
    %v3549 = vpack.c.b16 %v3262, %v3255
    %v3550 = vpack.c.b16 %v3263, %v3256
    %v3551 = vpack.c.b16 %v3264, %v3257
    %v3552 = vpack.c.b16 %v3265, %v3258
    %v3553 = vpack.c.b16 %v3266, %v3259
    %v3554 = vpack.c.b16 %v3274, %v3267
    %v3555 = vpack.c.b16 %v3275, %v3268
    %v3556 = vpack.c.b16 %v3276, %v3269
    %v3557 = vpack.c.b16 %v3277, %v3270
    %v3558 = vpack.c.b16 %v3278, %v3271
    %v3559 = vpack.c.b16 %v3279, %v3272
    %v3560 = vpack.c.b16 %v3280, %v3273
    %v3561 = vpack.c.b16 %v3288, %v3281
    %v3562 = vpack.c.b16 %v3289, %v3282
    %v3563 = vpack.c.b16 %v3290, %v3283
    %v3564 = vpack.c.b16 %v3291, %v3284
    %v3565 = vpack.c.b16 %v3292, %v3285
    %v3566 = vpack.c.b16 %v3293, %v3286
    %v3567 = vpack.c.b16 %v3294, %v3287
    %v3568 = vpack.c.b16 %v3302, %v3295
    %v3569 = vpack.c.b16 %v3303, %v3296
    %v3570 = vpack.c.b16 %v3304, %v3297
    %v3571 = vpack.c.b16 %v3305, %v3298
    %v3572 = vpack.c.b16 %v3306, %v3299
    %v3573 = vpack.c.b16 %v3307, %v3300
    %v3574 = vpack.c.b16 %v3308, %v3301
    %v3575 = vpack.c.b16 %v3316, %v3309
    %v3576 = vpack.c.b16 %v3317, %v3310
    %v3577 = vpack.c.b16 %v3318, %v3311
    %v3578 = vpack.c.b16 %v3319, %v3312
    %v3579 = vpack.c.b16 %v3320, %v3313
    %v3580 = vpack.c.b16 %v3321, %v3314
    %v3581 = vpack.c.b16 %v3322, %v3315
    %v3582 = vpack.c.b16 %v3330, %v3323
    %v3583 = vpack.c.b16 %v3331, %v3324
    %v3584 = vpack.c.b16 %v3332, %v3325
    %v3585 = vpack.c.b16 %v3333, %v3326
    %v3586 = vpack.c.b16 %v3334, %v3327
    %v3587 = vpack.c.b16 %v3335, %v3328
    %v3588 = vpack.c.b16 %v3336, %v3329
    %v3589 = vpack.c.b16 %v3344, %v3337
    %v3590 = vpack.c.b16 %v3345, %v3338
    %v3591 = vpack.c.b16 %v3346, %v3339
    %v3592 = vpack.c.b16 %v3347, %v3340
    %v3593 = vpack.c.b16 %v3348, %v3341
    %v3594 = vpack.c.b16 %v3349, %v3342
    %v3595 = vpack.c.b16 %v3350, %v3343
    %v3596 = vpack.c.b16 %v3358, %v3351
    %v3597 = vpack.c.b16 %v3359, %v3352
    %v3598 = vpack.c.b16 %v3360, %v3353
    %v3599 = vpack.c.b16 %v3361, %v3354
    %v3600 = vpack.c.b16 %v3362, %v3355
    %v3601 = vpack.c.b16 %v3363, %v3356
    %v3602 = vpack.c.b16 %v3364, %v3357
    %v3603 = vpack.c.b16 %v3372, %v3365
    %v3604 = vpack.c.b16 %v3373, %v3366
    %v3605 = vpack.c.b16 %v3374, %v3367
    %v3606 = vpack.c.b16 %v3375, %v3368
    %v3607 = vpack.c.b16 %v3376, %v3369
    %v3608 = vpack.c.b16 %v3377, %v3370
    %v3609 = vpack.c.b16 %v3378, %v3371
    %v3610 = vpack.c.b16 %v3386, %v3379
    %v3611 = vpack.c.b16 %v3387, %v3380
    %v3612 = vpack.c.b16 %v3388, %v3381
    %v3613 = vpack.c.b16 %v3389, %v3382
    %v3614 = vpack.c.b16 %v3390, %v3383
    %v3615 = vpack.c.b16 %v3391, %v3384
    %v3616 = vpack.c.b16 %v3392, %v3385
    %3841 = vmatprep.subr.bf16.mxu0 %v3394
    %3842 = vmatpush1.bf16.msra.mxu0 %v3393
    %3843 = vmatprep.subr.bf16.mxu0 %v3401
    %3844 = vmatpush1.bf16.msra.mxu0 %v3400
    %3845 = vmatprep.subr.bf16.mxu0 %v3408
    %3846 = vmatpush1.bf16.msra.mxu0 %v3407
    %3847 = vmatprep.subr.bf16.mxu0 %v3415
    %3848 = vmatpush1.bf16.msra.mxu0 %v3414
    %3849 = vmatprep.subr.bf16.mxu0 %v3422
    %3850 = vmatpush1.bf16.msra.mxu0 %v3421
    %3851 = vmatprep.subr.bf16.mxu0 %v3429
    %3852 = vmatpush1.bf16.msra.mxu0 %v3428
    %3853 = vmatprep.subr.bf16.mxu0 %v3436
    %3854 = vmatpush1.bf16.msra.mxu0 %v3435
    %3855 = vmatprep.subr.bf16.mxu0 %v3443
    %3856 = vmatpush1.bf16.msra.mxu0 %v3442
    %3857 = vmatprep.subr.bf16.mxu0 %v3450
    %3858 = vmatpush1.bf16.msra.mxu0 %v3449
    %3859 = vmatprep.subr.bf16.mxu0 %v3457
    %3860 = vmatpush1.bf16.msra.mxu0 %v3456
    %3861 = vmatprep.subr.bf16.mxu0 %v3464
    %3862 = vmatpush1.bf16.msra.mxu0 %v3463
    %3863 = vmatprep.subr.bf16.mxu0 %v3471
    %3864 = vmatpush1.bf16.msra.mxu0 %v3470
    %3865 = vmatprep.subr.bf16.mxu0 %v3478
    %3866 = vmatpush1.bf16.msra.mxu0 %v3477
    %3867 = vmatprep.subr.bf16.mxu0 %v3485
    %3868 = vmatpush1.bf16.msra.mxu0 %v3484
    %3869 = vmatprep.subr.bf16.mxu0 %v3492
    %3870 = vmatpush1.bf16.msra.mxu0 %v3491
    %3871 = vmatprep.subr.bf16.mxu0 %v3499
    %3872 = vmatpush1.bf16.msra.mxu0 %v3498
    %3873 = vmatprep.mubr.bf16.mxu0 %v2393
    %3874 = vmatmul.mubr.bf16.gmra.mrb[0].mxu0 %v2392
    %v3875 = vpop.f32.mrb[0].mxu0
    %v3876 = vadd.f32 %v2657, %v3875
    %v3877 = vpop.f32.mrb[0].mxu0
    %v3878 = vadd.f32 %v2661, %v3877
    %v3879 = vpop.f32.mrb[0].mxu0
    %v3880 = vpop.f32.mrb[0].mxu0
    %3881 = vdwg.mxu0
    %3882 = vmatprep.subr.bf16.mxu0 %v3506
    %3883 = vmatpush1.bf16.msra.mxu0 %v3505
    %3884 = vmatprep.subr.bf16.mxu0 %v3513
    %3885 = vmatpush1.bf16.msra.mxu0 %v3512
    %3886 = vmatprep.subr.bf16.mxu0 %v3520
    %3887 = vmatpush1.bf16.msra.mxu0 %v3519
    %3888 = vmatprep.subr.bf16.mxu0 %v3527
    %3889 = vmatpush1.bf16.msra.mxu0 %v3526
    %3890 = vmatprep.subr.bf16.mxu0 %v3534
    %3891 = vmatpush1.bf16.msra.mxu0 %v3533
    %3892 = vmatprep.subr.bf16.mxu0 %v3541
    %3893 = vmatpush1.bf16.msra.mxu0 %v3540
    %3894 = vmatprep.subr.bf16.mxu0 %v3548
    %3895 = vmatpush1.bf16.msra.mxu0 %v3547
    %3896 = vmatprep.subr.bf16.mxu0 %v3555
    %3897 = vmatpush1.bf16.msra.mxu0 %v3554
    %3898 = vmatprep.subr.bf16.mxu0 %v3562
    %3899 = vmatpush1.bf16.msra.mxu0 %v3561
    %3900 = vmatprep.subr.bf16.mxu0 %v3569
    %3901 = vmatpush1.bf16.msra.mxu0 %v3568
    %3902 = vmatprep.subr.bf16.mxu0 %v3576
    %3903 = vmatpush1.bf16.msra.mxu0 %v3575
    %3904 = vmatprep.subr.bf16.mxu0 %v3583
    %3905 = vmatpush1.bf16.msra.mxu0 %v3582
    %3906 = vmatprep.subr.bf16.mxu0 %v3590
    %3907 = vmatpush1.bf16.msra.mxu0 %v3589
    %3908 = vmatprep.subr.bf16.mxu0 %v3597
    %3909 = vmatpush1.bf16.msra.mxu0 %v3596
    %3910 = vmatprep.subr.bf16.mxu0 %v3604
    %3911 = vmatpush1.bf16.msra.mxu0 %v3603
    %3912 = vmatprep.subr.bf16.mxu0 %v3611
    %3913 = vmatpush1.bf16.msra.mxu0 %v3610
    %3914 = vmatprep.mubr.bf16.mxu0 %v2395
    %3915 = vmatmul.mubr.bf16.gmra.mrb[0].mxu0 %v2394
    %v3916 = vpop.f32.mrb[0].mxu0
    %v3917 = vadd.f32 %v3876, %v3916
    %v3918 = vpop.f32.mrb[0].mxu0
    %v3919 = vadd.f32 %v3878, %v3918
    %v3920 = vpop.f32.mrb[0].mxu0
    %v3921 = vpop.f32.mrb[0].mxu0
    %3922 = vdwg.mxu0
    %3923 = vmatprep.subr.bf16.mxu0 %v3396
    %3924 = vmatpush1.bf16.msra.mxu0 %v3395
    %3925 = vmatprep.subr.bf16.mxu0 %v3403
    %3926 = vmatpush1.bf16.msra.mxu0 %v3402
    %3927 = vmatprep.subr.bf16.mxu0 %v3410
    %3928 = vmatpush1.bf16.msra.mxu0 %v3409
    %3929 = vmatprep.subr.bf16.mxu0 %v3417
    %3930 = vmatpush1.bf16.msra.mxu0 %v3416
    %3931 = vmatprep.subr.bf16.mxu0 %v3424
    %3932 = vmatpush1.bf16.msra.mxu0 %v3423
    %3933 = vmatprep.subr.bf16.mxu0 %v3431
    %3934 = vmatpush1.bf16.msra.mxu0 %v3430
    %3935 = vmatprep.subr.bf16.mxu0 %v3438
    %3936 = vmatpush1.bf16.msra.mxu0 %v3437
    %3937 = vmatprep.subr.bf16.mxu0 %v3445
    %3938 = vmatpush1.bf16.msra.mxu0 %v3444
    %3939 = vmatprep.subr.bf16.mxu0 %v3452
    %3940 = vmatpush1.bf16.msra.mxu0 %v3451
    %3941 = vmatprep.subr.bf16.mxu0 %v3459
    %3942 = vmatpush1.bf16.msra.mxu0 %v3458
    %3943 = vmatprep.subr.bf16.mxu0 %v3466
    %3944 = vmatpush1.bf16.msra.mxu0 %v3465
    %3945 = vmatprep.subr.bf16.mxu0 %v3473
    %3946 = vmatpush1.bf16.msra.mxu0 %v3472
    %3947 = vmatprep.subr.bf16.mxu0 %v3480
    %3948 = vmatpush1.bf16.msra.mxu0 %v3479
    %3949 = vmatprep.subr.bf16.mxu0 %v3487
    %3950 = vmatpush1.bf16.msra.mxu0 %v3486
    %3951 = vmatprep.subr.bf16.mxu0 %v3494
    %3952 = vmatpush1.bf16.msra.mxu0 %v3493
    %3953 = vmatprep.subr.bf16.mxu0 %v3501
    %3954 = vmatpush1.bf16.msra.mxu0 %v3500
    %3955 = vmatprep.mubr.bf16.mxu0 %v2393
    %3956 = vmatmul.mubr.bf16.gmra.mrb[0].mxu0 %v2392
    %v3957 = vpop.f32.mrb[0].mxu0
    %v3958 = vadd.f32 %v2665, %v3957
    %v3959 = vpop.f32.mrb[0].mxu0
    %v3960 = vadd.f32 %v2669, %v3959
    %v3961 = vpop.f32.mrb[0].mxu0
    %v3962 = vpop.f32.mrb[0].mxu0
    %3963 = vdwg.mxu0
    %3964 = vmatprep.subr.bf16.mxu0 %v3508
    %3965 = vmatpush1.bf16.msra.mxu0 %v3507
    %3966 = vmatprep.subr.bf16.mxu0 %v3515
    %3967 = vmatpush1.bf16.msra.mxu0 %v3514
    %3968 = vmatprep.subr.bf16.mxu0 %v3522
    %3969 = vmatpush1.bf16.msra.mxu0 %v3521
    %3970 = vmatprep.subr.bf16.mxu0 %v3529
    %3971 = vmatpush1.bf16.msra.mxu0 %v3528
    %3972 = vmatprep.subr.bf16.mxu0 %v3536
    %3973 = vmatpush1.bf16.msra.mxu0 %v3535
    %3974 = vmatprep.subr.bf16.mxu0 %v3543
    %3975 = vmatpush1.bf16.msra.mxu0 %v3542
    %3976 = vmatprep.subr.bf16.mxu0 %v3550
    %3977 = vmatpush1.bf16.msra.mxu0 %v3549
    %3978 = vmatprep.subr.bf16.mxu0 %v3557
    %3979 = vmatpush1.bf16.msra.mxu0 %v3556
    %3980 = vmatprep.subr.bf16.mxu0 %v3564
    %3981 = vmatpush1.bf16.msra.mxu0 %v3563
    %3982 = vmatprep.subr.bf16.mxu0 %v3571
    %3983 = vmatpush1.bf16.msra.mxu0 %v3570
    %3984 = vmatprep.subr.bf16.mxu0 %v3578
    %3985 = vmatpush1.bf16.msra.mxu0 %v3577
    %3986 = vmatprep.subr.bf16.mxu0 %v3585
    %3987 = vmatpush1.bf16.msra.mxu0 %v3584
    %3988 = vmatprep.subr.bf16.mxu0 %v3592
    %3989 = vmatpush1.bf16.msra.mxu0 %v3591
    %3990 = vmatprep.subr.bf16.mxu0 %v3599
    %3991 = vmatpush1.bf16.msra.mxu0 %v3598
    %3992 = vmatprep.subr.bf16.mxu0 %v3606
    %3993 = vmatpush1.bf16.msra.mxu0 %v3605
    %3994 = vmatprep.subr.bf16.mxu0 %v3613
    %3995 = vmatpush1.bf16.msra.mxu0 %v3612
    %3996 = vmatprep.mubr.bf16.mxu0 %v2395
    %3997 = vmatmul.mubr.bf16.gmra.mrb[0].mxu0 %v2394
    %v3998 = vpop.f32.mrb[0].mxu0
    %v3999 = vadd.f32 %v3958, %v3998
    %v4000 = vpop.f32.mrb[0].mxu0
    %v4001 = vadd.f32 %v3960, %v4000
    %v4002 = vpop.f32.mrb[0].mxu0
    %v4003 = vpop.f32.mrb[0].mxu0
    %4004 = vdwg.mxu0
    %4005 = vmatprep.subr.bf16.mxu0 %v3398
    %4006 = vmatpush1.bf16.msra.mxu0 %v3397
    %4007 = vmatprep.subr.bf16.mxu0 %v3405
    %4008 = vmatpush1.bf16.msra.mxu0 %v3404
    %4009 = vmatprep.subr.bf16.mxu0 %v3412
    %4010 = vmatpush1.bf16.msra.mxu0 %v3411
    %4011 = vmatprep.subr.bf16.mxu0 %v3419
    %4012 = vmatpush1.bf16.msra.mxu0 %v3418
    %4013 = vmatprep.subr.bf16.mxu0 %v3426
    %4014 = vmatpush1.bf16.msra.mxu0 %v3425
    %4015 = vmatprep.subr.bf16.mxu0 %v3433
    %4016 = vmatpush1.bf16.msra.mxu0 %v3432
    %4017 = vmatprep.subr.bf16.mxu0 %v3440
    %4018 = vmatpush1.bf16.msra.mxu0 %v3439
    %4019 = vmatprep.subr.bf16.mxu0 %v3447
    %4020 = vmatpush1.bf16.msra.mxu0 %v3446
    %4021 = vmatprep.subr.bf16.mxu0 %v3454
    %4022 = vmatpush1.bf16.msra.mxu0 %v3453
    %4023 = vmatprep.subr.bf16.mxu0 %v3461
    %4024 = vmatpush1.bf16.msra.mxu0 %v3460
    %4025 = vmatprep.subr.bf16.mxu0 %v3468
    %4026 = vmatpush1.bf16.msra.mxu0 %v3467
    %4027 = vmatprep.subr.bf16.mxu0 %v3475
    %4028 = vmatpush1.bf16.msra.mxu0 %v3474
    %4029 = vmatprep.subr.bf16.mxu0 %v3482
    %4030 = vmatpush1.bf16.msra.mxu0 %v3481
    %4031 = vmatprep.subr.bf16.mxu0 %v3489
    %4032 = vmatpush1.bf16.msra.mxu0 %v3488
    %4033 = vmatprep.subr.bf16.mxu0 %v3496
    %4034 = vmatpush1.bf16.msra.mxu0 %v3495
    %4035 = vmatprep.subr.bf16.mxu0 %v3503
    %4036 = vmatpush1.bf16.msra.mxu0 %v3502
    %4037 = vmatprep.mubr.bf16.mxu0 %v2393
    %4038 = vmatmul.mubr.bf16.gmra.mrb[0].mxu0 %v2392
    %v4039 = vpop.f32.mrb[0].mxu0
    %v4040 = vadd.f32 %v2673, %v4039
    %v4041 = vpop.f32.mrb[0].mxu0
    %v4042 = vadd.f32 %v2677, %v4041
    %v4043 = vpop.f32.mrb[0].mxu0
    %v4044 = vpop.f32.mrb[0].mxu0
    %4045 = vdwg.mxu0
    %4046 = vmatprep.subr.bf16.mxu0 %v3510
    %4047 = vmatpush1.bf16.msra.mxu0 %v3509
    %4048 = vmatprep.subr.bf16.mxu0 %v3517
    %4049 = vmatpush1.bf16.msra.mxu0 %v3516
    %4050 = vmatprep.subr.bf16.mxu0 %v3524
    %4051 = vmatpush1.bf16.msra.mxu0 %v3523
    %4052 = vmatprep.subr.bf16.mxu0 %v3531
    %4053 = vmatpush1.bf16.msra.mxu0 %v3530
    %4054 = vmatprep.subr.bf16.mxu0 %v3538
    %4055 = vmatpush1.bf16.msra.mxu0 %v3537
    %4056 = vmatprep.subr.bf16.mxu0 %v3545
    %4057 = vmatpush1.bf16.msra.mxu0 %v3544
    %4058 = vmatprep.subr.bf16.mxu0 %v3552
    %4059 = vmatpush1.bf16.msra.mxu0 %v3551
    %4060 = vmatprep.subr.bf16.mxu0 %v3559
    %4061 = vmatpush1.bf16.msra.mxu0 %v3558
    %4062 = vmatprep.subr.bf16.mxu0 %v3566
    %4063 = vmatpush1.bf16.msra.mxu0 %v3565
    %4064 = vmatprep.subr.bf16.mxu0 %v3573
    %4065 = vmatpush1.bf16.msra.mxu0 %v3572
    %4066 = vmatprep.subr.bf16.mxu0 %v3580
    %4067 = vmatpush1.bf16.msra.mxu0 %v3579
    %4068 = vmatprep.subr.bf16.mxu0 %v3587
    %4069 = vmatpush1.bf16.msra.mxu0 %v3586
    %4070 = vmatprep.subr.bf16.mxu0 %v3594
    %4071 = vmatpush1.bf16.msra.mxu0 %v3593
    %4072 = vmatprep.subr.bf16.mxu0 %v3601
    %4073 = vmatpush1.bf16.msra.mxu0 %v3600
    %4074 = vmatprep.subr.bf16.mxu0 %v3608
    %4075 = vmatpush1.bf16.msra.mxu0 %v3607
    %4076 = vmatprep.subr.bf16.mxu0 %v3615
    %4077 = vmatpush1.bf16.msra.mxu0 %v3614
    %4078 = vmatprep.mubr.bf16.mxu0 %v2395
    %4079 = vmatmul.mubr.bf16.gmra.mrb[0].mxu0 %v2394
    %v4080 = vpop.f32.mrb[0].mxu0
    %v4081 = vadd.f32 %v4040, %v4080
    %v4082 = vpop.f32.mrb[0].mxu0
    %v4083 = vadd.f32 %v4042, %v4082
    %v4084 = vpop.f32.mrb[0].mxu0
    %v4085 = vpop.f32.mrb[0].mxu0
    %4086 = vdwg.mxu0
    %4087 = vmatprep.subr.bf16.mxu0 0
    %4088 = vmatpush1.bf16.msra.mxu0 %v3399
    %4089 = vmatprep.subr.bf16.mxu0 0
    %4090 = vmatpush1.bf16.msra.mxu0 %v3406
    %4091 = vmatprep.subr.bf16.mxu0 0
    %4092 = vmatpush1.bf16.msra.mxu0 %v3413
    %4093 = vmatprep.subr.bf16.mxu0 0
    %4094 = vmatpush1.bf16.msra.mxu0 %v3420
    %4095 = vmatprep.subr.bf16.mxu0 0
    %4096 = vmatpush1.bf16.msra.mxu0 %v3427
    %4097 = vmatprep.subr.bf16.mxu0 0
    %4098 = vmatpush1.bf16.msra.mxu0 %v3434
    %4099 = vmatprep.subr.bf16.mxu0 0
    %4100 = vmatpush1.bf16.msra.mxu0 %v3441
    %4101 = vmatprep.subr.bf16.mxu0 0
    %4102 = vmatpush1.bf16.msra.mxu0 %v3448
    %4103 = vmatprep.subr.bf16.mxu0 0
    %4104 = vmatpush1.bf16.msra.mxu0 %v3455
    %4105 = vmatprep.subr.bf16.mxu0 0
    %4106 = vmatpush1.bf16.msra.mxu0 %v3462
    %4107 = vmatprep.subr.bf16.mxu0 0
    %4108 = vmatpush1.bf16.msra.mxu0 %v3469
    %4109 = vmatprep.subr.bf16.mxu0 0
    %4110 = vmatpush1.bf16.msra.mxu0 %v3476
    %4111 = vmatprep.subr.bf16.mxu0 0
    %4112 = vmatpush1.bf16.msra.mxu0 %v3483
    %4113 = vmatprep.subr.bf16.mxu0 0
    %4114 = vmatpush1.bf16.msra.mxu0 %v3490
    %4115 = vmatprep.subr.bf16.mxu0 0
    %4116 = vmatpush1.bf16.msra.mxu0 %v3497
    %4117 = vmatprep.subr.bf16.mxu0 0
    %4118 = vmatpush1.bf16.msra.mxu0 %v3504
    %4119 = vmatprep.mubr.bf16.mxu0 %v2393
    %4120 = vmatmul.mubr.bf16.gmra.mrb[0].mxu0 %v2392
    %v4121 = vpop.f32.mrb[0].mxu0
    %v4122 = vadd.f32 %v2681, %v4121
    %v4123 = vpop.f32.mrb[0].mxu0
    %v4124 = vpop.f32.mrb[0].mxu0
    %v4125 = vpop.f32.mrb[0].mxu0
    %4126 = vdwg.mxu0
    %4127 = vmatprep.subr.bf16.mxu0 0
    %4128 = vmatpush1.bf16.msra.mxu0 %v3511
    %4129 = vmatprep.subr.bf16.mxu0 0
    %4130 = vmatpush1.bf16.msra.mxu0 %v3518
    %4131 = vmatprep.subr.bf16.mxu0 0
    %4132 = vmatpush1.bf16.msra.mxu0 %v3525
    %4133 = vmatprep.subr.bf16.mxu0 0
    %4134 = vmatpush1.bf16.msra.mxu0 %v3532
    %4135 = vmatprep.subr.bf16.mxu0 0
    %4136 = vmatpush1.bf16.msra.mxu0 %v3539
    %4137 = vmatprep.subr.bf16.mxu0 0
    %4138 = vmatpush1.bf16.msra.mxu0 %v3546
    %4139 = vmatprep.subr.bf16.mxu0 0
    %4140 = vmatpush1.bf16.msra.mxu0 %v3553
    %4141 = vmatprep.subr.bf16.mxu0 0
    %4142 = vmatpush1.bf16.msra.mxu0 %v3560
    %4143 = vmatprep.subr.bf16.mxu0 0
    %4144 = vmatpush1.bf16.msra.mxu0 %v3567
    %4145 = vmatprep.subr.bf16.mxu0 0
    %4146 = vmatpush1.bf16.msra.mxu0 %v3574
    %4147 = vmatprep.subr.bf16.mxu0 0
    %4148 = vmatpush1.bf16.msra.mxu0 %v3581
    %4149 = vmatprep.subr.bf16.mxu0 0
    %4150 = vmatpush1.bf16.msra.mxu0 %v3588
    %4151 = vmatprep.subr.bf16.mxu0 0
    %4152 = vmatpush1.bf16.msra.mxu0 %v3595
    %4153 = vmatprep.subr.bf16.mxu0 0
    %4154 = vmatpush1.bf16.msra.mxu0 %v3602
    %4155 = vmatprep.subr.bf16.mxu0 0
    %4156 = vmatpush1.bf16.msra.mxu0 %v3609
    %4157 = vmatprep.subr.bf16.mxu0 0
    %4158 = vmatpush1.bf16.msra.mxu0 %v3616
    %4159 = vmatprep.mubr.bf16.mxu0 %v2395
    %4160 = vmatmul.mubr.bf16.gmra.mrb[0].mxu0 %v2394
    %v4161 = vpop.f32.mrb[0].mxu0
    %v4162 = vadd.f32 %v4122, %v4161
    %v4163 = vpop.f32.mrb[0].mxu0
    %v4164 = vpop.f32.mrb[0].mxu0
    %v4165 = vpop.f32.mrb[0].mxu0
    %4166 = vdwg.mxu0
    %v4167 = vsub.f32 0.0, %v3917
    %v4168 = vsub.f32 0.0, %v3919
    %v4169 = vsub.f32 0.0, %v3999
    %v4170 = vsub.f32 0.0, %v4001
    %v4171 = vsub.f32 0.0, %v4081
    %v4172 = vsub.f32 0.0, %v4083
    %v4173 = vsub.f32 0.0, %v4162
    %v4174 = vmul.f32 %v4167, 1.442695
    %v4175 = vpow.pop %v4174
    %v4176 = vmul.f32 %v4168, 1.442695
    %v4177 = vpow.pop %v4176
    %v4178 = vmul.f32 %v4169, 1.442695
    %v4179 = vpow.pop %v4178
    %v4180 = vmul.f32 %v4170, 1.442695
    %v4181 = vpow.pop %v4180
    %v4182 = vmul.f32 %v4171, 1.442695
    %v4183 = vpow.pop %v4182
    %v4184 = vmul.f32 %v4172, 1.442695
    %v4185 = vpow.pop %v4184
    %v4186 = vmul.f32 %v4173, 1.442695
    %v4187 = vpow.pop %v4186
    %v4188 = vadd.f32 %v4175, 1.0
    %v4189 = vadd.f32 %v4177, 1.0
    %v4190 = vadd.f32 %v4179, 1.0
    %v4191 = vadd.f32 %v4181, 1.0
    %v4192 = vadd.f32 %v4183, 1.0
    %v4193 = vadd.f32 %v4185, 1.0
    %v4194 = vadd.f32 %v4187, 1.0
    %v4195 = vrcp.pop %v4188
    %v4196 = vrcp.pop %v4189
    %v4197 = vrcp.pop %v4190
    %v4198 = vrcp.pop %v4191
    %v4199 = vrcp.pop %v4192
    %v4200 = vrcp.pop %v4193
    %v4201 = vrcp.pop %v4194
    %v4202 = vpack.c.bf16 %v4195, %v4195
    %v4203 = vpack.c.bf16 %v4196, %v4196
    %v4204 = vpack.c.bf16 %v4197, %v4197
    %v4205 = vpack.c.bf16 %v4198, %v4198
    %v4206 = vpack.c.bf16 %v4199, %v4199
    %v4207 = vpack.c.bf16 %v4200, %v4200
    %v4208 = vpack.c.bf16 %v4201, %v4201
    %v4216 = vunpack.c.l.b16 %v4202
    %v4217 = vunpack.c.l.b16 %v4203
    %v4218 = vunpack.c.l.b16 %v4204
    %v4219 = vunpack.c.l.b16 %v4205
    %v4220 = vunpack.c.l.b16 %v4206
    %v4221 = vunpack.c.l.b16 %v4207
    %v4222 = vunpack.c.l.b16 %v4208
    %v4223 = vpack.c.b16 %v4217, %v4216
    %v4224 = vpack.c.b16 %v4219, %v4218
    %v4225 = vpack.c.b16 %v4221, %v4220
    %v4226 = vpack.c.b16 %v4222, %v4222
    %4231 = vst [vmem:[#allocation2] sm:$0xff] %v4223
    %4232 = vst [vmem:[#allocation2 + $0x8] sm:$0xff] %v4224
    %4233 = vst [vmem:[#allocation2 + $0x10] sm:$0xff] %v4225
    %vm4234 = vcmask 125952
    %4235 = vst.msk [vmem:[#allocation2 + $0x18] sm:$0xf] %vm4234, %v4226
    // Predicated region
    $region42: #{vae_forward.1} parent=1 // pred_check
      _
    $region43: #{vae_forward.1} parent=1 // pred_check_branch
      %4237 = sbr.rel (0) target = $region45
    $region44: #{vae_forward.1} parent=1 // pred_region
      %s4239 = ssub.s32 448, 448
      %4240 = vsyncadd [#allocation3], %s4239
      %s4242 = sshll.u32 [#allocation2], 4
      %s4243 = int_to_ptr.vmem [resolvable:$true] %s4242
      %4245 = dma.vmem_to_hbm [thread:$0]  %s4243, 448, %s10, [#allocation3]
    $region45: #{vae_forward.1} parent=1 // pred_fallthru
      _
    // Predicated region
    $region46: #{vae_forward.1} parent=1 // pred_check
      _
    $region47: #{vae_forward.1} parent=1 // pred_check_branch
      %4247 = sbr.rel (0) target = $region49
    $region48: #{vae_forward.1} parent=1 // pred_region
      _
    $region49: #{vae_forward.1} parent=1 // pred_fallthru
      _
    // Predicated region
    $region50: #{vae_forward.1} parent=1 // pred_check
      _
    $region51: #{vae_forward.1} parent=1 // pred_check_branch
      %4249 = sbr.rel (0) target = $region53
    $region52: #{vae_forward.1} parent=1 // pred_region
      %4250 = dma.done [#allocation3], 448
    $region53: #{vae_forward.1} parent=1 // pred_fallthru
      _
    // Predicated region
    $region54: #{vae_forward.1} parent=1 // pred_check
      _
    $region55: #{vae_forward.1} parent=1 // pred_check_branch
      %4252 = sbr.rel (0) target = $region57
    $region56: #{vae_forward.1} parent=1 // pred_region
      _
    $region57: #{vae_forward.1} parent=1 // pred_fallthru
      _
    %4253 = vsyncpa [#allocation3], 1

</llo_original>
